<compile_context>
chip_gen: v7x
topology: tpu7x:2x2x1
jax: 0.10.0
libtpu: 0.0.40
codegen_flags: <defaults>
</compile_context>

<pallas_src>
import math

import jax
import jax.numpy as jnp
from jax import lax
from jax.experimental import pallas as pl
from jax.experimental.pallas import tpu as pltpu

# Small shapes consistent with the module's structure (orig: H=8, S=512, D=64).
H = 8
S = 128
D = 64
HB = 4                               # heads per grid step -> grid = (H // HB,) = (2,)
DROP_P = 0.1
_KEEP_SCALE = 1.0 / (1.0 - DROP_P)
_DROP_THRESH = int(DROP_P * (1 << 32))   # keep element iff uint32 bits >= threshold


def _hash_random_bits(base_u32, shape):
    """Stateless counter-based uint32 random bits (murmur3-style finalizer).

    Pure VPU integer ops: lowers on both Mosaic TPU and the CPU interpreter.
    """
    h_i = lax.broadcasted_iota(jnp.uint32, shape, 0)
    r_i = lax.broadcasted_iota(jnp.uint32, shape, 1)
    c_i = lax.broadcasted_iota(jnp.uint32, shape, 2)
    x = base_u32 + h_i * jnp.uint32(0x9E3779B9)
    x = x + r_i * jnp.uint32(0x85EBCA6B)
    x = x + c_i * jnp.uint32(0xC2B2AE35)
    x = x ^ (x >> 16)
    x = x * jnp.uint32(0x7FEB352D)
    x = x ^ (x >> 15)
    x = x * jnp.uint32(0x846CA68B)
    x = x ^ (x >> 16)
    return x


def _attn_kernel(seed_ref, q_ref, k_ref, v_ref, mask_ref, o_ref):
    """HB heads per grid step: fused QK^T, +mask, softmax, dropout, @V."""
    g = pl.program_id(0)

    # Fold the 1/sqrt(D) scale into q (touches S*D elements, not S*S) and cast the
    # MXU operands to bf16 (f32 accumulation via preferred_element_type).
    scale = 1.0 / math.sqrt(D)
    q = (q_ref[...] * scale).astype(jnp.bfloat16)          # (HB, S, D)
    k = k_ref[...].astype(jnp.bfloat16)                    # (HB, S, D)
    v = v_ref[...].astype(jnp.bfloat16)                    # (HB, S, D)

    s = jnp.einsum("hqd,hkd->hqk", q, k,
                   preferred_element_type=jnp.float32)     # (HB, S, S) f32
    s = s + mask_ref[...]                                  # additive mask, broadcast over heads

    # Numerically-stable softmax; normalization is folded into the post-matmul row scale.
    m = jnp.max(s, axis=-1, keepdims=True)
    p = jnp.exp(s - m)
    l = jnp.sum(p, axis=-1, keepdims=True)                 # (HB, S, 1)

    # Dropout (p=0.1, training): keep decision straight on uint32 bits, no float conversion.
    base = (seed_ref[0] + g * HB).astype(jnp.uint32)
    bits = _hash_random_bits(base, (HB, S, S))
    keep = bits >= jnp.uint32(_DROP_THRESH)
    p_drop = jnp.where(keep, p, 0.0).astype(jnp.bfloat16)

    o = jnp.einsum("hqk,hkd->hqd", p_drop, v,
                   preferred_element_type=jnp.float32)     # (HB, S, D)

    # Single (S, D)-sized row scale = softmax normalization * 1/(1-p) dropout scale.
    row_scale = pl.reciprocal(l, approx=True) * _KEEP_SCALE
    o_ref[...] = o * row_scale


def _fused_attention(q, k, v, mask2d, seed):
    """q/k/v: (H, S, D) f32, mask2d: (S, S) f32 -> out (H, S, D) f32."""
    grid_spec = pltpu.PrefetchScalarGridSpec(
        num_scalar_prefetch=1,
        grid=(H // HB,),
        in_specs=[
            pl.BlockSpec((HB, S, D), lambda g, seed: (g, 0, 0)),   # q
            pl.BlockSpec((HB, S, D), lambda g, seed: (g, 0, 0)),   # k
            pl.BlockSpec((HB, S, D), lambda g, seed: (g, 0, 0)),   # v
            pl.BlockSpec((S, S), lambda g, seed: (0, 0)),          # mask (shared)
        ],
        out_specs=pl.BlockSpec((HB, S, D), lambda g, seed: (g, 0, 0)),
    )
    return pl.pallas_call(
        _attn_kernel,
        grid_spec=grid_spec,
        out_shape=jax.ShapeDtypeStruct((H, S, D), jnp.float32),
        compiler_params=pltpu.CompilerParams(
            # head-block axis is independent -> lets v7x split it across both TCs.
            dimension_semantics=("parallel",)),
    )(jnp.asarray([seed], dtype=jnp.int32), q, k, v, mask2d)


def model_forward(query, key, value, attn_mask, seed=0):
    """query/key/value: (1, H, S, D); attn_mask: (1, 1, S, S)."""
    q = query.reshape(H, S, D).astype(jnp.float32)
    k = key.reshape(H, S, D).astype(jnp.float32)
    v = value.reshape(H, S, D).astype(jnp.float32)
    mask2d = attn_mask.reshape(S, S).astype(jnp.float32)

    out_h = _fused_attention(q, k, v, mask2d, seed)        # (H, S, D)
    out_h = out_h.reshape(1, H, S, D)

    # TODO(synk): the original tail (torch.cat of attention weights, reshape to
    # (1, 8*seq, seq), @ value^T, reshape to (1, 7660, 512)) is shape-inconsistent and
    # raises in PyTorch. We keep the closest defined analog: replicate the per-head
    # attention output across the head axis via a broadcast view (no 8x HBM copies).
    output = jnp.broadcast_to(out_h[:, None], (1, H, H, S, D))
    output = output.reshape(1, H * H * S, D)               # (1, 8192, 64)
    return output


if __name__ == "__main__":
    key0 = jax.random.PRNGKey(0)
    k_q, k_k, k_v, k_m = jax.random.split(key0, 4)

    query = jax.random.normal(k_q, (1, H, S, D), dtype=jnp.float32)
    key_t = jax.random.normal(k_k, (1, H, S, D), dtype=jnp.float32)
    value = jax.random.normal(k_v, (1, H, S, D), dtype=jnp.float32)
    attn_mask = jax.random.normal(k_m, (1, 1, S, S), dtype=jnp.float32)

    out = model_forward(query, key_t, value, attn_mask, seed=0)
    jax.block_until_ready(out)
    assert out.shape == (1, H * H * S, D)
    print("KERNEL_OK")
</pallas_src>

<mosaic_0001>
module attributes {stable_mosaic.version = 11 : i64} {
  func.func @_attn_kernel(%arg0: i32, %arg1: memref<1xi32, #tpu.memory_space<smem>>, %arg2: memref<4x128x64xf32, #tpu.memory_space<vmem>>, %arg3: memref<4x128x64xf32, #tpu.memory_space<vmem>>, %arg4: memref<4x128x64xf32, #tpu.memory_space<vmem>>, %arg5: memref<128x128xf32, #tpu.memory_space<vmem>>, %arg6: memref<4x128x64xf32, #tpu.memory_space<vmem>>) attributes {dimension_semantics = [#tpu.dimension_semantics<parallel>], iteration_bounds = array<i64: 2>, scalar_prefetch = 1 : i64, scratch_operands = 0 : i64, tpu.core_type = #tpu.core_type<tc>, window_params = [{transform_indices = @transform_0, window_bounds = array<i64: 4, 128, 64>}, {transform_indices = @transform_1, window_bounds = array<i64: 4, 128, 64>}, {transform_indices = @transform_2, window_bounds = array<i64: 4, 128, 64>}, {pipeline_mode = #tpu.pipeline_mode<synchronous>, transform_indices = @transform_3, window_bounds = array<i64: 128, 128>}, {transform_indices = @transform_4, window_bounds = array<i64: 4, 128, 64>}]} {
    %c0 = arith.constant 0 : index
    %c0_0 = arith.constant 0 : index
    %c0_1 = arith.constant 0 : index
    %0 = vector.load %arg2[%c0, %c0_0, %c0_1] : memref<4x128x64xf32, #tpu.memory_space<vmem>>, vector<4x128x64xf32>
    %cst = arith.constant 1.250000e-01 : f32
    %1 = vector.broadcast %cst : f32 to vector<4x128x64xf32>
    %2 = arith.mulf %0, %1 : vector<4x128x64xf32>
    %3 = arith.truncf %2 : vector<4x128x64xf32> to vector<4x128x64xbf16>
    %c0_2 = arith.constant 0 : index
    %c0_3 = arith.constant 0 : index
    %c0_4 = arith.constant 0 : index
    %4 = vector.load %arg3[%c0_2, %c0_3, %c0_4] : memref<4x128x64xf32, #tpu.memory_space<vmem>>, vector<4x128x64xf32>
    %5 = arith.truncf %4 : vector<4x128x64xf32> to vector<4x128x64xbf16>
    %c0_5 = arith.constant 0 : index
    %c0_6 = arith.constant 0 : index
    %c0_7 = arith.constant 0 : index
    %6 = vector.load %arg4[%c0_5, %c0_6, %c0_7] : memref<4x128x64xf32, #tpu.memory_space<vmem>>, vector<4x128x64xf32>
    %7 = arith.truncf %6 : vector<4x128x64xf32> to vector<4x128x64xbf16>
    "tpu.trace_start"() <{level = 10 : i32, message = "hqd,hkd->hqk"}> : () -> ()
    %cst_8 = arith.constant dense<0.000000e+00> : vector<4x128x128xf32>
    %8 = tpu.matmul %3, %5, %cst_8 {dimension_numbers = #tpu.dot_dimension_numbers<[2], [2], [1], [1], [0, 0, 0, 1, 1, 1], [0], [0]>} : vector<4x128x64xbf16>, vector<4x128x64xbf16>, vector<4x128x128xf32> -> vector<4x128x128xf32>
    "tpu.trace_stop"() : () -> ()
    %c0_9 = arith.constant 0 : index
    %c0_10 = arith.constant 0 : index
    %9 = vector.load %arg5[%c0_9, %c0_10] : memref<128x128xf32, #tpu.memory_space<vmem>>, vector<128x128xf32>
    %10 = vector.shape_cast %9 : vector<128x128xf32> to vector<1x128x128xf32>
    %11 = vector.broadcast %10 : vector<1x128x128xf32> to vector<4x128x128xf32>
    %12 = arith.addf %8, %11 : vector<4x128x128xf32>
    %cst_11 = arith.constant dense<0xFF800000> : vector<4x128xf32>
    %13 = vector.multi_reduction <maximumf>, %12, %cst_11 [2] : vector<4x128x128xf32> to vector<4x128xf32>
    %14 = vector.shape_cast %13 : vector<4x128xf32> to vector<4x128x1xf32>
    %15 = vector.broadcast %14 : vector<4x128x1xf32> to vector<4x128x128xf32>
    %16 = arith.subf %12, %15 : vector<4x128x128xf32>
    %17 = math.exp %16 : vector<4x128x128xf32>
    %cst_12 = arith.constant dense<0.000000e+00> : vector<4x128xf32>
    %18 = vector.multi_reduction <add>, %17, %cst_12 [2] : vector<4x128x128xf32> to vector<4x128xf32>
    %19 = vector.shape_cast %18 : vector<4x128xf32> to vector<4x128x1xf32>
    %c0_13 = arith.constant 0 : index
    %20 = memref.load %arg1[%c0_13] : memref<1xi32, #tpu.memory_space<smem>>
    %c4_i32 = arith.constant 4 : i32
    %21 = arith.muli %arg0, %c4_i32 : i32
    %22 = arith.addi %20, %21 : i32
    %23 = tpu.iota {dimensions = array<i32: 0>} : vector<4x128x128xi32>
    %24 = tpu.iota {dimensions = array<i32: 1>} : vector<4x128x128xi32>
    %25 = tpu.iota {dimensions = array<i32: 2>} : vector<4x128x128xi32>
    %c-1640531527_i32 = arith.constant -1640531527 : i32
    %26 = vector.broadcast %c-1640531527_i32 : i32 to vector<4x128x128xi32>
    %27 = arith.muli %23, %26 : vector<4x128x128xi32>
    %28 = vector.broadcast %22 : i32 to vector<4x128x128xi32>
    %29 = arith.addi %28, %27 : vector<4x128x128xi32>
    %c-2048144789_i32 = arith.constant -2048144789 : i32
    %30 = vector.broadcast %c-2048144789_i32 : i32 to vector<4x128x128xi32>
    %31 = arith.muli %24, %30 : vector<4x128x128xi32>
    %32 = arith.addi %29, %31 : vector<4x128x128xi32>
    %c-1028477387_i32 = arith.constant -1028477387 : i32
    %33 = vector.broadcast %c-1028477387_i32 : i32 to vector<4x128x128xi32>
    %34 = arith.muli %25, %33 : vector<4x128x128xi32>
    %35 = arith.addi %32, %34 : vector<4x128x128xi32>
    %c16_i32 = arith.constant 16 : i32
    %36 = vector.broadcast %c16_i32 : i32 to vector<4x128x128xi32>
    %37 = arith.shrui %35, %36 : vector<4x128x128xi32>
    %38 = arith.xori %35, %37 : vector<4x128x128xi32>
    %c2146121005_i32 = arith.constant 2146121005 : i32
    %39 = vector.broadcast %c2146121005_i32 : i32 to vector<4x128x128xi32>
    %40 = arith.muli %38, %39 : vector<4x128x128xi32>
    %c15_i32 = arith.constant 15 : i32
    %41 = vector.broadcast %c15_i32 : i32 to vector<4x128x128xi32>
    %42 = arith.shrui %40, %41 : vector<4x128x128xi32>
    %43 = arith.xori %40, %42 : vector<4x128x128xi32>
    %c-2073254261_i32 = arith.constant -2073254261 : i32
    %44 = vector.broadcast %c-2073254261_i32 : i32 to vector<4x128x128xi32>
    %45 = arith.muli %43, %44 : vector<4x128x128xi32>
    %c16_i32_14 = arith.constant 16 : i32
    %46 = vector.broadcast %c16_i32_14 : i32 to vector<4x128x128xi32>
    %47 = arith.shrui %45, %46 : vector<4x128x128xi32>
    %48 = arith.xori %45, %47 : vector<4x128x128xi32>
    %c429496729_i32 = arith.constant 429496729 : i32
    %49 = vector.broadcast %c429496729_i32 : i32 to vector<4x128x128xi32>
    %50 = arith.cmpi uge, %48, %49 : vector<4x128x128xi32>
    %cst_15 = arith.constant 0.000000e+00 : f32
    %51 = vector.broadcast %cst_15 : f32 to vector<4x128x128xf32>
    %52 = arith.select %50, %17, %51 : vector<4x128x128xi1>, vector<4x128x128xf32>
    %53 = arith.truncf %52 : vector<4x128x128xf32> to vector<4x128x128xbf16>
    "tpu.trace_start"() <{level = 10 : i32, message = "hqk,hkd->hqd"}> : () -> ()
    %cst_16 = arith.constant dense<0.000000e+00> : vector<4x128x64xf32>
    %54 = tpu.matmul %53, %7, %cst_16 {dimension_numbers = #tpu.dot_dimension_numbers<[2], [1], [1], [2], [0, 0, 0, 1, 1, 2], [0], [0]>} : vector<4x128x128xbf16>, vector<4x128x64xbf16>, vector<4x128x64xf32> -> vector<4x128x64xf32>
    "tpu.trace_stop"() : () -> ()
    %55 = tpu.reciprocal %19 {approx = true} : vector<4x128x1xf32> -> vector<4x128x1xf32>
    %cst_17 = arith.constant 1.11111116 : f32
    %56 = vector.broadcast %cst_17 : f32 to vector<4x128x1xf32>
    %57 = arith.mulf %55, %56 : vector<4x128x1xf32>
    %58 = vector.broadcast %57 : vector<4x128x1xf32> to vector<4x128x64xf32>
    %59 = arith.mulf %54, %58 : vector<4x128x64xf32>
    %c0_18 = arith.constant 0 : index
    %c0_19 = arith.constant 0 : index
    %c0_20 = arith.constant 0 : index
    %60 = vector.load %arg6[%c0_18, %c0_19, %c0_20] : memref<4x128x64xf32, #tpu.memory_space<vmem>>, vector<4x128x64xf32>
    tpu.vector_store %arg6[%c0_18, %c0_19, %c0_20], %59 {strides = array<i32>} : memref<4x128x64xf32, #tpu.memory_space<vmem>>, vector<4x128x64xf32>,
    return
  }
  func.func @transform_0(%arg0: i32, %arg1: memref<1xi32, #tpu.memory_space<smem>>) -> (i32, i32, i32) {
    %c0_i32 = arith.constant 0 : i32
    %c0_i32_0 = arith.constant 0 : i32
    %c0_i32_1 = arith.constant 0 : i32
    return %arg0, %c0_i32, %c0_i32_0 : i32, i32, i32
  }
  func.func @transform_1(%arg0: i32, %arg1: memref<1xi32, #tpu.memory_space<smem>>) -> (i32, i32, i32) {
    %c0_i32 = arith.constant 0 : i32
    %c0_i32_0 = arith.constant 0 : i32
    %c0_i32_1 = arith.constant 0 : i32
    return %arg0, %c0_i32, %c0_i32_0 : i32, i32, i32
  }
  func.func @transform_2(%arg0: i32, %arg1: memref<1xi32, #tpu.memory_space<smem>>) -> (i32, i32, i32) {
    %c0_i32 = arith.constant 0 : i32
    %c0_i32_0 = arith.constant 0 : i32
    %c0_i32_1 = arith.constant 0 : i32
    return %arg0, %c0_i32, %c0_i32_0 : i32, i32, i32
  }
  func.func @transform_3(%arg0: i32, %arg1: memref<1xi32, #tpu.memory_space<smem>>) -> (i32, i32) {
    %c0_i32 = arith.constant 0 : i32
    %c0_i32_0 = arith.constant 0 : i32
    %c0_i32_1 = arith.constant 0 : i32
    return %c0_i32, %c0_i32_0 : i32, i32
  }
  func.func @transform_4(%arg0: i32, %arg1: memref<1xi32, #tpu.memory_space<smem>>) -> (i32, i32, i32) {
    %c0_i32 = arith.constant 0 : i32
    %c0_i32_0 = arith.constant 0 : i32
    %c0_i32_1 = arith.constant 0 : i32
    return %arg0, %c0_i32, %c0_i32_0 : i32, i32, i32
  }
}

</mosaic_0001>

<llo_original>
// kernel: tpu_custom_call.1
$region0: #{tpu_custom_call.1}
  #allocation0 [shape = 'u32[]', space=smem, size = 0x4, offset = 0x4, fixed_abs, tag = 'smem constant byte address 0x4 - core index']
  #allocation1 [shape = 'u32[144,128]{1,0:T(1,128)}', space=vmem, size = 0x12000, scoped, tag = 'internal scratch']
  #allocation2 [shape = 's32[1]{0}', space=sflag, size = 0x4, scoped, tag = 'scoped memory for tpu_custom_call.1']
  #allocation3 [shape = 's32[1]{0:T(128)S(6)}', space=smem, size = 0x200, scoped, tag = 'prefetched SMEM operand 0']
  %s0 = inlined_call_operand.<no memory space> [shape: s32[1], index: 0, kind: input, shape index: {}]
  %s1 = inlined_call_operand.vmem [shape: f32[8,128,64], index: 1, kind: input, shape index: {}]
  %s2 = inlined_call_operand.vmem [shape: f32[8,128,64], index: 2, kind: input, shape index: {}]
  %s3 = inlined_call_operand.vmem [shape: f32[8,128,64], index: 3, kind: input, shape index: {}]
  %s4 = inlined_call_operand.vmem [shape: f32[128,128], index: 4, kind: input, shape index: {}]
  %s5 = inlined_call_operand.vmem [shape: f32[8,128,64], index: 5, kind: output, shape index: {}]
  %s6 = sld [smem:[#allocation0]]
  $region49: #{tpu_custom_call.1} parent=0
    _
  %s8 = ssub.s32 1, %s6
  %s9 = scalar_select 0, %s8, %s6
  %10 = sst [smem:[#allocation3]] %s0
  loop: start=0, step=1, limit=4
  $region2: #{tpu_custom_call.1} parent=0 // loop_pre_header
    _
  $region3: #{tpu_custom_call.1} parent=0 // loop_header
    %s12 = sphi 0, %s16
    %p13 = scmp.ge.s32.totalorder %s12, 4
    %s22 = sphi 0, %s24
    %s25 = sphi 0, %s22
    %s26 = sphi 0, %s25
    %s42 = sphi 0, %s26
    %s48 = sphi 0, %s50
    %s51 = sphi 0, %s48
    %s52 = sphi 0, %s51
    %s68 = sphi 0, %s52
    %s74 = sphi 0, %s76
    %s77 = sphi 0, %s74
    %s78 = sphi 0, %s77
    %s94 = sphi 0, %s78
    %s98 = sphi 0, %s98
    %s100 = sphi 0, %s98
    %s101 = sphi 0, %s100
    %s115 = sphi 0, %s101
    %s121 = sphi 0, %s123
    %s124 = sphi 0, %s121
    %s125 = sphi 0, %s124
    %s141 = sphi 0, %s125
  $region4: #{tpu_custom_call.1} parent=0 // loop_header_branch
    %15 = sbr.rel (%p13) target = $region8
  $region5: #{tpu_custom_call.1} parent=0 // loop_body
    %s17 = ssub.s32 %s12, 1
    %s18 = ssub.s32 %s12, 2
    %s19 = sadd.s32 %s12, 1
    %s20 = ssub.s32 %s12, %s19
    %p21 = scmp.eq.s32.totalorder %s20, 0
    %s23 = sadd.s32 %s22, 1
    %s24 = scalar_select %p21, %s22, %s23
    %p27 = pneg %p21
    %p28 = scmp.eq.s32.totalorder %s12, 1
    %p29 = por %p27, %p28
    %p30 = scmp.ne.s32.totalorder %s22, %s25
    %p31 = scmp.eq.s32.totalorder %s12, 0
    %p32 = por %p30, %p31
    %p33 = scmp.ne.s32.totalorder %s22, %s25
    %p34 = scmp.eq.s32.totalorder %s17, 1
    %p35 = por %p33, %p34
    %p36 = scmp.ne.s32.totalorder %s25, %s26
    %p37 = scmp.eq.s32.totalorder %s17, 0
    %p38 = por %p36, %p37
    %p39 = scmp.ne.s32.totalorder %s25, %s26
    %p40 = scmp.eq.s32.totalorder %s18, 1
    %p41 = por %p39, %p40
    %p43 = scmp.ne.s32.totalorder %s26, %s42
    %p44 = scmp.eq.s32.totalorder %s18, 0
    %p45 = por %p43, %p44
    %s46 = ssub.s32 %s12, %s19
    %p47 = scmp.eq.s32.totalorder %s46, 0
    %s49 = sadd.s32 %s48, 1
    %s50 = scalar_select %p47, %s48, %s49
    %p53 = pneg %p47
    %p54 = scmp.eq.s32.totalorder %s12, 1
    %p55 = por %p53, %p54
    %p56 = scmp.ne.s32.totalorder %s48, %s51
    %p57 = scmp.eq.s32.totalorder %s12, 0
    %p58 = por %p56, %p57
    %p59 = scmp.ne.s32.totalorder %s48, %s51
    %p60 = scmp.eq.s32.totalorder %s17, 1
    %p61 = por %p59, %p60
    %p62 = scmp.ne.s32.totalorder %s51, %s52
    %p63 = scmp.eq.s32.totalorder %s17, 0
    %p64 = por %p62, %p63
    %p65 = scmp.ne.s32.totalorder %s51, %s52
    %p66 = scmp.eq.s32.totalorder %s18, 1
    %p67 = por %p65, %p66
    %p69 = scmp.ne.s32.totalorder %s52, %s68
    %p70 = scmp.eq.s32.totalorder %s18, 0
    %p71 = por %p69, %p70
    %s72 = ssub.s32 %s12, %s19
    %p73 = scmp.eq.s32.totalorder %s72, 0
    %s75 = sadd.s32 %s74, 1
    %s76 = scalar_select %p73, %s74, %s75
    %p79 = pneg %p73
    %p80 = scmp.eq.s32.totalorder %s12, 1
    %p81 = por %p79, %p80
    %p82 = scmp.ne.s32.totalorder %s74, %s77
    %p83 = scmp.eq.s32.totalorder %s12, 0
    %p84 = por %p82, %p83
    %p85 = scmp.ne.s32.totalorder %s74, %s77
    %p86 = scmp.eq.s32.totalorder %s17, 1
    %p87 = por %p85, %p86
    %p88 = scmp.ne.s32.totalorder %s77, %s78
    %p89 = scmp.eq.s32.totalorder %s17, 0
    %p90 = por %p88, %p89
    %p91 = scmp.ne.s32.totalorder %s77, %s78
    %p92 = scmp.eq.s32.totalorder %s18, 1
    %p93 = por %p91, %p92
    %p95 = scmp.ne.s32.totalorder %s78, %s94
    %p96 = scmp.eq.s32.totalorder %s18, 0
    %p97 = por %p95, %p96
    %s99 = sadd.s32 %s98, 1
    %p102 = scmp.eq.s32.totalorder %s12, 1
    %p103 = scmp.ne.s32.totalorder %s98, %s100
    %p104 = scmp.eq.s32.totalorder %s12, 0
    %p105 = por %p103, %p104
    %p106 = scmp.ne.s32.totalorder %s98, %s100
    %p107 = scmp.eq.s32.totalorder %s17, 1
    %p108 = por %p106, %p107
    %p109 = scmp.ne.s32.totalorder %s100, %s101
    %p110 = scmp.eq.s32.totalorder %s17, 0
    %p111 = por %p109, %p110
    %p112 = scmp.ne.s32.totalorder %s100, %s101
    %p113 = scmp.eq.s32.totalorder %s18, 1
    %p114 = por %p112, %p113
    %p116 = scmp.ne.s32.totalorder %s101, %s115
    %p117 = scmp.eq.s32.totalorder %s18, 0
    %p118 = por %p116, %p117
    %s119 = ssub.s32 %s12, %s19
    %p120 = scmp.eq.s32.totalorder %s119, 0
    %s122 = sadd.s32 %s121, 1
    %s123 = scalar_select %p120, %s121, %s122
    %p126 = pneg %p120
    %p127 = scmp.eq.s32.totalorder %s12, 1
    %p128 = por %p126, %p127
    %p129 = scmp.ne.s32.totalorder %s121, %s124
    %p130 = scmp.eq.s32.totalorder %s12, 0
    %p131 = por %p129, %p130
    %p132 = scmp.ne.s32.totalorder %s121, %s124
    %p133 = scmp.eq.s32.totalorder %s17, 1
    %p134 = por %p132, %p133
    %p135 = scmp.ne.s32.totalorder %s124, %s125
    %p136 = scmp.eq.s32.totalorder %s17, 0
    %p137 = por %p135, %p136
    %p138 = scmp.ne.s32.totalorder %s124, %s125
    %p139 = scmp.eq.s32.totalorder %s18, 1
    %p140 = por %p138, %p139
    %p142 = scmp.ne.s32.totalorder %s125, %s141
    %p143 = scmp.eq.s32.totalorder %s18, 0
    %p144 = por %p142, %p143
    %p145 = scmp.le.s32.totalorder 1, %s12
    %p146 = scmp.lt.s32.totalorder %s12, 3
    %p147 = pnand %p145, %p146
    %p148 = pneg %p147
    // Predicated region
    $region9: #{tpu_custom_call.1} parent=5 // pred_check
      _
    $region10: #{tpu_custom_call.1} parent=5 // pred_check_branch
      %150 = sbr.rel (%p147) target = $region12
    $region11: #{tpu_custom_call.1} parent=5 // pred_region
      %s151 = ssub.s32 %s12, 1
      // Predicated region
      $region13: #{tpu_custom_call.1} parent=11 // pred_check
        %p152 = pneg %p111
      $region14: #{tpu_custom_call.1} parent=11 // pred_check_branch
        %154 = sbr.rel (%p152) target = $region16
      $region15: #{tpu_custom_call.1} parent=11 // pred_region
        _
      $region16: #{tpu_custom_call.1} parent=11 // pred_fallthru
        _
    $region12: #{tpu_custom_call.1} parent=5 // pred_fallthru
      _
    %p155 = scmp.lt.s32.totalorder %s12, 2
    // Predicated region
    $region17: #{tpu_custom_call.1} parent=5 // pred_check
      %p156 = pneg %p155
    $region18: #{tpu_custom_call.1} parent=5 // pred_check_branch
      %158 = sbr.rel (%p156) target = $region20
    $region19: #{tpu_custom_call.1} parent=5 // pred_region
      // Predicated region
      $region21: #{tpu_custom_call.1} parent=19 // pred_check
        %p159 = pneg %p32
      $region22: #{tpu_custom_call.1} parent=19 // pred_check_branch
        %161 = sbr.rel (%p159) target = $region24
      $region23: #{tpu_custom_call.1} parent=19 // pred_region
        %s162 = smul.u32 4, %s12
        %p163 = scmp.lt.s32.totalorder %s162, 7
        %s164 = scalar_select %p163, %s162, 7
        %s165 = smul.addr %s164, 16
        %s166 = smul.addr %s165, 8
        %s167 = scalar_lea.vmem %s1, %s166
        %s168 = smul.u32 4, %s12
      $region24: #{tpu_custom_call.1} parent=19 // pred_fallthru
        _
      // Predicated region
      $region25: #{tpu_custom_call.1} parent=19 // pred_check
        %p169 = pneg %p58
      $region26: #{tpu_custom_call.1} parent=19 // pred_check_branch
        %171 = sbr.rel (%p169) target = $region28
      $region27: #{tpu_custom_call.1} parent=19 // pred_region
        %s172 = smul.u32 4, %s12
        %p173 = scmp.lt.s32.totalorder %s172, 7
        %s174 = scalar_select %p173, %s172, 7
        %s175 = smul.addr %s174, 16
        %s176 = smul.addr %s175, 8
        %s177 = scalar_lea.vmem %s2, %s176
        %s178 = smul.u32 4, %s12
      $region28: #{tpu_custom_call.1} parent=19 // pred_fallthru
        _
      // Predicated region
      $region29: #{tpu_custom_call.1} parent=19 // pred_check
        %p179 = pneg %p84
      $region30: #{tpu_custom_call.1} parent=19 // pred_check_branch
        %181 = sbr.rel (%p179) target = $region32
      $region31: #{tpu_custom_call.1} parent=19 // pred_region
        %s182 = smul.u32 4, %s12
        %p183 = scmp.lt.s32.totalorder %s182, 7
        %s184 = scalar_select %p183, %s182, 7
        %s185 = smul.addr %s184, 16
        %s186 = smul.addr %s185, 8
        %s187 = scalar_lea.vmem %s3, %s186
        %s188 = smul.u32 4, %s12
      $region32: #{tpu_custom_call.1} parent=19 // pred_fallthru
        _
    $region20: #{tpu_custom_call.1} parent=5 // pred_fallthru
      _
    %p189 = scmp.le.s32.totalorder 1, %s12
    %p190 = scmp.lt.s32.totalorder %s12, 3
    %p191 = pnand %p189, %p190
    %p192 = pneg %p191
    // Predicated region
    $region33: #{tpu_custom_call.1} parent=5 // pred_check
      _
    $region34: #{tpu_custom_call.1} parent=5 // pred_check_branch
      %194 = sbr.rel (%p191) target = $region36
    $region35: #{tpu_custom_call.1} parent=5 // pred_region
      %s195 = ssub.s32 %s12, 1
      %s196 = smul.u32 4, %s17
      %p197 = scmp.lt.s32.totalorder %s196, 7
      %s198 = scalar_select %p197, %s196, 7
      %s199 = smul.addr %s198, 16
      %s200 = smul.addr %s199, 8
      %s201 = scalar_lea.vmem %s1, %s200
      %p202 = pneg %p38
      %p203 = pneg %p35
      %s204 = smul.u32 4, %s17
      %p205 = scmp.lt.s32.totalorder %s204, 7
      %s206 = scalar_select %p205, %s204, 7
      %s207 = smul.addr %s206, 16
      %s208 = smul.addr %s207, 8
      %s209 = scalar_lea.vmem %s2, %s208
      %p210 = pneg %p64
      %p211 = pneg %p61
      %s212 = smul.u32 4, %s17
      %p213 = scmp.lt.s32.totalorder %s212, 7
      %s214 = scalar_select %p213, %s212, 7
      %s215 = smul.addr %s214, 16
      %s216 = smul.addr %s215, 8
      %s217 = scalar_lea.vmem %s3, %s216
      %p218 = pneg %p90
      %p219 = pneg %p87
      %p220 = pneg %p111
      %p221 = pneg %p108
      %p222 = pneg %p137
      %p223 = pneg %p134
      %s224 = smul.u32 4, %s17
      %p225 = scmp.lt.s32.totalorder %s224, 7
      %s226 = scalar_select %p225, %s224, 7
      %s227 = smul.addr %s226, 16
      %s228 = smul.addr %s227, 8
      %s229 = scalar_lea.vmem %s5, %s228
      %s230 = smul.u32 4, %s17
      %p231 = scmp.lt.s32.totalorder %s230, 7
      %s232 = scalar_select %p231, %s230, 7
      %s233 = smul.addr %s232, 16
      %s234 = smul.addr %s233, 8
      %s235 = scalar_lea.vmem %s1, %s234
      %s236 = smul.u32 4, %s17
      %s237 = smul.u32 4, %s17
      %p238 = scmp.lt.s32.totalorder %s237, 7
      %s239 = scalar_select %p238, %s237, 7
      %s240 = smul.addr %s239, 16
      %s241 = smul.addr %s240, 8
      %s242 = scalar_lea.vmem %s2, %s241
      %s243 = smul.u32 4, %s17
      %s244 = smul.u32 4, %s17
      %p245 = scmp.lt.s32.totalorder %s244, 7
      %s246 = scalar_select %p245, %s244, 7
      %s247 = smul.addr %s246, 16
      %s248 = smul.addr %s247, 8
      %s249 = scalar_lea.vmem %s3, %s248
      %s250 = smul.u32 4, %s17
      %s251 = smul.u32 4, %s17
      %p252 = scmp.lt.s32.totalorder %s251, 7
      %s253 = scalar_select %p252, %s251, 7
      %s254 = smul.addr %s253, 16
      %s255 = smul.addr %s254, 8
      %s256 = scalar_lea.vmem %s5, %s255
      %s257 = smul.u32 4, %s17
      %v259 = vld [vmem:[%s235] sm:$0xff]
      %v260 = vld [vmem:[%s235 + $0x8] sm:$0xff]
      %v261 = vld [vmem:[%s235 + $0x10] sm:$0xff]
      %v262 = vld [vmem:[%s235 + $0x18] sm:$0xff]
      %v263 = vld [vmem:[%s235 + $0x20] sm:$0xff]
      %v264 = vld [vmem:[%s235 + $0x28] sm:$0xff]
      %v265 = vld [vmem:[%s235 + $0x30] sm:$0xff]
      %v266 = vld [vmem:[%s235 + $0x38] sm:$0xff]
      %v267 = vld [vmem:[%s235 + $0x40] sm:$0xff]
      %v268 = vld [vmem:[%s235 + $0x48] sm:$0xff]
      %v269 = vld [vmem:[%s235 + $0x50] sm:$0xff]
      %v270 = vld [vmem:[%s235 + $0x58] sm:$0xff]
      %v271 = vld [vmem:[%s235 + $0x60] sm:$0xff]
      %v272 = vld [vmem:[%s235 + $0x68] sm:$0xff]
      %v273 = vld [vmem:[%s235 + $0x70] sm:$0xff]
      %v274 = vld [vmem:[%s235 + $0x78] sm:$0xff]
      %v275 = vld [vmem:[%s235 + $0x80] sm:$0xff]
      %v276 = vld [vmem:[%s235 + $0x88] sm:$0xff]
      %v277 = vld [vmem:[%s235 + $0x90] sm:$0xff]
      %v278 = vld [vmem:[%s235 + $0x98] sm:$0xff]
      %v279 = vld [vmem:[%s235 + $0xa0] sm:$0xff]
      %v280 = vld [vmem:[%s235 + $0xa8] sm:$0xff]
      %v281 = vld [vmem:[%s235 + $0xb0] sm:$0xff]
      %v282 = vld [vmem:[%s235 + $0xb8] sm:$0xff]
      %v283 = vld [vmem:[%s235 + $0xc0] sm:$0xff]
      %v284 = vld [vmem:[%s235 + $0xc8] sm:$0xff]
      %v285 = vld [vmem:[%s235 + $0xd0] sm:$0xff]
      %v286 = vld [vmem:[%s235 + $0xd8] sm:$0xff]
      %v287 = vld [vmem:[%s235 + $0xe0] sm:$0xff]
      %v288 = vld [vmem:[%s235 + $0xe8] sm:$0xff]
      %v289 = vld [vmem:[%s235 + $0xf0] sm:$0xff]
      %v290 = vld [vmem:[%s235 + $0xf8] sm:$0xff]
      %v291 = vld [vmem:[%s235 + $0x100] sm:$0xff]
      %v292 = vld [vmem:[%s235 + $0x108] sm:$0xff]
      %v293 = vld [vmem:[%s235 + $0x110] sm:$0xff]
      %v294 = vld [vmem:[%s235 + $0x118] sm:$0xff]
      %v295 = vld [vmem:[%s235 + $0x120] sm:$0xff]
      %v296 = vld [vmem:[%s235 + $0x128] sm:$0xff]
      %v297 = vld [vmem:[%s235 + $0x130] sm:$0xff]
      %v298 = vld [vmem:[%s235 + $0x138] sm:$0xff]
      %v299 = vld [vmem:[%s235 + $0x140] sm:$0xff]
      %v300 = vld [vmem:[%s235 + $0x148] sm:$0xff]
      %v301 = vld [vmem:[%s235 + $0x150] sm:$0xff]
      %v302 = vld [vmem:[%s235 + $0x158] sm:$0xff]
      %v303 = vld [vmem:[%s235 + $0x160] sm:$0xff]
      %v304 = vld [vmem:[%s235 + $0x168] sm:$0xff]
      %v305 = vld [vmem:[%s235 + $0x170] sm:$0xff]
      %v306 = vld [vmem:[%s235 + $0x178] sm:$0xff]
      %v307 = vld [vmem:[%s235 + $0x180] sm:$0xff]
      %v308 = vld [vmem:[%s235 + $0x188] sm:$0xff]
      %v309 = vld [vmem:[%s235 + $0x190] sm:$0xff]
      %v310 = vld [vmem:[%s235 + $0x198] sm:$0xff]
      %v311 = vld [vmem:[%s235 + $0x1a0] sm:$0xff]
      %v312 = vld [vmem:[%s235 + $0x1a8] sm:$0xff]
      %v313 = vld [vmem:[%s235 + $0x1b0] sm:$0xff]
      %v314 = vld [vmem:[%s235 + $0x1b8] sm:$0xff]
      %v315 = vld [vmem:[%s235 + $0x1c0] sm:$0xff]
      %v316 = vld [vmem:[%s235 + $0x1c8] sm:$0xff]
      %v317 = vld [vmem:[%s235 + $0x1d0] sm:$0xff]
      %v318 = vld [vmem:[%s235 + $0x1d8] sm:$0xff]
      %v319 = vld [vmem:[%s235 + $0x1e0] sm:$0xff]
      %v320 = vld [vmem:[%s235 + $0x1e8] sm:$0xff]
      %v321 = vld [vmem:[%s235 + $0x1f0] sm:$0xff]
      %v322 = vld [vmem:[%s235 + $0x1f8] sm:$0xff]
      %v323 = vmul.f32 %v259, 0.125
      %v324 = vmul.f32 %v260, 0.125
      %v325 = vmul.f32 %v261, 0.125
      %v326 = vmul.f32 %v262, 0.125
      %v327 = vmul.f32 %v263, 0.125
      %v328 = vmul.f32 %v264, 0.125
      %v329 = vmul.f32 %v265, 0.125
      %v330 = vmul.f32 %v266, 0.125
      %v331 = vmul.f32 %v267, 0.125
      %v332 = vmul.f32 %v268, 0.125
      %v333 = vmul.f32 %v269, 0.125
      %v334 = vmul.f32 %v270, 0.125
      %v335 = vmul.f32 %v271, 0.125
      %v336 = vmul.f32 %v272, 0.125
      %v337 = vmul.f32 %v273, 0.125
      %v338 = vmul.f32 %v274, 0.125
      %v339 = vmul.f32 %v275, 0.125
      %v340 = vmul.f32 %v276, 0.125
      %v341 = vmul.f32 %v277, 0.125
      %v342 = vmul.f32 %v278, 0.125
      %v343 = vmul.f32 %v279, 0.125
      %v344 = vmul.f32 %v280, 0.125
      %v345 = vmul.f32 %v281, 0.125
      %v346 = vmul.f32 %v282, 0.125
      %v347 = vmul.f32 %v283, 0.125
      %v348 = vmul.f32 %v284, 0.125
      %v349 = vmul.f32 %v285, 0.125
      %v350 = vmul.f32 %v286, 0.125
      %v351 = vmul.f32 %v287, 0.125
      %v352 = vmul.f32 %v288, 0.125
      %v353 = vmul.f32 %v289, 0.125
      %v354 = vmul.f32 %v290, 0.125
      %v355 = vmul.f32 %v291, 0.125
      %v356 = vmul.f32 %v292, 0.125
      %v357 = vmul.f32 %v293, 0.125
      %v358 = vmul.f32 %v294, 0.125
      %v359 = vmul.f32 %v295, 0.125
      %v360 = vmul.f32 %v296, 0.125
      %v361 = vmul.f32 %v297, 0.125
      %v362 = vmul.f32 %v298, 0.125
      %v363 = vmul.f32 %v299, 0.125
      %v364 = vmul.f32 %v300, 0.125
      %v365 = vmul.f32 %v301, 0.125
      %v366 = vmul.f32 %v302, 0.125
      %v367 = vmul.f32 %v303, 0.125
      %v368 = vmul.f32 %v304, 0.125
      %v369 = vmul.f32 %v305, 0.125
      %v370 = vmul.f32 %v306, 0.125
      %v371 = vmul.f32 %v307, 0.125
      %v372 = vmul.f32 %v308, 0.125
      %v373 = vmul.f32 %v309, 0.125
      %v374 = vmul.f32 %v310, 0.125
      %v375 = vmul.f32 %v311, 0.125
      %v376 = vmul.f32 %v312, 0.125
      %v377 = vmul.f32 %v313, 0.125
      %v378 = vmul.f32 %v314, 0.125
      %v379 = vmul.f32 %v315, 0.125
      %v380 = vmul.f32 %v316, 0.125
      %v381 = vmul.f32 %v317, 0.125
      %v382 = vmul.f32 %v318, 0.125
      %v383 = vmul.f32 %v319, 0.125
      %v384 = vmul.f32 %v320, 0.125
      %v385 = vmul.f32 %v321, 0.125
      %v386 = vmul.f32 %v322, 0.125
      %v387 = vpack.c.bf16 %v324, %v323
      %v388 = vpack.c.bf16 %v326, %v325
      %v389 = vpack.c.bf16 %v328, %v327
      %v390 = vpack.c.bf16 %v330, %v329
      %v391 = vpack.c.bf16 %v332, %v331
      %v392 = vpack.c.bf16 %v334, %v333
      %v393 = vpack.c.bf16 %v336, %v335
      %v394 = vpack.c.bf16 %v338, %v337
      %v395 = vpack.c.bf16 %v340, %v339
      %v396 = vpack.c.bf16 %v342, %v341
      %v397 = vpack.c.bf16 %v344, %v343
      %v398 = vpack.c.bf16 %v346, %v345
      %v399 = vpack.c.bf16 %v348, %v347
      %v400 = vpack.c.bf16 %v350, %v349
      %v401 = vpack.c.bf16 %v352, %v351
      %v402 = vpack.c.bf16 %v354, %v353
      %v403 = vpack.c.bf16 %v356, %v355
      %v404 = vpack.c.bf16 %v358, %v357
      %v405 = vpack.c.bf16 %v360, %v359
      %v406 = vpack.c.bf16 %v362, %v361
      %v407 = vpack.c.bf16 %v364, %v363
      %v408 = vpack.c.bf16 %v366, %v365
      %v409 = vpack.c.bf16 %v368, %v367
      %v410 = vpack.c.bf16 %v370, %v369
      %v411 = vpack.c.bf16 %v372, %v371
      %v412 = vpack.c.bf16 %v374, %v373
      %v413 = vpack.c.bf16 %v376, %v375
      %v414 = vpack.c.bf16 %v378, %v377
      %v415 = vpack.c.bf16 %v380, %v379
      %v416 = vpack.c.bf16 %v382, %v381
      %v417 = vpack.c.bf16 %v384, %v383
      %v418 = vpack.c.bf16 %v386, %v385
      %v419 = vld [vmem:[%s242] sm:$0xff]
      %v420 = vld [vmem:[%s242 + $0x8] sm:$0xff]
      %v421 = vld [vmem:[%s242 + $0x10] sm:$0xff]
      %v422 = vld [vmem:[%s242 + $0x18] sm:$0xff]
      %v423 = vld [vmem:[%s242 + $0x20] sm:$0xff]
      %v424 = vld [vmem:[%s242 + $0x28] sm:$0xff]
      %v425 = vld [vmem:[%s242 + $0x30] sm:$0xff]
      %v426 = vld [vmem:[%s242 + $0x38] sm:$0xff]
      %v427 = vld [vmem:[%s242 + $0x40] sm:$0xff]
      %v428 = vld [vmem:[%s242 + $0x48] sm:$0xff]
      %v429 = vld [vmem:[%s242 + $0x50] sm:$0xff]
      %v430 = vld [vmem:[%s242 + $0x58] sm:$0xff]
      %v431 = vld [vmem:[%s242 + $0x60] sm:$0xff]
      %v432 = vld [vmem:[%s242 + $0x68] sm:$0xff]
      %v433 = vld [vmem:[%s242 + $0x70] sm:$0xff]
      %v434 = vld [vmem:[%s242 + $0x78] sm:$0xff]
      %v435 = vld [vmem:[%s242 + $0x80] sm:$0xff]
      %v436 = vld [vmem:[%s242 + $0x88] sm:$0xff]
      %v437 = vld [vmem:[%s242 + $0x90] sm:$0xff]
      %v438 = vld [vmem:[%s242 + $0x98] sm:$0xff]
      %v439 = vld [vmem:[%s242 + $0xa0] sm:$0xff]
      %v440 = vld [vmem:[%s242 + $0xa8] sm:$0xff]
      %v441 = vld [vmem:[%s242 + $0xb0] sm:$0xff]
      %v442 = vld [vmem:[%s242 + $0xb8] sm:$0xff]
      %v443 = vld [vmem:[%s242 + $0xc0] sm:$0xff]
      %v444 = vld [vmem:[%s242 + $0xc8] sm:$0xff]
      %v445 = vld [vmem:[%s242 + $0xd0] sm:$0xff]
      %v446 = vld [vmem:[%s242 + $0xd8] sm:$0xff]
      %v447 = vld [vmem:[%s242 + $0xe0] sm:$0xff]
      %v448 = vld [vmem:[%s242 + $0xe8] sm:$0xff]
      %v449 = vld [vmem:[%s242 + $0xf0] sm:$0xff]
      %v450 = vld [vmem:[%s242 + $0xf8] sm:$0xff]
      %v451 = vld [vmem:[%s242 + $0x100] sm:$0xff]
      %v452 = vld [vmem:[%s242 + $0x108] sm:$0xff]
      %v453 = vld [vmem:[%s242 + $0x110] sm:$0xff]
      %v454 = vld [vmem:[%s242 + $0x118] sm:$0xff]
      %v455 = vld [vmem:[%s242 + $0x120] sm:$0xff]
      %v456 = vld [vmem:[%s242 + $0x128] sm:$0xff]
      %v457 = vld [vmem:[%s242 + $0x130] sm:$0xff]
      %v458 = vld [vmem:[%s242 + $0x138] sm:$0xff]
      %v459 = vld [vmem:[%s242 + $0x140] sm:$0xff]
      %v460 = vld [vmem:[%s242 + $0x148] sm:$0xff]
      %v461 = vld [vmem:[%s242 + $0x150] sm:$0xff]
      %v462 = vld [vmem:[%s242 + $0x158] sm:$0xff]
      %v463 = vld [vmem:[%s242 + $0x160] sm:$0xff]
      %v464 = vld [vmem:[%s242 + $0x168] sm:$0xff]
      %v465 = vld [vmem:[%s242 + $0x170] sm:$0xff]
      %v466 = vld [vmem:[%s242 + $0x178] sm:$0xff]
      %v467 = vld [vmem:[%s242 + $0x180] sm:$0xff]
      %v468 = vld [vmem:[%s242 + $0x188] sm:$0xff]
      %v469 = vld [vmem:[%s242 + $0x190] sm:$0xff]
      %v470 = vld [vmem:[%s242 + $0x198] sm:$0xff]
      %v471 = vld [vmem:[%s242 + $0x1a0] sm:$0xff]
      %v472 = vld [vmem:[%s242 + $0x1a8] sm:$0xff]
      %v473 = vld [vmem:[%s242 + $0x1b0] sm:$0xff]
      %v474 = vld [vmem:[%s242 + $0x1b8] sm:$0xff]
      %v475 = vld [vmem:[%s242 + $0x1c0] sm:$0xff]
      %v476 = vld [vmem:[%s242 + $0x1c8] sm:$0xff]
      %v477 = vld [vmem:[%s242 + $0x1d0] sm:$0xff]
      %v478 = vld [vmem:[%s242 + $0x1d8] sm:$0xff]
      %v479 = vld [vmem:[%s242 + $0x1e0] sm:$0xff]
      %v480 = vld [vmem:[%s242 + $0x1e8] sm:$0xff]
      %v481 = vld [vmem:[%s242 + $0x1f0] sm:$0xff]
      %v482 = vld [vmem:[%s242 + $0x1f8] sm:$0xff]
      %v483 = vpack.c.bf16 %v420, %v419
      %v484 = vpack.c.bf16 %v422, %v421
      %v485 = vpack.c.bf16 %v424, %v423
      %v486 = vpack.c.bf16 %v426, %v425
      %v487 = vpack.c.bf16 %v428, %v427
      %v488 = vpack.c.bf16 %v430, %v429
      %v489 = vpack.c.bf16 %v432, %v431
      %v490 = vpack.c.bf16 %v434, %v433
      %v491 = vpack.c.bf16 %v436, %v435
      %v492 = vpack.c.bf16 %v438, %v437
      %v493 = vpack.c.bf16 %v440, %v439
      %v494 = vpack.c.bf16 %v442, %v441
      %v495 = vpack.c.bf16 %v444, %v443
      %v496 = vpack.c.bf16 %v446, %v445
      %v497 = vpack.c.bf16 %v448, %v447
      %v498 = vpack.c.bf16 %v450, %v449
      %v499 = vpack.c.bf16 %v452, %v451
      %v500 = vpack.c.bf16 %v454, %v453
      %v501 = vpack.c.bf16 %v456, %v455
      %v502 = vpack.c.bf16 %v458, %v457
      %v503 = vpack.c.bf16 %v460, %v459
      %v504 = vpack.c.bf16 %v462, %v461
      %v505 = vpack.c.bf16 %v464, %v463
      %v506 = vpack.c.bf16 %v466, %v465
      %v507 = vpack.c.bf16 %v468, %v467
      %v508 = vpack.c.bf16 %v470, %v469
      %v509 = vpack.c.bf16 %v472, %v471
      %v510 = vpack.c.bf16 %v474, %v473
      %v511 = vpack.c.bf16 %v476, %v475
      %v512 = vpack.c.bf16 %v478, %v477
      %v513 = vpack.c.bf16 %v480, %v479
      %v514 = vpack.c.bf16 %v482, %v481
      %v515 = vld [vmem:[%s249] sm:$0xff]
      %v516 = vld [vmem:[%s249 + $0x8] sm:$0xff]
      %v517 = vld [vmem:[%s249 + $0x10] sm:$0xff]
      %v518 = vld [vmem:[%s249 + $0x18] sm:$0xff]
      %v519 = vld [vmem:[%s249 + $0x20] sm:$0xff]
      %v520 = vld [vmem:[%s249 + $0x28] sm:$0xff]
      %v521 = vld [vmem:[%s249 + $0x30] sm:$0xff]
      %v522 = vld [vmem:[%s249 + $0x38] sm:$0xff]
      %v523 = vld [vmem:[%s249 + $0x40] sm:$0xff]
      %v524 = vld [vmem:[%s249 + $0x48] sm:$0xff]
      %v525 = vld [vmem:[%s249 + $0x50] sm:$0xff]
      %v526 = vld [vmem:[%s249 + $0x58] sm:$0xff]
      %v527 = vld [vmem:[%s249 + $0x60] sm:$0xff]
      %v528 = vld [vmem:[%s249 + $0x68] sm:$0xff]
      %v529 = vld [vmem:[%s249 + $0x70] sm:$0xff]
      %v530 = vld [vmem:[%s249 + $0x78] sm:$0xff]
      %v531 = vld [vmem:[%s249 + $0x80] sm:$0xff]
      %v532 = vld [vmem:[%s249 + $0x88] sm:$0xff]
      %v533 = vld [vmem:[%s249 + $0x90] sm:$0xff]
      %v534 = vld [vmem:[%s249 + $0x98] sm:$0xff]
      %v535 = vld [vmem:[%s249 + $0xa0] sm:$0xff]
      %v536 = vld [vmem:[%s249 + $0xa8] sm:$0xff]
      %v537 = vld [vmem:[%s249 + $0xb0] sm:$0xff]
      %v538 = vld [vmem:[%s249 + $0xb8] sm:$0xff]
      %v539 = vld [vmem:[%s249 + $0xc0] sm:$0xff]
      %v540 = vld [vmem:[%s249 + $0xc8] sm:$0xff]
      %v541 = vld [vmem:[%s249 + $0xd0] sm:$0xff]
      %v542 = vld [vmem:[%s249 + $0xd8] sm:$0xff]
      %v543 = vld [vmem:[%s249 + $0xe0] sm:$0xff]
      %v544 = vld [vmem:[%s249 + $0xe8] sm:$0xff]
      %v545 = vld [vmem:[%s249 + $0xf0] sm:$0xff]
      %v546 = vld [vmem:[%s249 + $0xf8] sm:$0xff]
      %v547 = vld [vmem:[%s249 + $0x100] sm:$0xff]
      %v548 = vld [vmem:[%s249 + $0x108] sm:$0xff]
      %v549 = vld [vmem:[%s249 + $0x110] sm:$0xff]
      %v550 = vld [vmem:[%s249 + $0x118] sm:$0xff]
      %v551 = vld [vmem:[%s249 + $0x120] sm:$0xff]
      %v552 = vld [vmem:[%s249 + $0x128] sm:$0xff]
      %v553 = vld [vmem:[%s249 + $0x130] sm:$0xff]
      %v554 = vld [vmem:[%s249 + $0x138] sm:$0xff]
      %v555 = vld [vmem:[%s249 + $0x140] sm:$0xff]
      %v556 = vld [vmem:[%s249 + $0x148] sm:$0xff]
      %v557 = vld [vmem:[%s249 + $0x150] sm:$0xff]
      %v558 = vld [vmem:[%s249 + $0x158] sm:$0xff]
      %v559 = vld [vmem:[%s249 + $0x160] sm:$0xff]
      %v560 = vld [vmem:[%s249 + $0x168] sm:$0xff]
      %v561 = vld [vmem:[%s249 + $0x170] sm:$0xff]
      %v562 = vld [vmem:[%s249 + $0x178] sm:$0xff]
      %v563 = vld [vmem:[%s249 + $0x180] sm:$0xff]
      %v564 = vld [vmem:[%s249 + $0x188] sm:$0xff]
      %v565 = vld [vmem:[%s249 + $0x190] sm:$0xff]
      %v566 = vld [vmem:[%s249 + $0x198] sm:$0xff]
      %v567 = vld [vmem:[%s249 + $0x1a0] sm:$0xff]
      %v568 = vld [vmem:[%s249 + $0x1a8] sm:$0xff]
      %v569 = vld [vmem:[%s249 + $0x1b0] sm:$0xff]
      %v570 = vld [vmem:[%s249 + $0x1b8] sm:$0xff]
      %v571 = vld [vmem:[%s249 + $0x1c0] sm:$0xff]
      %v572 = vld [vmem:[%s249 + $0x1c8] sm:$0xff]
      %v573 = vld [vmem:[%s249 + $0x1d0] sm:$0xff]
      %v574 = vld [vmem:[%s249 + $0x1d8] sm:$0xff]
      %v575 = vld [vmem:[%s249 + $0x1e0] sm:$0xff]
      %v576 = vld [vmem:[%s249 + $0x1e8] sm:$0xff]
      %v577 = vld [vmem:[%s249 + $0x1f0] sm:$0xff]
      %v578 = vld [vmem:[%s249 + $0x1f8] sm:$0xff]
      %v579 = vpack.c.bf16 %v516, %v515
      %v580 = vpack.c.bf16 %v518, %v517
      %v581 = vpack.c.bf16 %v520, %v519
      %v582 = vpack.c.bf16 %v522, %v521
      %v583 = vpack.c.bf16 %v524, %v523
      %v584 = vpack.c.bf16 %v526, %v525
      %v585 = vpack.c.bf16 %v528, %v527
      %v586 = vpack.c.bf16 %v530, %v529
      %v587 = vpack.c.bf16 %v532, %v531
      %v588 = vpack.c.bf16 %v534, %v533
      %v589 = vpack.c.bf16 %v536, %v535
      %v590 = vpack.c.bf16 %v538, %v537
      %v591 = vpack.c.bf16 %v540, %v539
      %v592 = vpack.c.bf16 %v542, %v541
      %v593 = vpack.c.bf16 %v544, %v543
      %v594 = vpack.c.bf16 %v546, %v545
      %v595 = vpack.c.bf16 %v548, %v547
      %v596 = vpack.c.bf16 %v550, %v549
      %v597 = vpack.c.bf16 %v552, %v551
      %v598 = vpack.c.bf16 %v554, %v553
      %v599 = vpack.c.bf16 %v556, %v555
      %v600 = vpack.c.bf16 %v558, %v557
      %v601 = vpack.c.bf16 %v560, %v559
      %v602 = vpack.c.bf16 %v562, %v561
      %v603 = vpack.c.bf16 %v564, %v563
      %v604 = vpack.c.bf16 %v566, %v565
      %v605 = vpack.c.bf16 %v568, %v567
      %v606 = vpack.c.bf16 %v570, %v569
      %v607 = vpack.c.bf16 %v572, %v571
      %v608 = vpack.c.bf16 %v574, %v573
      %v609 = vpack.c.bf16 %v576, %v575
      %v610 = vpack.c.bf16 %v578, %v577
      %v611 = vld [vmem:[%s4] sm:$0xff]
      %v612 = vld [vmem:[%s4 + $0x8] sm:$0xff]
      %v613 = vld [vmem:[%s4 + $0x10] sm:$0xff]
      %v614 = vld [vmem:[%s4 + $0x18] sm:$0xff]
      %v615 = vld [vmem:[%s4 + $0x20] sm:$0xff]
      %v616 = vld [vmem:[%s4 + $0x28] sm:$0xff]
      %v617 = vld [vmem:[%s4 + $0x30] sm:$0xff]
      %v618 = vld [vmem:[%s4 + $0x38] sm:$0xff]
      %v619 = vld [vmem:[%s4 + $0x40] sm:$0xff]
      %v620 = vld [vmem:[%s4 + $0x48] sm:$0xff]
      %v621 = vld [vmem:[%s4 + $0x50] sm:$0xff]
      %v622 = vld [vmem:[%s4 + $0x58] sm:$0xff]
      %v623 = vld [vmem:[%s4 + $0x60] sm:$0xff]
      %v624 = vld [vmem:[%s4 + $0x68] sm:$0xff]
      %v625 = vld [vmem:[%s4 + $0x70] sm:$0xff]
      %v626 = vld [vmem:[%s4 + $0x78] sm:$0xff]
      %vm627 = vcmask 523264
      %v629 = vsel %vm627, %v387, 0
      %v632 = vsel %vm627, %v388, 0
      %v635 = vsel %vm627, %v389, 0
      %v638 = vsel %vm627, %v390, 0
      %v641 = vsel %vm627, %v391, 0
      %v644 = vsel %vm627, %v392, 0
      %v647 = vsel %vm627, %v393, 0
      %v650 = vsel %vm627, %v394, 0
      %v653 = vsel %vm627, %v483, 0
      %v656 = vsel %vm627, %v484, 0
      %v659 = vsel %vm627, %v485, 0
      %v662 = vsel %vm627, %v486, 0
      %v665 = vsel %vm627, %v487, 0
      %v668 = vsel %vm627, %v488, 0
      %v671 = vsel %vm627, %v489, 0
      %v674 = vsel %vm627, %v490, 0
      %676 = vmatprep.subr.bf16.mxu0 0
      %677 = vmatpush1.bf16.xpose.msra.mxu0 %v653
      %678 = vmatprep.subr.bf16.mxu0 0
      %679 = vmatpush1.bf16.xpose.msra.mxu0 %v656
      %680 = vmatprep.subr.bf16.mxu0 0
      %681 = vmatpush1.bf16.xpose.msra.mxu0 %v659
      %682 = vmatprep.subr.bf16.mxu0 0
      %683 = vmatpush1.bf16.xpose.msra.mxu0 %v662
      %684 = vmatprep.subr.bf16.mxu0 0
      %685 = vmatpush1.bf16.xpose.msra.mxu0 %v665
      %686 = vmatprep.subr.bf16.mxu0 0
      %687 = vmatpush1.bf16.xpose.msra.mxu0 %v668
      %688 = vmatprep.subr.bf16.mxu0 0
      %689 = vmatpush1.bf16.xpose.msra.mxu0 %v671
      %690 = vmatprep.subr.bf16.mxu0 0
      %691 = vmatpush1.bf16.xpose.msra.mxu0 %v674
      %692 = vmatprep.subr.bf16.mxu0 0
      %693 = vmatpush1.bf16.xpose.msra.mxu0 0
      %694 = vmatprep.subr.bf16.mxu0 0
      %695 = vmatpush1.bf16.xpose.msra.mxu0 0
      %696 = vmatprep.subr.bf16.mxu0 0
      %697 = vmatpush1.bf16.xpose.msra.mxu0 0
      %698 = vmatprep.subr.bf16.mxu0 0
      %699 = vmatpush1.bf16.xpose.msra.mxu0 0
      %700 = vmatprep.subr.bf16.mxu0 0
      %701 = vmatpush1.bf16.xpose.msra.mxu0 0
      %702 = vmatprep.subr.bf16.mxu0 0
      %703 = vmatpush1.bf16.xpose.msra.mxu0 0
      %704 = vmatprep.subr.bf16.mxu0 0
      %705 = vmatpush1.bf16.xpose.msra.mxu0 0
      %706 = vmatprep.subr.bf16.mxu0 0
      %707 = vmatpush1.bf16.xpose.msra.mxu0 0
      %708 = vmatprep.mubr.bf16.mxu0 0
      %709 = vmatmul.mubr.bf16.gmra.mrb[0].mxu0 %v629
      %v710 = vpop.f32.mrb[0].mxu0
      %v711 = vadd.f32 %v611, %v710
      %v712 = vpop.f32.mrb[0].mxu0
      %v713 = vpop.f32.mrb[0].mxu0
      %v714 = vadd.f32 %v612, %v713
      %v715 = vpop.f32.mrb[0].mxu0
      %716 = vmatprep.mubr.bf16.mxu0 0
      %717 = vmatmul.mubr.bf16.gmra.mrb[0].mxu0 %v632
      %v718 = vpop.f32.mrb[0].mxu0
      %v719 = vadd.f32 %v613, %v718
      %v720 = vpop.f32.mrb[0].mxu0
      %v721 = vpop.f32.mrb[0].mxu0
      %v722 = vadd.f32 %v614, %v721
      %v723 = vpop.f32.mrb[0].mxu0
      %724 = vmatprep.mubr.bf16.mxu0 0
      %725 = vmatmul.mubr.bf16.gmra.mrb[0].mxu0 %v635
      %v726 = vpop.f32.mrb[0].mxu0
      %v727 = vadd.f32 %v615, %v726
      %v728 = vpop.f32.mrb[0].mxu0
      %v729 = vpop.f32.mrb[0].mxu0
      %v730 = vadd.f32 %v616, %v729
      %v731 = vpop.f32.mrb[0].mxu0
      %732 = vmatprep.mubr.bf16.mxu0 0
      %733 = vmatmul.mubr.bf16.gmra.mrb[0].mxu0 %v638
      %v734 = vpop.f32.mrb[0].mxu0
      %v735 = vadd.f32 %v617, %v734
      %v736 = vpop.f32.mrb[0].mxu0
      %v737 = vpop.f32.mrb[0].mxu0
      %v738 = vadd.f32 %v618, %v737
      %v739 = vpop.f32.mrb[0].mxu0
      %740 = vmatprep.mubr.bf16.mxu0 0
      %741 = vmatmul.mubr.bf16.gmra.mrb[0].mxu0 %v641
      %v742 = vpop.f32.mrb[0].mxu0
      %v743 = vadd.f32 %v619, %v742
      %v744 = vpop.f32.mrb[0].mxu0
      %v745 = vpop.f32.mrb[0].mxu0
      %v746 = vadd.f32 %v620, %v745
      %v747 = vpop.f32.mrb[0].mxu0
      %748 = vmatprep.mubr.bf16.mxu0 0
      %749 = vmatmul.mubr.bf16.gmra.mrb[0].mxu0 %v644
      %v750 = vpop.f32.mrb[0].mxu0
      %v751 = vadd.f32 %v621, %v750
      %v752 = vpop.f32.mrb[0].mxu0
      %v753 = vpop.f32.mrb[0].mxu0
      %v754 = vadd.f32 %v622, %v753
      %v755 = vpop.f32.mrb[0].mxu0
      %756 = vmatprep.mubr.bf16.mxu0 0
      %757 = vmatmul.mubr.bf16.gmra.mrb[0].mxu0 %v647
      %v758 = vpop.f32.mrb[0].mxu0
      %v759 = vadd.f32 %v623, %v758
      %v760 = vpop.f32.mrb[0].mxu0
      %v761 = vpop.f32.mrb[0].mxu0
      %v762 = vadd.f32 %v624, %v761
      %v763 = vpop.f32.mrb[0].mxu0
      %764 = vmatprep.mubr.bf16.mxu0 0
      %765 = vmatmul.mubr.bf16.gmra.mrb[0].mxu0 %v650
      %v766 = vpop.f32.mrb[0].mxu0
      %v767 = vadd.f32 %v625, %v766
      %v768 = vpop.f32.mrb[0].mxu0
      %v769 = vpop.f32.mrb[0].mxu0
      %v770 = vadd.f32 %v626, %v769
      %v771 = vpop.f32.mrb[0].mxu0
      %772 = vdwg.mxu0
      %v774 = vsel %vm627, %v395, 0
      %v777 = vsel %vm627, %v396, 0
      %v780 = vsel %vm627, %v397, 0
      %v783 = vsel %vm627, %v398, 0
      %v786 = vsel %vm627, %v399, 0
      %v789 = vsel %vm627, %v400, 0
      %v792 = vsel %vm627, %v401, 0
      %v795 = vsel %vm627, %v402, 0
      %v798 = vsel %vm627, %v491, 0
      %v801 = vsel %vm627, %v492, 0
      %v804 = vsel %vm627, %v493, 0
      %v807 = vsel %vm627, %v494, 0
      %v810 = vsel %vm627, %v495, 0
      %v813 = vsel %vm627, %v496, 0
      %v816 = vsel %vm627, %v497, 0
      %v819 = vsel %vm627, %v498, 0
      %821 = vmatprep.subr.bf16.mxu0 0
      %822 = vmatpush1.bf16.xpose.msra.mxu0 %v798
      %823 = vmatprep.subr.bf16.mxu0 0
      %824 = vmatpush1.bf16.xpose.msra.mxu0 %v801
      %825 = vmatprep.subr.bf16.mxu0 0
      %826 = vmatpush1.bf16.xpose.msra.mxu0 %v804
      %827 = vmatprep.subr.bf16.mxu0 0
      %828 = vmatpush1.bf16.xpose.msra.mxu0 %v807
      %829 = vmatprep.subr.bf16.mxu0 0
      %830 = vmatpush1.bf16.xpose.msra.mxu0 %v810
      %831 = vmatprep.subr.bf16.mxu0 0
      %832 = vmatpush1.bf16.xpose.msra.mxu0 %v813
      %833 = vmatprep.subr.bf16.mxu0 0
      %834 = vmatpush1.bf16.xpose.msra.mxu0 %v816
      %835 = vmatprep.subr.bf16.mxu0 0
      %836 = vmatpush1.bf16.xpose.msra.mxu0 %v819
      %837 = vmatprep.subr.bf16.mxu0 0
      %838 = vmatpush1.bf16.xpose.msra.mxu0 0
      %839 = vmatprep.subr.bf16.mxu0 0
      %840 = vmatpush1.bf16.xpose.msra.mxu0 0
      %841 = vmatprep.subr.bf16.mxu0 0
      %842 = vmatpush1.bf16.xpose.msra.mxu0 0
      %843 = vmatprep.subr.bf16.mxu0 0
      %844 = vmatpush1.bf16.xpose.msra.mxu0 0
      %845 = vmatprep.subr.bf16.mxu0 0
      %846 = vmatpush1.bf16.xpose.msra.mxu0 0
      %847 = vmatprep.subr.bf16.mxu0 0
      %848 = vmatpush1.bf16.xpose.msra.mxu0 0
      %849 = vmatprep.subr.bf16.mxu0 0
      %850 = vmatpush1.bf16.xpose.msra.mxu0 0
      %851 = vmatprep.subr.bf16.mxu0 0
      %852 = vmatpush1.bf16.xpose.msra.mxu0 0
      %853 = vmatprep.mubr.bf16.mxu0 0
      %854 = vmatmul.mubr.bf16.gmra.mrb[0].mxu0 %v774
      %v855 = vpop.f32.mrb[0].mxu0
      %v856 = vadd.f32 %v611, %v855
      %v857 = vpop.f32.mrb[0].mxu0
      %v858 = vpop.f32.mrb[0].mxu0
      %v859 = vadd.f32 %v612, %v858
      %v860 = vpop.f32.mrb[0].mxu0
      %861 = vmatprep.mubr.bf16.mxu0 0
      %862 = vmatmul.mubr.bf16.gmra.mrb[0].mxu0 %v777
      %v863 = vpop.f32.mrb[0].mxu0
      %v864 = vadd.f32 %v613, %v863
      %v865 = vpop.f32.mrb[0].mxu0
      %v866 = vpop.f32.mrb[0].mxu0
      %v867 = vadd.f32 %v614, %v866
      %v868 = vpop.f32.mrb[0].mxu0
      %869 = vmatprep.mubr.bf16.mxu0 0
      %870 = vmatmul.mubr.bf16.gmra.mrb[0].mxu0 %v780
      %v871 = vpop.f32.mrb[0].mxu0
      %v872 = vadd.f32 %v615, %v871
      %v873 = vpop.f32.mrb[0].mxu0
      %v874 = vpop.f32.mrb[0].mxu0
      %v875 = vadd.f32 %v616, %v874
      %v876 = vpop.f32.mrb[0].mxu0
      %877 = vmatprep.mubr.bf16.mxu0 0
      %878 = vmatmul.mubr.bf16.gmra.mrb[0].mxu0 %v783
      %v879 = vpop.f32.mrb[0].mxu0
      %v880 = vadd.f32 %v617, %v879
      %v881 = vpop.f32.mrb[0].mxu0
      %v882 = vpop.f32.mrb[0].mxu0
      %v883 = vadd.f32 %v618, %v882
      %v884 = vpop.f32.mrb[0].mxu0
      %885 = vmatprep.mubr.bf16.mxu0 0
      %886 = vmatmul.mubr.bf16.gmra.mrb[0].mxu0 %v786
      %v887 = vpop.f32.mrb[0].mxu0
      %v888 = vadd.f32 %v619, %v887
      %v889 = vpop.f32.mrb[0].mxu0
      %v890 = vpop.f32.mrb[0].mxu0
      %v891 = vadd.f32 %v620, %v890
      %v892 = vpop.f32.mrb[0].mxu0
      %893 = vmatprep.mubr.bf16.mxu0 0
      %894 = vmatmul.mubr.bf16.gmra.mrb[0].mxu0 %v789
      %v895 = vpop.f32.mrb[0].mxu0
      %v896 = vadd.f32 %v621, %v895
      %v897 = vpop.f32.mrb[0].mxu0
      %v898 = vpop.f32.mrb[0].mxu0
      %v899 = vadd.f32 %v622, %v898
      %v900 = vpop.f32.mrb[0].mxu0
      %901 = vmatprep.mubr.bf16.mxu0 0
      %902 = vmatmul.mubr.bf16.gmra.mrb[0].mxu0 %v792
      %v903 = vpop.f32.mrb[0].mxu0
      %v904 = vadd.f32 %v623, %v903
      %v905 = vpop.f32.mrb[0].mxu0
      %v906 = vpop.f32.mrb[0].mxu0
      %v907 = vadd.f32 %v624, %v906
      %v908 = vpop.f32.mrb[0].mxu0
      %909 = vmatprep.mubr.bf16.mxu0 0
      %910 = vmatmul.mubr.bf16.gmra.mrb[0].mxu0 %v795
      %v911 = vpop.f32.mrb[0].mxu0
      %v912 = vadd.f32 %v625, %v911
      %v913 = vpop.f32.mrb[0].mxu0
      %v914 = vpop.f32.mrb[0].mxu0
      %v915 = vadd.f32 %v626, %v914
      %v916 = vpop.f32.mrb[0].mxu0
      %917 = vdwg.mxu0
      %v919 = vsel %vm627, %v403, 0
      %v922 = vsel %vm627, %v404, 0
      %v925 = vsel %vm627, %v405, 0
      %v928 = vsel %vm627, %v406, 0
      %v931 = vsel %vm627, %v407, 0
      %v934 = vsel %vm627, %v408, 0
      %v937 = vsel %vm627, %v409, 0
      %v940 = vsel %vm627, %v410, 0
      %v943 = vsel %vm627, %v499, 0
      %v946 = vsel %vm627, %v500, 0
      %v949 = vsel %vm627, %v501, 0
      %v952 = vsel %vm627, %v502, 0
      %v955 = vsel %vm627, %v503, 0
      %v958 = vsel %vm627, %v504, 0
      %v961 = vsel %vm627, %v505, 0
      %v964 = vsel %vm627, %v506, 0
      %966 = vmatprep.subr.bf16.mxu0 0
      %967 = vmatpush1.bf16.xpose.msra.mxu0 %v943
      %968 = vmatprep.subr.bf16.mxu0 0
      %969 = vmatpush1.bf16.xpose.msra.mxu0 %v946
      %970 = vmatprep.subr.bf16.mxu0 0
      %971 = vmatpush1.bf16.xpose.msra.mxu0 %v949
      %972 = vmatprep.subr.bf16.mxu0 0
      %973 = vmatpush1.bf16.xpose.msra.mxu0 %v952
      %974 = vmatprep.subr.bf16.mxu0 0
      %975 = vmatpush1.bf16.xpose.msra.mxu0 %v955
      %976 = vmatprep.subr.bf16.mxu0 0
      %977 = vmatpush1.bf16.xpose.msra.mxu0 %v958
      %978 = vmatprep.subr.bf16.mxu0 0
      %979 = vmatpush1.bf16.xpose.msra.mxu0 %v961
      %980 = vmatprep.subr.bf16.mxu0 0
      %981 = vmatpush1.bf16.xpose.msra.mxu0 %v964
      %982 = vmatprep.subr.bf16.mxu0 0
      %983 = vmatpush1.bf16.xpose.msra.mxu0 0
      %984 = vmatprep.subr.bf16.mxu0 0
      %985 = vmatpush1.bf16.xpose.msra.mxu0 0
      %986 = vmatprep.subr.bf16.mxu0 0
      %987 = vmatpush1.bf16.xpose.msra.mxu0 0
      %988 = vmatprep.subr.bf16.mxu0 0
      %989 = vmatpush1.bf16.xpose.msra.mxu0 0
      %990 = vmatprep.subr.bf16.mxu0 0
      %991 = vmatpush1.bf16.xpose.msra.mxu0 0
      %992 = vmatprep.subr.bf16.mxu0 0
      %993 = vmatpush1.bf16.xpose.msra.mxu0 0
      %994 = vmatprep.subr.bf16.mxu0 0
      %995 = vmatpush1.bf16.xpose.msra.mxu0 0
      %996 = vmatprep.subr.bf16.mxu0 0
      %997 = vmatpush1.bf16.xpose.msra.mxu0 0
      %998 = vmatprep.mubr.bf16.mxu0 0
      %999 = vmatmul.mubr.bf16.gmra.mrb[0].mxu0 %v919
      %v1000 = vpop.f32.mrb[0].mxu0
      %v1001 = vadd.f32 %v611, %v1000
      %v1002 = vpop.f32.mrb[0].mxu0
      %v1003 = vpop.f32.mrb[0].mxu0
      %v1004 = vadd.f32 %v612, %v1003
      %v1005 = vpop.f32.mrb[0].mxu0
      %1006 = vmatprep.mubr.bf16.mxu0 0
      %1007 = vmatmul.mubr.bf16.gmra.mrb[0].mxu0 %v922
      %v1008 = vpop.f32.mrb[0].mxu0
      %v1009 = vadd.f32 %v613, %v1008
      %v1010 = vpop.f32.mrb[0].mxu0
      %v1011 = vpop.f32.mrb[0].mxu0
      %v1012 = vadd.f32 %v614, %v1011
      %v1013 = vpop.f32.mrb[0].mxu0
      %1014 = vmatprep.mubr.bf16.mxu0 0
      %1015 = vmatmul.mubr.bf16.gmra.mrb[0].mxu0 %v925
      %v1016 = vpop.f32.mrb[0].mxu0
      %v1017 = vadd.f32 %v615, %v1016
      %v1018 = vpop.f32.mrb[0].mxu0
      %v1019 = vpop.f32.mrb[0].mxu0
      %v1020 = vadd.f32 %v616, %v1019
      %v1021 = vpop.f32.mrb[0].mxu0
      %1022 = vmatprep.mubr.bf16.mxu0 0
      %1023 = vmatmul.mubr.bf16.gmra.mrb[0].mxu0 %v928
      %v1024 = vpop.f32.mrb[0].mxu0
      %v1025 = vadd.f32 %v617, %v1024
      %v1026 = vpop.f32.mrb[0].mxu0
      %v1027 = vpop.f32.mrb[0].mxu0
      %v1028 = vadd.f32 %v618, %v1027
      %v1029 = vpop.f32.mrb[0].mxu0
      %1030 = vmatprep.mubr.bf16.mxu0 0
      %1031 = vmatmul.mubr.bf16.gmra.mrb[0].mxu0 %v931
      %v1032 = vpop.f32.mrb[0].mxu0
      %v1033 = vadd.f32 %v619, %v1032
      %v1034 = vpop.f32.mrb[0].mxu0
      %v1035 = vpop.f32.mrb[0].mxu0
      %v1036 = vadd.f32 %v620, %v1035
      %v1037 = vpop.f32.mrb[0].mxu0
      %1038 = vmatprep.mubr.bf16.mxu0 0
      %1039 = vmatmul.mubr.bf16.gmra.mrb[0].mxu0 %v934
      %v1040 = vpop.f32.mrb[0].mxu0
      %v1041 = vadd.f32 %v621, %v1040
      %v1042 = vpop.f32.mrb[0].mxu0
      %v1043 = vpop.f32.mrb[0].mxu0
      %v1044 = vadd.f32 %v622, %v1043
      %v1045 = vpop.f32.mrb[0].mxu0
      %1046 = vmatprep.mubr.bf16.mxu0 0
      %1047 = vmatmul.mubr.bf16.gmra.mrb[0].mxu0 %v937
      %v1048 = vpop.f32.mrb[0].mxu0
      %v1049 = vadd.f32 %v623, %v1048
      %v1050 = vpop.f32.mrb[0].mxu0
      %v1051 = vpop.f32.mrb[0].mxu0
      %v1052 = vadd.f32 %v624, %v1051
      %v1053 = vpop.f32.mrb[0].mxu0
      %1054 = vmatprep.mubr.bf16.mxu0 0
      %1055 = vmatmul.mubr.bf16.gmra.mrb[0].mxu0 %v940
      %v1056 = vpop.f32.mrb[0].mxu0
      %v1057 = vadd.f32 %v625, %v1056
      %v1058 = vpop.f32.mrb[0].mxu0
      %v1059 = vpop.f32.mrb[0].mxu0
      %v1060 = vadd.f32 %v626, %v1059
      %v1061 = vpop.f32.mrb[0].mxu0
      %1062 = vdwg.mxu0
      %v1064 = vsel %vm627, %v411, 0
      %v1067 = vsel %vm627, %v412, 0
      %v1070 = vsel %vm627, %v413, 0
      %v1073 = vsel %vm627, %v414, 0
      %v1076 = vsel %vm627, %v415, 0
      %v1079 = vsel %vm627, %v416, 0
      %v1082 = vsel %vm627, %v417, 0
      %v1085 = vsel %vm627, %v418, 0
      %v1088 = vsel %vm627, %v507, 0
      %v1091 = vsel %vm627, %v508, 0
      %v1094 = vsel %vm627, %v509, 0
      %v1097 = vsel %vm627, %v510, 0
      %v1100 = vsel %vm627, %v511, 0
      %v1103 = vsel %vm627, %v512, 0
      %v1106 = vsel %vm627, %v513, 0
      %v1109 = vsel %vm627, %v514, 0
      %1111 = vmatprep.subr.bf16.mxu0 0
      %1112 = vmatpush1.bf16.xpose.msra.mxu0 %v1088
      %1113 = vmatprep.subr.bf16.mxu0 0
      %1114 = vmatpush1.bf16.xpose.msra.mxu0 %v1091
      %1115 = vmatprep.subr.bf16.mxu0 0
      %1116 = vmatpush1.bf16.xpose.msra.mxu0 %v1094
      %1117 = vmatprep.subr.bf16.mxu0 0
      %1118 = vmatpush1.bf16.xpose.msra.mxu0 %v1097
      %1119 = vmatprep.subr.bf16.mxu0 0
      %1120 = vmatpush1.bf16.xpose.msra.mxu0 %v1100
      %1121 = vmatprep.subr.bf16.mxu0 0
      %1122 = vmatpush1.bf16.xpose.msra.mxu0 %v1103
      %1123 = vmatprep.subr.bf16.mxu0 0
      %1124 = vmatpush1.bf16.xpose.msra.mxu0 %v1106
      %1125 = vmatprep.subr.bf16.mxu0 0
      %1126 = vmatpush1.bf16.xpose.msra.mxu0 %v1109
      %1127 = vmatprep.subr.bf16.mxu0 0
      %1128 = vmatpush1.bf16.xpose.msra.mxu0 0
      %1129 = vmatprep.subr.bf16.mxu0 0
      %1130 = vmatpush1.bf16.xpose.msra.mxu0 0
      %1131 = vmatprep.subr.bf16.mxu0 0
      %1132 = vmatpush1.bf16.xpose.msra.mxu0 0
      %1133 = vmatprep.subr.bf16.mxu0 0
      %1134 = vmatpush1.bf16.xpose.msra.mxu0 0
      %1135 = vmatprep.subr.bf16.mxu0 0
      %1136 = vmatpush1.bf16.xpose.msra.mxu0 0
      %1137 = vmatprep.subr.bf16.mxu0 0
      %1138 = vmatpush1.bf16.xpose.msra.mxu0 0
      %1139 = vmatprep.subr.bf16.mxu0 0
      %1140 = vmatpush1.bf16.xpose.msra.mxu0 0
      %1141 = vmatprep.subr.bf16.mxu0 0
      %1142 = vmatpush1.bf16.xpose.msra.mxu0 0
      %1143 = vmatprep.mubr.bf16.mxu0 0
      %1144 = vmatmul.mubr.bf16.gmra.mrb[0].mxu0 %v1064
      %v1145 = vpop.f32.mrb[0].mxu0
      %v1146 = vadd.f32 %v611, %v1145
      %v1147 = vpop.f32.mrb[0].mxu0
      %v1148 = vpop.f32.mrb[0].mxu0
      %v1149 = vadd.f32 %v612, %v1148
      %v1150 = vpop.f32.mrb[0].mxu0
      %1151 = vmatprep.mubr.bf16.mxu0 0
      %1152 = vmatmul.mubr.bf16.gmra.mrb[0].mxu0 %v1067
      %v1153 = vpop.f32.mrb[0].mxu0
      %v1154 = vadd.f32 %v613, %v1153
      %v1155 = vpop.f32.mrb[0].mxu0
      %v1156 = vpop.f32.mrb[0].mxu0
      %v1157 = vadd.f32 %v614, %v1156
      %v1158 = vpop.f32.mrb[0].mxu0
      %1159 = vmatprep.mubr.bf16.mxu0 0
      %1160 = vmatmul.mubr.bf16.gmra.mrb[0].mxu0 %v1070
      %v1161 = vpop.f32.mrb[0].mxu0
      %v1162 = vadd.f32 %v615, %v1161
      %v1163 = vpop.f32.mrb[0].mxu0
      %v1164 = vpop.f32.mrb[0].mxu0
      %v1165 = vadd.f32 %v616, %v1164
      %v1166 = vpop.f32.mrb[0].mxu0
      %1167 = vmatprep.mubr.bf16.mxu0 0
      %1168 = vmatmul.mubr.bf16.gmra.mrb[0].mxu0 %v1073
      %v1169 = vpop.f32.mrb[0].mxu0
      %v1170 = vadd.f32 %v617, %v1169
      %v1171 = vpop.f32.mrb[0].mxu0
      %v1172 = vpop.f32.mrb[0].mxu0
      %v1173 = vadd.f32 %v618, %v1172
      %v1174 = vpop.f32.mrb[0].mxu0
      %1175 = vmatprep.mubr.bf16.mxu0 0
      %1176 = vmatmul.mubr.bf16.gmra.mrb[0].mxu0 %v1076
      %v1177 = vpop.f32.mrb[0].mxu0
      %v1178 = vadd.f32 %v619, %v1177
      %v1179 = vpop.f32.mrb[0].mxu0
      %v1180 = vpop.f32.mrb[0].mxu0
      %v1181 = vadd.f32 %v620, %v1180
      %v1182 = vpop.f32.mrb[0].mxu0
      %1183 = vmatprep.mubr.bf16.mxu0 0
      %1184 = vmatmul.mubr.bf16.gmra.mrb[0].mxu0 %v1079
      %v1185 = vpop.f32.mrb[0].mxu0
      %v1186 = vadd.f32 %v621, %v1185
      %v1187 = vpop.f32.mrb[0].mxu0
      %v1188 = vpop.f32.mrb[0].mxu0
      %v1189 = vadd.f32 %v622, %v1188
      %v1190 = vpop.f32.mrb[0].mxu0
      %1191 = vmatprep.mubr.bf16.mxu0 0
      %1192 = vmatmul.mubr.bf16.gmra.mrb[0].mxu0 %v1082
      %v1193 = vpop.f32.mrb[0].mxu0
      %v1194 = vadd.f32 %v623, %v1193
      %v1195 = vpop.f32.mrb[0].mxu0
      %v1196 = vpop.f32.mrb[0].mxu0
      %v1197 = vadd.f32 %v624, %v1196
      %v1198 = vpop.f32.mrb[0].mxu0
      %1199 = vmatprep.mubr.bf16.mxu0 0
      %1200 = vmatmul.mubr.bf16.gmra.mrb[0].mxu0 %v1085
      %v1201 = vpop.f32.mrb[0].mxu0
      %v1202 = vadd.f32 %v625, %v1201
      %v1203 = vpop.f32.mrb[0].mxu0
      %v1204 = vpop.f32.mrb[0].mxu0
      %v1205 = vadd.f32 %v626, %v1204
      %v1206 = vpop.f32.mrb[0].mxu0
      %1207 = vdwg.mxu0
      %1208 = vmax.xlane.f32.xlu0 %v711
      %v1209 = vpop.xlane.xlu0 %1208
      %1210 = vmax.xlane.f32.xlu0 %v714
      %v1211 = vpop.xlane.xlu0 %1210
      %1212 = vmax.xlane.f32.xlu0 %v719
      %v1213 = vpop.xlane.xlu0 %1212
      %1214 = vmax.xlane.f32.xlu0 %v722
      %v1215 = vpop.xlane.xlu0 %1214
      %1216 = vmax.xlane.f32.xlu0 %v727
      %v1217 = vpop.xlane.xlu0 %1216
      %1218 = vmax.xlane.f32.xlu0 %v730
      %v1219 = vpop.xlane.xlu0 %1218
      %1220 = vmax.xlane.f32.xlu0 %v735
      %v1221 = vpop.xlane.xlu0 %1220
      %1222 = vmax.xlane.f32.xlu0 %v738
      %v1223 = vpop.xlane.xlu0 %1222
      %1224 = vmax.xlane.f32.xlu0 %v743
      %v1225 = vpop.xlane.xlu0 %1224
      %1226 = vmax.xlane.f32.xlu0 %v746
      %v1227 = vpop.xlane.xlu0 %1226
      %1228 = vmax.xlane.f32.xlu0 %v751
      %v1229 = vpop.xlane.xlu0 %1228
      %1230 = vmax.xlane.f32.xlu0 %v754
      %v1231 = vpop.xlane.xlu0 %1230
      %1232 = vmax.xlane.f32.xlu0 %v759
      %v1233 = vpop.xlane.xlu0 %1232
      %1234 = vmax.xlane.f32.xlu0 %v762
      %v1235 = vpop.xlane.xlu0 %1234
      %1236 = vmax.xlane.f32.xlu0 %v767
      %v1237 = vpop.xlane.xlu0 %1236
      %1238 = vmax.xlane.f32.xlu0 %v770
      %v1239 = vpop.xlane.xlu0 %1238
      %1240 = vmax.xlane.f32.xlu0 %v856
      %v1241 = vpop.xlane.xlu0 %1240
      %1242 = vmax.xlane.f32.xlu0 %v859
      %v1243 = vpop.xlane.xlu0 %1242
      %1244 = vmax.xlane.f32.xlu0 %v864
      %v1245 = vpop.xlane.xlu0 %1244
      %1246 = vmax.xlane.f32.xlu0 %v867
      %v1247 = vpop.xlane.xlu0 %1246
      %1248 = vmax.xlane.f32.xlu0 %v872
      %v1249 = vpop.xlane.xlu0 %1248
      %1250 = vmax.xlane.f32.xlu0 %v875
      %v1251 = vpop.xlane.xlu0 %1250
      %1252 = vmax.xlane.f32.xlu0 %v880
      %v1253 = vpop.xlane.xlu0 %1252
      %1254 = vmax.xlane.f32.xlu0 %v883
      %v1255 = vpop.xlane.xlu0 %1254
      %1256 = vmax.xlane.f32.xlu0 %v888
      %v1257 = vpop.xlane.xlu0 %1256
      %1258 = vmax.xlane.f32.xlu0 %v891
      %v1259 = vpop.xlane.xlu0 %1258
      %1260 = vmax.xlane.f32.xlu0 %v896
      %v1261 = vpop.xlane.xlu0 %1260
      %1262 = vmax.xlane.f32.xlu0 %v899
      %v1263 = vpop.xlane.xlu0 %1262
      %1264 = vmax.xlane.f32.xlu0 %v904
      %v1265 = vpop.xlane.xlu0 %1264
      %1266 = vmax.xlane.f32.xlu0 %v907
      %v1267 = vpop.xlane.xlu0 %1266
      %1268 = vmax.xlane.f32.xlu0 %v912
      %v1269 = vpop.xlane.xlu0 %1268
      %1270 = vmax.xlane.f32.xlu0 %v915
      %v1271 = vpop.xlane.xlu0 %1270
      %1272 = vmax.xlane.f32.xlu0 %v1001
      %v1273 = vpop.xlane.xlu0 %1272
      %1274 = vmax.xlane.f32.xlu0 %v1004
      %v1275 = vpop.xlane.xlu0 %1274
      %1276 = vmax.xlane.f32.xlu0 %v1009
      %v1277 = vpop.xlane.xlu0 %1276
      %1278 = vmax.xlane.f32.xlu0 %v1012
      %v1279 = vpop.xlane.xlu0 %1278
      %1280 = vmax.xlane.f32.xlu0 %v1017
      %v1281 = vpop.xlane.xlu0 %1280
      %1282 = vmax.xlane.f32.xlu0 %v1020
      %v1283 = vpop.xlane.xlu0 %1282
      %1284 = vmax.xlane.f32.xlu0 %v1025
      %v1285 = vpop.xlane.xlu0 %1284
      %1286 = vmax.xlane.f32.xlu0 %v1028
      %v1287 = vpop.xlane.xlu0 %1286
      %1288 = vmax.xlane.f32.xlu0 %v1033
      %v1289 = vpop.xlane.xlu0 %1288
      %1290 = vmax.xlane.f32.xlu0 %v1036
      %v1291 = vpop.xlane.xlu0 %1290
      %1292 = vmax.xlane.f32.xlu0 %v1041
      %v1293 = vpop.xlane.xlu0 %1292
      %1294 = vmax.xlane.f32.xlu0 %v1044
      %v1295 = vpop.xlane.xlu0 %1294
      %1296 = vmax.xlane.f32.xlu0 %v1049
      %v1297 = vpop.xlane.xlu0 %1296
      %1298 = vmax.xlane.f32.xlu0 %v1052
      %v1299 = vpop.xlane.xlu0 %1298
      %1300 = vmax.xlane.f32.xlu0 %v1057
      %v1301 = vpop.xlane.xlu0 %1300
      %1302 = vmax.xlane.f32.xlu0 %v1060
      %v1303 = vpop.xlane.xlu0 %1302
      %1304 = vmax.xlane.f32.xlu0 %v1146
      %v1305 = vpop.xlane.xlu0 %1304
      %1306 = vmax.xlane.f32.xlu0 %v1149
      %v1307 = vpop.xlane.xlu0 %1306
      %1308 = vmax.xlane.f32.xlu0 %v1154
      %v1309 = vpop.xlane.xlu0 %1308
      %1310 = vmax.xlane.f32.xlu0 %v1157
      %v1311 = vpop.xlane.xlu0 %1310
      %1312 = vmax.xlane.f32.xlu0 %v1162
      %v1313 = vpop.xlane.xlu0 %1312
      %1314 = vmax.xlane.f32.xlu0 %v1165
      %v1315 = vpop.xlane.xlu0 %1314
      %1316 = vmax.xlane.f32.xlu0 %v1170
      %v1317 = vpop.xlane.xlu0 %1316
      %1318 = vmax.xlane.f32.xlu0 %v1173
      %v1319 = vpop.xlane.xlu0 %1318
      %1320 = vmax.xlane.f32.xlu0 %v1178
      %v1321 = vpop.xlane.xlu0 %1320
      %1322 = vmax.xlane.f32.xlu0 %v1181
      %v1323 = vpop.xlane.xlu0 %1322
      %1324 = vmax.xlane.f32.xlu0 %v1186
      %v1325 = vpop.xlane.xlu0 %1324
      %1326 = vmax.xlane.f32.xlu0 %v1189
      %v1327 = vpop.xlane.xlu0 %1326
      %1328 = vmax.xlane.f32.xlu0 %v1194
      %v1329 = vpop.xlane.xlu0 %1328
      %1330 = vmax.xlane.f32.xlu0 %v1197
      %v1331 = vpop.xlane.xlu0 %1330
      %1332 = vmax.xlane.f32.xlu0 %v1202
      %v1333 = vpop.xlane.xlu0 %1332
      %1334 = vmax.xlane.f32.xlu0 %v1205
      %v1335 = vpop.xlane.xlu0 %1334
      %v1336 = vsub.f32 %v711, %v1209
      %v1337 = vsub.f32 %v714, %v1211
      %v1338 = vsub.f32 %v719, %v1213
      %v1339 = vsub.f32 %v722, %v1215
      %v1340 = vsub.f32 %v727, %v1217
      %v1341 = vsub.f32 %v730, %v1219
      %v1342 = vsub.f32 %v735, %v1221
      %v1343 = vsub.f32 %v738, %v1223
      %v1344 = vsub.f32 %v743, %v1225
      %v1345 = vsub.f32 %v746, %v1227
      %v1346 = vsub.f32 %v751, %v1229
      %v1347 = vsub.f32 %v754, %v1231
      %v1348 = vsub.f32 %v759, %v1233
      %v1349 = vsub.f32 %v762, %v1235
      %v1350 = vsub.f32 %v767, %v1237
      %v1351 = vsub.f32 %v770, %v1239
      %v1352 = vsub.f32 %v856, %v1241
      %v1353 = vsub.f32 %v859, %v1243
      %v1354 = vsub.f32 %v864, %v1245
      %v1355 = vsub.f32 %v867, %v1247
      %v1356 = vsub.f32 %v872, %v1249
      %v1357 = vsub.f32 %v875, %v1251
      %v1358 = vsub.f32 %v880, %v1253
      %v1359 = vsub.f32 %v883, %v1255
      %v1360 = vsub.f32 %v888, %v1257
      %v1361 = vsub.f32 %v891, %v1259
      %v1362 = vsub.f32 %v896, %v1261
      %v1363 = vsub.f32 %v899, %v1263
      %v1364 = vsub.f32 %v904, %v1265
      %v1365 = vsub.f32 %v907, %v1267
      %v1366 = vsub.f32 %v912, %v1269
      %v1367 = vsub.f32 %v915, %v1271
      %v1368 = vsub.f32 %v1001, %v1273
      %v1369 = vsub.f32 %v1004, %v1275
      %v1370 = vsub.f32 %v1009, %v1277
      %v1371 = vsub.f32 %v1012, %v1279
      %v1372 = vsub.f32 %v1017, %v1281
      %v1373 = vsub.f32 %v1020, %v1283
      %v1374 = vsub.f32 %v1025, %v1285
      %v1375 = vsub.f32 %v1028, %v1287
      %v1376 = vsub.f32 %v1033, %v1289
      %v1377 = vsub.f32 %v1036, %v1291
      %v1378 = vsub.f32 %v1041, %v1293
      %v1379 = vsub.f32 %v1044, %v1295
      %v1380 = vsub.f32 %v1049, %v1297
      %v1381 = vsub.f32 %v1052, %v1299
      %v1382 = vsub.f32 %v1057, %v1301
      %v1383 = vsub.f32 %v1060, %v1303
      %v1384 = vsub.f32 %v1146, %v1305
      %v1385 = vsub.f32 %v1149, %v1307
      %v1386 = vsub.f32 %v1154, %v1309
      %v1387 = vsub.f32 %v1157, %v1311
      %v1388 = vsub.f32 %v1162, %v1313
      %v1389 = vsub.f32 %v1165, %v1315
      %v1390 = vsub.f32 %v1170, %v1317
      %v1391 = vsub.f32 %v1173, %v1319
      %v1392 = vsub.f32 %v1178, %v1321
      %v1393 = vsub.f32 %v1181, %v1323
      %v1394 = vsub.f32 %v1186, %v1325
      %v1395 = vsub.f32 %v1189, %v1327
      %v1396 = vsub.f32 %v1194, %v1329
      %v1397 = vsub.f32 %v1197, %v1331
      %v1398 = vsub.f32 %v1202, %v1333
      %v1399 = vsub.f32 %v1205, %v1335
      %v1400 = vmul.f32 %v1336, 1.442695
      %v1401 = vpow.pop %v1400
      %v1402 = vmul.f32 %v1337, 1.442695
      %v1403 = vpow.pop %v1402
      %v1404 = vmul.f32 %v1338, 1.442695
      %v1405 = vpow.pop %v1404
      %v1406 = vmul.f32 %v1339, 1.442695
      %v1407 = vpow.pop %v1406
      %v1408 = vmul.f32 %v1340, 1.442695
      %v1409 = vpow.pop %v1408
      %v1410 = vmul.f32 %v1341, 1.442695
      %v1411 = vpow.pop %v1410
      %v1412 = vmul.f32 %v1342, 1.442695
      %v1413 = vpow.pop %v1412
      %v1414 = vmul.f32 %v1343, 1.442695
      %v1415 = vpow.pop %v1414
      %v1416 = vmul.f32 %v1344, 1.442695
      %v1417 = vpow.pop %v1416
      %v1418 = vmul.f32 %v1345, 1.442695
      %v1419 = vpow.pop %v1418
      %v1420 = vmul.f32 %v1346, 1.442695
      %v1421 = vpow.pop %v1420
      %v1422 = vmul.f32 %v1347, 1.442695
      %v1423 = vpow.pop %v1422
      %v1424 = vmul.f32 %v1348, 1.442695
      %v1425 = vpow.pop %v1424
      %v1426 = vmul.f32 %v1349, 1.442695
      %v1427 = vpow.pop %v1426
      %v1428 = vmul.f32 %v1350, 1.442695
      %v1429 = vpow.pop %v1428
      %v1430 = vmul.f32 %v1351, 1.442695
      %v1431 = vpow.pop %v1430
      %v1432 = vmul.f32 %v1352, 1.442695
      %v1433 = vpow.pop %v1432
      %v1434 = vmul.f32 %v1353, 1.442695
      %v1435 = vpow.pop %v1434
      %v1436 = vmul.f32 %v1354, 1.442695
      %v1437 = vpow.pop %v1436
      %v1438 = vmul.f32 %v1355, 1.442695
      %v1439 = vpow.pop %v1438
      %v1440 = vmul.f32 %v1356, 1.442695
      %v1441 = vpow.pop %v1440
      %v1442 = vmul.f32 %v1357, 1.442695
      %v1443 = vpow.pop %v1442
      %v1444 = vmul.f32 %v1358, 1.442695
      %v1445 = vpow.pop %v1444
      %v1446 = vmul.f32 %v1359, 1.442695
      %v1447 = vpow.pop %v1446
      %v1448 = vmul.f32 %v1360, 1.442695
      %v1449 = vpow.pop %v1448
      %v1450 = vmul.f32 %v1361, 1.442695
      %v1451 = vpow.pop %v1450
      %v1452 = vmul.f32 %v1362, 1.442695
      %v1453 = vpow.pop %v1452
      %v1454 = vmul.f32 %v1363, 1.442695
      %v1455 = vpow.pop %v1454
      %v1456 = vmul.f32 %v1364, 1.442695
      %v1457 = vpow.pop %v1456
      %v1458 = vmul.f32 %v1365, 1.442695
      %v1459 = vpow.pop %v1458
      %v1460 = vmul.f32 %v1366, 1.442695
      %v1461 = vpow.pop %v1460
      %v1462 = vmul.f32 %v1367, 1.442695
      %v1463 = vpow.pop %v1462
      %v1464 = vmul.f32 %v1368, 1.442695
      %v1465 = vpow.pop %v1464
      %v1466 = vmul.f32 %v1369, 1.442695
      %v1467 = vpow.pop %v1466
      %v1468 = vmul.f32 %v1370, 1.442695
      %v1469 = vpow.pop %v1468
      %v1470 = vmul.f32 %v1371, 1.442695
      %v1471 = vpow.pop %v1470
      %v1472 = vmul.f32 %v1372, 1.442695
      %v1473 = vpow.pop %v1472
      %v1474 = vmul.f32 %v1373, 1.442695
      %v1475 = vpow.pop %v1474
      %v1476 = vmul.f32 %v1374, 1.442695
      %v1477 = vpow.pop %v1476
      %v1478 = vmul.f32 %v1375, 1.442695
      %v1479 = vpow.pop %v1478
      %v1480 = vmul.f32 %v1376, 1.442695
      %v1481 = vpow.pop %v1480
      %v1482 = vmul.f32 %v1377, 1.442695
      %v1483 = vpow.pop %v1482
      %v1484 = vmul.f32 %v1378, 1.442695
      %v1485 = vpow.pop %v1484
      %v1486 = vmul.f32 %v1379, 1.442695
      %v1487 = vpow.pop %v1486
      %v1488 = vmul.f32 %v1380, 1.442695
      %v1489 = vpow.pop %v1488
      %v1490 = vmul.f32 %v1381, 1.442695
      %v1491 = vpow.pop %v1490
      %v1492 = vmul.f32 %v1382, 1.442695
      %v1493 = vpow.pop %v1492
      %v1494 = vmul.f32 %v1383, 1.442695
      %v1495 = vpow.pop %v1494
      %v1496 = vmul.f32 %v1384, 1.442695
      %v1497 = vpow.pop %v1496
      %v1498 = vmul.f32 %v1385, 1.442695
      %v1499 = vpow.pop %v1498
      %v1500 = vmul.f32 %v1386, 1.442695
      %v1501 = vpow.pop %v1500
      %v1502 = vmul.f32 %v1387, 1.442695
      %v1503 = vpow.pop %v1502
      %v1504 = vmul.f32 %v1388, 1.442695
      %v1505 = vpow.pop %v1504
      %v1506 = vmul.f32 %v1389, 1.442695
      %v1507 = vpow.pop %v1506
      %v1508 = vmul.f32 %v1390, 1.442695
      %v1509 = vpow.pop %v1508
      %v1510 = vmul.f32 %v1391, 1.442695
      %v1511 = vpow.pop %v1510
      %v1512 = vmul.f32 %v1392, 1.442695
      %v1513 = vpow.pop %v1512
      %v1514 = vmul.f32 %v1393, 1.442695
      %v1515 = vpow.pop %v1514
      %v1516 = vmul.f32 %v1394, 1.442695
      %v1517 = vpow.pop %v1516
      %v1518 = vmul.f32 %v1395, 1.442695
      %v1519 = vpow.pop %v1518
      %v1520 = vmul.f32 %v1396, 1.442695
      %v1521 = vpow.pop %v1520
      %v1522 = vmul.f32 %v1397, 1.442695
      %v1523 = vpow.pop %v1522
      %v1524 = vmul.f32 %v1398, 1.442695
      %v1525 = vpow.pop %v1524
      %v1526 = vmul.f32 %v1399, 1.442695
      %v1527 = vpow.pop %v1526
      %1528 = vadd.xlane.f32.xlu0 %v1401
      %v1529 = vpop.xlane.xlu0 %1528
      %1530 = vadd.xlane.f32.xlu0 %v1403
      %v1531 = vpop.xlane.xlu0 %1530
      %1532 = vadd.xlane.f32.xlu0 %v1405
      %v1533 = vpop.xlane.xlu0 %1532
      %1534 = vadd.xlane.f32.xlu0 %v1407
      %v1535 = vpop.xlane.xlu0 %1534
      %1536 = vadd.xlane.f32.xlu0 %v1409
      %v1537 = vpop.xlane.xlu0 %1536
      %1538 = vadd.xlane.f32.xlu0 %v1411
      %v1539 = vpop.xlane.xlu0 %1538
      %1540 = vadd.xlane.f32.xlu0 %v1413
      %v1541 = vpop.xlane.xlu0 %1540
      %1542 = vadd.xlane.f32.xlu0 %v1415
      %v1543 = vpop.xlane.xlu0 %1542
      %1544 = vadd.xlane.f32.xlu0 %v1417
      %v1545 = vpop.xlane.xlu0 %1544
      %1546 = vadd.xlane.f32.xlu0 %v1419
      %v1547 = vpop.xlane.xlu0 %1546
      %1548 = vadd.xlane.f32.xlu0 %v1421
      %v1549 = vpop.xlane.xlu0 %1548
      %1550 = vadd.xlane.f32.xlu0 %v1423
      %v1551 = vpop.xlane.xlu0 %1550
      %1552 = vadd.xlane.f32.xlu0 %v1425
      %v1553 = vpop.xlane.xlu0 %1552
      %1554 = vadd.xlane.f32.xlu0 %v1427
      %v1555 = vpop.xlane.xlu0 %1554
      %1556 = vadd.xlane.f32.xlu0 %v1429
      %v1557 = vpop.xlane.xlu0 %1556
      %1558 = vadd.xlane.f32.xlu0 %v1431
      %v1559 = vpop.xlane.xlu0 %1558
      %1560 = vadd.xlane.f32.xlu0 %v1433
      %v1561 = vpop.xlane.xlu0 %1560
      %1562 = vadd.xlane.f32.xlu0 %v1435
      %v1563 = vpop.xlane.xlu0 %1562
      %1564 = vadd.xlane.f32.xlu0 %v1437
      %v1565 = vpop.xlane.xlu0 %1564
      %1566 = vadd.xlane.f32.xlu0 %v1439
      %v1567 = vpop.xlane.xlu0 %1566
      %1568 = vadd.xlane.f32.xlu0 %v1441
      %v1569 = vpop.xlane.xlu0 %1568
      %1570 = vadd.xlane.f32.xlu0 %v1443
      %v1571 = vpop.xlane.xlu0 %1570
      %1572 = vadd.xlane.f32.xlu0 %v1445
      %v1573 = vpop.xlane.xlu0 %1572
      %1574 = vadd.xlane.f32.xlu0 %v1447
      %v1575 = vpop.xlane.xlu0 %1574
      %1576 = vadd.xlane.f32.xlu0 %v1449
      %v1577 = vpop.xlane.xlu0 %1576
      %1578 = vadd.xlane.f32.xlu0 %v1451
      %v1579 = vpop.xlane.xlu0 %1578
      %1580 = vadd.xlane.f32.xlu0 %v1453
      %v1581 = vpop.xlane.xlu0 %1580
      %1582 = vadd.xlane.f32.xlu0 %v1455
      %v1583 = vpop.xlane.xlu0 %1582
      %1584 = vadd.xlane.f32.xlu0 %v1457
      %v1585 = vpop.xlane.xlu0 %1584
      %1586 = vadd.xlane.f32.xlu0 %v1459
      %v1587 = vpop.xlane.xlu0 %1586
      %1588 = vadd.xlane.f32.xlu0 %v1461
      %v1589 = vpop.xlane.xlu0 %1588
      %1590 = vadd.xlane.f32.xlu0 %v1463
      %v1591 = vpop.xlane.xlu0 %1590
      %1592 = vadd.xlane.f32.xlu0 %v1465
      %v1593 = vpop.xlane.xlu0 %1592
      %1594 = vadd.xlane.f32.xlu0 %v1467
      %v1595 = vpop.xlane.xlu0 %1594
      %1596 = vadd.xlane.f32.xlu0 %v1469
      %v1597 = vpop.xlane.xlu0 %1596
      %1598 = vadd.xlane.f32.xlu0 %v1471
      %v1599 = vpop.xlane.xlu0 %1598
      %1600 = vadd.xlane.f32.xlu0 %v1473
      %v1601 = vpop.xlane.xlu0 %1600
      %1602 = vadd.xlane.f32.xlu0 %v1475
      %v1603 = vpop.xlane.xlu0 %1602
      %1604 = vadd.xlane.f32.xlu0 %v1477
      %v1605 = vpop.xlane.xlu0 %1604
      %1606 = vadd.xlane.f32.xlu0 %v1479
      %v1607 = vpop.xlane.xlu0 %1606
      %1608 = vadd.xlane.f32.xlu0 %v1481
      %v1609 = vpop.xlane.xlu0 %1608
      %1610 = vadd.xlane.f32.xlu0 %v1483
      %v1611 = vpop.xlane.xlu0 %1610
      %1612 = vadd.xlane.f32.xlu0 %v1485
      %v1613 = vpop.xlane.xlu0 %1612
      %1614 = vadd.xlane.f32.xlu0 %v1487
      %v1615 = vpop.xlane.xlu0 %1614
      %1616 = vadd.xlane.f32.xlu0 %v1489
      %v1617 = vpop.xlane.xlu0 %1616
      %1618 = vadd.xlane.f32.xlu0 %v1491
      %v1619 = vpop.xlane.xlu0 %1618
      %1620 = vadd.xlane.f32.xlu0 %v1493
      %v1621 = vpop.xlane.xlu0 %1620
      %1622 = vadd.xlane.f32.xlu0 %v1495
      %v1623 = vpop.xlane.xlu0 %1622
      %1624 = vadd.xlane.f32.xlu0 %v1497
      %v1625 = vpop.xlane.xlu0 %1624
      %1626 = vadd.xlane.f32.xlu0 %v1499
      %v1627 = vpop.xlane.xlu0 %1626
      %1628 = vadd.xlane.f32.xlu0 %v1501
      %v1629 = vpop.xlane.xlu0 %1628
      %1630 = vadd.xlane.f32.xlu0 %v1503
      %v1631 = vpop.xlane.xlu0 %1630
      %1632 = vadd.xlane.f32.xlu0 %v1505
      %v1633 = vpop.xlane.xlu0 %1632
      %1634 = vadd.xlane.f32.xlu0 %v1507
      %v1635 = vpop.xlane.xlu0 %1634
      %1636 = vadd.xlane.f32.xlu0 %v1509
      %v1637 = vpop.xlane.xlu0 %1636
      %1638 = vadd.xlane.f32.xlu0 %v1511
      %v1639 = vpop.xlane.xlu0 %1638
      %1640 = vadd.xlane.f32.xlu0 %v1513
      %v1641 = vpop.xlane.xlu0 %1640
      %1642 = vadd.xlane.f32.xlu0 %v1515
      %v1643 = vpop.xlane.xlu0 %1642
      %1644 = vadd.xlane.f32.xlu0 %v1517
      %v1645 = vpop.xlane.xlu0 %1644
      %1646 = vadd.xlane.f32.xlu0 %v1519
      %v1647 = vpop.xlane.xlu0 %1646
      %1648 = vadd.xlane.f32.xlu0 %v1521
      %v1649 = vpop.xlane.xlu0 %1648
      %1650 = vadd.xlane.f32.xlu0 %v1523
      %v1651 = vpop.xlane.xlu0 %1650
      %1652 = vadd.xlane.f32.xlu0 %v1525
      %v1653 = vpop.xlane.xlu0 %1652
      %1654 = vadd.xlane.f32.xlu0 %v1527
      %v1655 = vpop.xlane.xlu0 %1654
      %s1656 = sld [smem:[#allocation3]]
      %s1657 = smul.u32 %s17, 4
      %s1658 = sadd.s32 %s1656, %s1657
      %v1659 = vlaneseq
      %v1660 = vshrl.u32 %v1659, 7
      %v1661 = vadd.s32 %v1660, 8
      %v1662 = vadd.s32 %v1660, 16
      %v1663 = vadd.s32 %v1660, 24
      %v1664 = vadd.s32 %v1660, 32
      %v1665 = vadd.s32 %v1660, 40
      %v1666 = vadd.s32 %v1660, 48
      %v1667 = vadd.s32 %v1660, 56
      %v1668 = vadd.s32 %v1660, 64
      %v1669 = vadd.s32 %v1660, 72
      %v1670 = vadd.s32 %v1660, 80
      %v1671 = vadd.s32 %v1660, 88
      %v1672 = vadd.s32 %v1660, 96
      %v1673 = vadd.s32 %v1660, 104
      %v1674 = vadd.s32 %v1660, 112
      %v1675 = vadd.s32 %v1660, 120
      %v1676 = vlaneseq
      %v1677 = vand.u32 %v1676, 127
      %v1678 = vstv %s1658
      %v1679 = vadd.s32 %v1678, 2654435769
      %v1680 = vadd.s32 %v1678, 1013904242
      %v1681 = vadd.s32 %v1678, 3668340011
      %v1682 = vmul.u32 %v1660, 2246822507
      %v1683 = vmul.u32 %v1661, 2246822507
      %v1684 = vmul.u32 %v1662, 2246822507
      %v1685 = vmul.u32 %v1663, 2246822507
      %v1686 = vmul.u32 %v1664, 2246822507
      %v1687 = vmul.u32 %v1665, 2246822507
      %v1688 = vmul.u32 %v1666, 2246822507
      %v1689 = vmul.u32 %v1667, 2246822507
      %v1690 = vmul.u32 %v1668, 2246822507
      %v1691 = vmul.u32 %v1669, 2246822507
      %v1692 = vmul.u32 %v1670, 2246822507
      %v1693 = vmul.u32 %v1671, 2246822507
      %v1694 = vmul.u32 %v1672, 2246822507
      %v1695 = vmul.u32 %v1673, 2246822507
      %v1696 = vmul.u32 %v1674, 2246822507
      %v1697 = vmul.u32 %v1675, 2246822507
      %v1698 = vadd.s32 %v1678, %v1682
      %v1699 = vadd.s32 %v1678, %v1683
      %v1700 = vadd.s32 %v1678, %v1684
      %v1701 = vadd.s32 %v1678, %v1685
      %v1702 = vadd.s32 %v1678, %v1686
      %v1703 = vadd.s32 %v1678, %v1687
      %v1704 = vadd.s32 %v1678, %v1688
      %v1705 = vadd.s32 %v1678, %v1689
      %v1706 = vadd.s32 %v1678, %v1690
      %v1707 = vadd.s32 %v1678, %v1691
      %v1708 = vadd.s32 %v1678, %v1692
      %v1709 = vadd.s32 %v1678, %v1693
      %v1710 = vadd.s32 %v1678, %v1694
      %v1711 = vadd.s32 %v1678, %v1695
      %v1712 = vadd.s32 %v1678, %v1696
      %v1713 = vadd.s32 %v1678, %v1697
      %v1714 = vadd.s32 %v1679, %v1682
      %v1715 = vadd.s32 %v1679, %v1683
      %v1716 = vadd.s32 %v1679, %v1684
      %v1717 = vadd.s32 %v1679, %v1685
      %v1718 = vadd.s32 %v1679, %v1686
      %v1719 = vadd.s32 %v1679, %v1687
      %v1720 = vadd.s32 %v1679, %v1688
      %v1721 = vadd.s32 %v1679, %v1689
      %v1722 = vadd.s32 %v1679, %v1690
      %v1723 = vadd.s32 %v1679, %v1691
      %v1724 = vadd.s32 %v1679, %v1692
      %v1725 = vadd.s32 %v1679, %v1693
      %v1726 = vadd.s32 %v1679, %v1694
      %v1727 = vadd.s32 %v1679, %v1695
      %v1728 = vadd.s32 %v1679, %v1696
      %v1729 = vadd.s32 %v1679, %v1697
      %v1730 = vadd.s32 %v1680, %v1682
      %v1731 = vadd.s32 %v1680, %v1683
      %v1732 = vadd.s32 %v1680, %v1684
      %v1733 = vadd.s32 %v1680, %v1685
      %v1734 = vadd.s32 %v1680, %v1686
      %v1735 = vadd.s32 %v1680, %v1687
      %v1736 = vadd.s32 %v1680, %v1688
      %v1737 = vadd.s32 %v1680, %v1689
      %v1738 = vadd.s32 %v1680, %v1690
      %v1739 = vadd.s32 %v1680, %v1691
      %v1740 = vadd.s32 %v1680, %v1692
      %v1741 = vadd.s32 %v1680, %v1693
      %v1742 = vadd.s32 %v1680, %v1694
      %v1743 = vadd.s32 %v1680, %v1695
      %v1744 = vadd.s32 %v1680, %v1696
      %v1745 = vadd.s32 %v1680, %v1697
      %v1746 = vadd.s32 %v1681, %v1682
      %v1747 = vadd.s32 %v1681, %v1683
      %v1748 = vadd.s32 %v1681, %v1684
      %v1749 = vadd.s32 %v1681, %v1685
      %v1750 = vadd.s32 %v1681, %v1686
      %v1751 = vadd.s32 %v1681, %v1687
      %v1752 = vadd.s32 %v1681, %v1688
      %v1753 = vadd.s32 %v1681, %v1689
      %v1754 = vadd.s32 %v1681, %v1690
      %v1755 = vadd.s32 %v1681, %v1691
      %v1756 = vadd.s32 %v1681, %v1692
      %v1757 = vadd.s32 %v1681, %v1693
      %v1758 = vadd.s32 %v1681, %v1694
      %v1759 = vadd.s32 %v1681, %v1695
      %v1760 = vadd.s32 %v1681, %v1696
      %v1761 = vadd.s32 %v1681, %v1697
      %v1762 = vmul.u32 %v1677, 3266489909
      %v1763 = vadd.s32 %v1698, %v1762
      %v1764 = vadd.s32 %v1699, %v1762
      %v1765 = vadd.s32 %v1700, %v1762
      %v1766 = vadd.s32 %v1701, %v1762
      %v1767 = vadd.s32 %v1702, %v1762
      %v1768 = vadd.s32 %v1703, %v1762
      %v1769 = vadd.s32 %v1704, %v1762
      %v1770 = vadd.s32 %v1705, %v1762
      %v1771 = vadd.s32 %v1706, %v1762
      %v1772 = vadd.s32 %v1707, %v1762
      %v1773 = vadd.s32 %v1708, %v1762
      %v1774 = vadd.s32 %v1709, %v1762
      %v1775 = vadd.s32 %v1710, %v1762
      %v1776 = vadd.s32 %v1711, %v1762
      %v1777 = vadd.s32 %v1712, %v1762
      %v1778 = vadd.s32 %v1713, %v1762
      %v1779 = vadd.s32 %v1714, %v1762
      %v1780 = vadd.s32 %v1715, %v1762
      %v1781 = vadd.s32 %v1716, %v1762
      %v1782 = vadd.s32 %v1717, %v1762
      %v1783 = vadd.s32 %v1718, %v1762
      %v1784 = vadd.s32 %v1719, %v1762
      %v1785 = vadd.s32 %v1720, %v1762
      %v1786 = vadd.s32 %v1721, %v1762
      %v1787 = vadd.s32 %v1722, %v1762
      %v1788 = vadd.s32 %v1723, %v1762
      %v1789 = vadd.s32 %v1724, %v1762
      %v1790 = vadd.s32 %v1725, %v1762
      %v1791 = vadd.s32 %v1726, %v1762
      %v1792 = vadd.s32 %v1727, %v1762
      %v1793 = vadd.s32 %v1728, %v1762
      %v1794 = vadd.s32 %v1729, %v1762
      %v1795 = vadd.s32 %v1730, %v1762
      %v1796 = vadd.s32 %v1731, %v1762
      %v1797 = vadd.s32 %v1732, %v1762
      %v1798 = vadd.s32 %v1733, %v1762
      %v1799 = vadd.s32 %v1734, %v1762
      %v1800 = vadd.s32 %v1735, %v1762
      %v1801 = vadd.s32 %v1736, %v1762
      %v1802 = vadd.s32 %v1737, %v1762
      %v1803 = vadd.s32 %v1738, %v1762
      %v1804 = vadd.s32 %v1739, %v1762
      %v1805 = vadd.s32 %v1740, %v1762
      %v1806 = vadd.s32 %v1741, %v1762
      %v1807 = vadd.s32 %v1742, %v1762
      %v1808 = vadd.s32 %v1743, %v1762
      %v1809 = vadd.s32 %v1744, %v1762
      %v1810 = vadd.s32 %v1745, %v1762
      %v1811 = vadd.s32 %v1746, %v1762
      %v1812 = vadd.s32 %v1747, %v1762
      %v1813 = vadd.s32 %v1748, %v1762
      %v1814 = vadd.s32 %v1749, %v1762
      %v1815 = vadd.s32 %v1750, %v1762
      %v1816 = vadd.s32 %v1751, %v1762
      %v1817 = vadd.s32 %v1752, %v1762
      %v1818 = vadd.s32 %v1753, %v1762
      %v1819 = vadd.s32 %v1754, %v1762
      %v1820 = vadd.s32 %v1755, %v1762
      %v1821 = vadd.s32 %v1756, %v1762
      %v1822 = vadd.s32 %v1757, %v1762
      %v1823 = vadd.s32 %v1758, %v1762
      %v1824 = vadd.s32 %v1759, %v1762
      %v1825 = vadd.s32 %v1760, %v1762
      %v1826 = vadd.s32 %v1761, %v1762
      %v1827 = vshrl.u32 %v1763, 16
      %v1828 = vshrl.u32 %v1764, 16
      %v1829 = vshrl.u32 %v1765, 16
      %v1830 = vshrl.u32 %v1766, 16
      %v1831 = vshrl.u32 %v1767, 16
      %v1832 = vshrl.u32 %v1768, 16
      %v1833 = vshrl.u32 %v1769, 16
      %v1834 = vshrl.u32 %v1770, 16
      %v1835 = vshrl.u32 %v1771, 16
      %v1836 = vshrl.u32 %v1772, 16
      %v1837 = vshrl.u32 %v1773, 16
      %v1838 = vshrl.u32 %v1774, 16
      %v1839 = vshrl.u32 %v1775, 16
      %v1840 = vshrl.u32 %v1776, 16
      %v1841 = vshrl.u32 %v1777, 16
      %v1842 = vshrl.u32 %v1778, 16
      %v1843 = vshrl.u32 %v1779, 16
      %v1844 = vshrl.u32 %v1780, 16
      %v1845 = vshrl.u32 %v1781, 16
      %v1846 = vshrl.u32 %v1782, 16
      %v1847 = vshrl.u32 %v1783, 16
      %v1848 = vshrl.u32 %v1784, 16
      %v1849 = vshrl.u32 %v1785, 16
      %v1850 = vshrl.u32 %v1786, 16
      %v1851 = vshrl.u32 %v1787, 16
      %v1852 = vshrl.u32 %v1788, 16
      %v1853 = vshrl.u32 %v1789, 16
      %v1854 = vshrl.u32 %v1790, 16
      %v1855 = vshrl.u32 %v1791, 16
      %v1856 = vshrl.u32 %v1792, 16
      %v1857 = vshrl.u32 %v1793, 16
      %v1858 = vshrl.u32 %v1794, 16
      %v1859 = vshrl.u32 %v1795, 16
      %v1860 = vshrl.u32 %v1796, 16
      %v1861 = vshrl.u32 %v1797, 16
      %v1862 = vshrl.u32 %v1798, 16
      %v1863 = vshrl.u32 %v1799, 16
      %v1864 = vshrl.u32 %v1800, 16
      %v1865 = vshrl.u32 %v1801, 16
      %v1866 = vshrl.u32 %v1802, 16
      %v1867 = vshrl.u32 %v1803, 16
      %v1868 = vshrl.u32 %v1804, 16
      %v1869 = vshrl.u32 %v1805, 16
      %v1870 = vshrl.u32 %v1806, 16
      %v1871 = vshrl.u32 %v1807, 16
      %v1872 = vshrl.u32 %v1808, 16
      %v1873 = vshrl.u32 %v1809, 16
      %v1874 = vshrl.u32 %v1810, 16
      %v1875 = vshrl.u32 %v1811, 16
      %v1876 = vshrl.u32 %v1812, 16
      %v1877 = vshrl.u32 %v1813, 16
      %v1878 = vshrl.u32 %v1814, 16
      %v1879 = vshrl.u32 %v1815, 16
      %v1880 = vshrl.u32 %v1816, 16
      %v1881 = vshrl.u32 %v1817, 16
      %v1882 = vshrl.u32 %v1818, 16
      %v1883 = vshrl.u32 %v1819, 16
      %v1884 = vshrl.u32 %v1820, 16
      %v1885 = vshrl.u32 %v1821, 16
      %v1886 = vshrl.u32 %v1822, 16
      %v1887 = vshrl.u32 %v1823, 16
      %v1888 = vshrl.u32 %v1824, 16
      %v1889 = vshrl.u32 %v1825, 16
      %v1890 = vshrl.u32 %v1826, 16
      %v1891 = vxor.u32 %v1763, %v1827
      %v1892 = vxor.u32 %v1764, %v1828
      %v1893 = vxor.u32 %v1765, %v1829
      %v1894 = vxor.u32 %v1766, %v1830
      %v1895 = vxor.u32 %v1767, %v1831
      %v1896 = vxor.u32 %v1768, %v1832
      %v1897 = vxor.u32 %v1769, %v1833
      %v1898 = vxor.u32 %v1770, %v1834
      %v1899 = vxor.u32 %v1771, %v1835
      %v1900 = vxor.u32 %v1772, %v1836
      %v1901 = vxor.u32 %v1773, %v1837
      %v1902 = vxor.u32 %v1774, %v1838
      %v1903 = vxor.u32 %v1775, %v1839
      %v1904 = vxor.u32 %v1776, %v1840
      %v1905 = vxor.u32 %v1777, %v1841
      %v1906 = vxor.u32 %v1778, %v1842
      %v1907 = vxor.u32 %v1779, %v1843
      %v1908 = vxor.u32 %v1780, %v1844
      %v1909 = vxor.u32 %v1781, %v1845
      %v1910 = vxor.u32 %v1782, %v1846
      %v1911 = vxor.u32 %v1783, %v1847
      %v1912 = vxor.u32 %v1784, %v1848
      %v1913 = vxor.u32 %v1785, %v1849
      %v1914 = vxor.u32 %v1786, %v1850
      %v1915 = vxor.u32 %v1787, %v1851
      %v1916 = vxor.u32 %v1788, %v1852
      %v1917 = vxor.u32 %v1789, %v1853
      %v1918 = vxor.u32 %v1790, %v1854
      %v1919 = vxor.u32 %v1791, %v1855
      %v1920 = vxor.u32 %v1792, %v1856
      %v1921 = vxor.u32 %v1793, %v1857
      %v1922 = vxor.u32 %v1794, %v1858
      %v1923 = vxor.u32 %v1795, %v1859
      %v1924 = vxor.u32 %v1796, %v1860
      %v1925 = vxor.u32 %v1797, %v1861
      %v1926 = vxor.u32 %v1798, %v1862
      %v1927 = vxor.u32 %v1799, %v1863
      %v1928 = vxor.u32 %v1800, %v1864
      %v1929 = vxor.u32 %v1801, %v1865
      %v1930 = vxor.u32 %v1802, %v1866
      %v1931 = vxor.u32 %v1803, %v1867
      %v1932 = vxor.u32 %v1804, %v1868
      %v1933 = vxor.u32 %v1805, %v1869
      %v1934 = vxor.u32 %v1806, %v1870
      %v1935 = vxor.u32 %v1807, %v1871
      %v1936 = vxor.u32 %v1808, %v1872
      %v1937 = vxor.u32 %v1809, %v1873
      %v1938 = vxor.u32 %v1810, %v1874
      %v1939 = vxor.u32 %v1811, %v1875
      %v1940 = vxor.u32 %v1812, %v1876
      %v1941 = vxor.u32 %v1813, %v1877
      %v1942 = vxor.u32 %v1814, %v1878
      %v1943 = vxor.u32 %v1815, %v1879
      %v1944 = vxor.u32 %v1816, %v1880
      %v1945 = vxor.u32 %v1817, %v1881
      %v1946 = vxor.u32 %v1818, %v1882
      %v1947 = vxor.u32 %v1819, %v1883
      %v1948 = vxor.u32 %v1820, %v1884
      %v1949 = vxor.u32 %v1821, %v1885
      %v1950 = vxor.u32 %v1822, %v1886
      %v1951 = vxor.u32 %v1823, %v1887
      %v1952 = vxor.u32 %v1824, %v1888
      %v1953 = vxor.u32 %v1825, %v1889
      %v1954 = vxor.u32 %v1826, %v1890
      %v1955 = vmul.u32 %v1891, 2146121005
      %v1956 = vmul.u32 %v1892, 2146121005
      %v1957 = vmul.u32 %v1893, 2146121005
      %v1958 = vmul.u32 %v1894, 2146121005
      %v1959 = vmul.u32 %v1895, 2146121005
      %v1960 = vmul.u32 %v1896, 2146121005
      %v1961 = vmul.u32 %v1897, 2146121005
      %v1962 = vmul.u32 %v1898, 2146121005
      %v1963 = vmul.u32 %v1899, 2146121005
      %v1964 = vmul.u32 %v1900, 2146121005
      %v1965 = vmul.u32 %v1901, 2146121005
      %v1966 = vmul.u32 %v1902, 2146121005
      %v1967 = vmul.u32 %v1903, 2146121005
      %v1968 = vmul.u32 %v1904, 2146121005
      %v1969 = vmul.u32 %v1905, 2146121005
      %v1970 = vmul.u32 %v1906, 2146121005
      %v1971 = vmul.u32 %v1907, 2146121005
      %v1972 = vmul.u32 %v1908, 2146121005
      %v1973 = vmul.u32 %v1909, 2146121005
      %v1974 = vmul.u32 %v1910, 2146121005
      %v1975 = vmul.u32 %v1911, 2146121005
      %v1976 = vmul.u32 %v1912, 2146121005
      %v1977 = vmul.u32 %v1913, 2146121005
      %v1978 = vmul.u32 %v1914, 2146121005
      %v1979 = vmul.u32 %v1915, 2146121005
      %v1980 = vmul.u32 %v1916, 2146121005
      %v1981 = vmul.u32 %v1917, 2146121005
      %v1982 = vmul.u32 %v1918, 2146121005
      %v1983 = vmul.u32 %v1919, 2146121005
      %v1984 = vmul.u32 %v1920, 2146121005
      %v1985 = vmul.u32 %v1921, 2146121005
      %v1986 = vmul.u32 %v1922, 2146121005
      %v1987 = vmul.u32 %v1923, 2146121005
      %v1988 = vmul.u32 %v1924, 2146121005
      %v1989 = vmul.u32 %v1925, 2146121005
      %v1990 = vmul.u32 %v1926, 2146121005
      %v1991 = vmul.u32 %v1927, 2146121005
      %v1992 = vmul.u32 %v1928, 2146121005
      %v1993 = vmul.u32 %v1929, 2146121005
      %v1994 = vmul.u32 %v1930, 2146121005
      %v1995 = vmul.u32 %v1931, 2146121005
      %v1996 = vmul.u32 %v1932, 2146121005
      %v1997 = vmul.u32 %v1933, 2146121005
      %v1998 = vmul.u32 %v1934, 2146121005
      %v1999 = vmul.u32 %v1935, 2146121005
      %v2000 = vmul.u32 %v1936, 2146121005
      %v2001 = vmul.u32 %v1937, 2146121005
      %v2002 = vmul.u32 %v1938, 2146121005
      %v2003 = vmul.u32 %v1939, 2146121005
      %v2004 = vmul.u32 %v1940, 2146121005
      %v2005 = vmul.u32 %v1941, 2146121005
      %v2006 = vmul.u32 %v1942, 2146121005
      %v2007 = vmul.u32 %v1943, 2146121005
      %v2008 = vmul.u32 %v1944, 2146121005
      %v2009 = vmul.u32 %v1945, 2146121005
      %v2010 = vmul.u32 %v1946, 2146121005
      %v2011 = vmul.u32 %v1947, 2146121005
      %v2012 = vmul.u32 %v1948, 2146121005
      %v2013 = vmul.u32 %v1949, 2146121005
      %v2014 = vmul.u32 %v1950, 2146121005
      %v2015 = vmul.u32 %v1951, 2146121005
      %v2016 = vmul.u32 %v1952, 2146121005
      %v2017 = vmul.u32 %v1953, 2146121005
      %v2018 = vmul.u32 %v1954, 2146121005
      %v2019 = vshrl.u32 %v1955, 15
      %v2020 = vshrl.u32 %v1956, 15
      %v2021 = vshrl.u32 %v1957, 15
      %v2022 = vshrl.u32 %v1958, 15
      %v2023 = vshrl.u32 %v1959, 15
      %v2024 = vshrl.u32 %v1960, 15
      %v2025 = vshrl.u32 %v1961, 15
      %v2026 = vshrl.u32 %v1962, 15
      %v2027 = vshrl.u32 %v1963, 15
      %v2028 = vshrl.u32 %v1964, 15
      %v2029 = vshrl.u32 %v1965, 15
      %v2030 = vshrl.u32 %v1966, 15
      %v2031 = vshrl.u32 %v1967, 15
      %v2032 = vshrl.u32 %v1968, 15
      %v2033 = vshrl.u32 %v1969, 15
      %v2034 = vshrl.u32 %v1970, 15
      %v2035 = vshrl.u32 %v1971, 15
      %v2036 = vshrl.u32 %v1972, 15
      %v2037 = vshrl.u32 %v1973, 15
      %v2038 = vshrl.u32 %v1974, 15
      %v2039 = vshrl.u32 %v1975, 15
      %v2040 = vshrl.u32 %v1976, 15
      %v2041 = vshrl.u32 %v1977, 15
      %v2042 = vshrl.u32 %v1978, 15
      %v2043 = vshrl.u32 %v1979, 15
      %v2044 = vshrl.u32 %v1980, 15
      %v2045 = vshrl.u32 %v1981, 15
      %v2046 = vshrl.u32 %v1982, 15
      %v2047 = vshrl.u32 %v1983, 15
      %v2048 = vshrl.u32 %v1984, 15
      %v2049 = vshrl.u32 %v1985, 15
      %v2050 = vshrl.u32 %v1986, 15
      %v2051 = vshrl.u32 %v1987, 15
      %v2052 = vshrl.u32 %v1988, 15
      %v2053 = vshrl.u32 %v1989, 15
      %v2054 = vshrl.u32 %v1990, 15
      %v2055 = vshrl.u32 %v1991, 15
      %v2056 = vshrl.u32 %v1992, 15
      %v2057 = vshrl.u32 %v1993, 15
      %v2058 = vshrl.u32 %v1994, 15
      %v2059 = vshrl.u32 %v1995, 15
      %v2060 = vshrl.u32 %v1996, 15
      %v2061 = vshrl.u32 %v1997, 15
      %v2062 = vshrl.u32 %v1998, 15
      %v2063 = vshrl.u32 %v1999, 15
      %v2064 = vshrl.u32 %v2000, 15
      %v2065 = vshrl.u32 %v2001, 15
      %v2066 = vshrl.u32 %v2002, 15
      %v2067 = vshrl.u32 %v2003, 15
      %v2068 = vshrl.u32 %v2004, 15
      %v2069 = vshrl.u32 %v2005, 15
      %v2070 = vshrl.u32 %v2006, 15
      %v2071 = vshrl.u32 %v2007, 15
      %v2072 = vshrl.u32 %v2008, 15
      %v2073 = vshrl.u32 %v2009, 15
      %v2074 = vshrl.u32 %v2010, 15
      %v2075 = vshrl.u32 %v2011, 15
      %v2076 = vshrl.u32 %v2012, 15
      %v2077 = vshrl.u32 %v2013, 15
      %v2078 = vshrl.u32 %v2014, 15
      %v2079 = vshrl.u32 %v2015, 15
      %v2080 = vshrl.u32 %v2016, 15
      %v2081 = vshrl.u32 %v2017, 15
      %v2082 = vshrl.u32 %v2018, 15
      %v2083 = vxor.u32 %v1955, %v2019
      %v2084 = vxor.u32 %v1956, %v2020
      %v2085 = vxor.u32 %v1957, %v2021
      %v2086 = vxor.u32 %v1958, %v2022
      %v2087 = vxor.u32 %v1959, %v2023
      %v2088 = vxor.u32 %v1960, %v2024
      %v2089 = vxor.u32 %v1961, %v2025
      %v2090 = vxor.u32 %v1962, %v2026
      %v2091 = vxor.u32 %v1963, %v2027
      %v2092 = vxor.u32 %v1964, %v2028
      %v2093 = vxor.u32 %v1965, %v2029
      %v2094 = vxor.u32 %v1966, %v2030
      %v2095 = vxor.u32 %v1967, %v2031
      %v2096 = vxor.u32 %v1968, %v2032
      %v2097 = vxor.u32 %v1969, %v2033
      %v2098 = vxor.u32 %v1970, %v2034
      %v2099 = vxor.u32 %v1971, %v2035
      %v2100 = vxor.u32 %v1972, %v2036
      %v2101 = vxor.u32 %v1973, %v2037
      %v2102 = vxor.u32 %v1974, %v2038
      %v2103 = vxor.u32 %v1975, %v2039
      %v2104 = vxor.u32 %v1976, %v2040
      %v2105 = vxor.u32 %v1977, %v2041
      %v2106 = vxor.u32 %v1978, %v2042
      %v2107 = vxor.u32 %v1979, %v2043
      %v2108 = vxor.u32 %v1980, %v2044
      %v2109 = vxor.u32 %v1981, %v2045
      %v2110 = vxor.u32 %v1982, %v2046
      %v2111 = vxor.u32 %v1983, %v2047
      %v2112 = vxor.u32 %v1984, %v2048
      %v2113 = vxor.u32 %v1985, %v2049
      %v2114 = vxor.u32 %v1986, %v2050
      %v2115 = vxor.u32 %v1987, %v2051
      %v2116 = vxor.u32 %v1988, %v2052
      %v2117 = vxor.u32 %v1989, %v2053
      %v2118 = vxor.u32 %v1990, %v2054
      %v2119 = vxor.u32 %v1991, %v2055
      %v2120 = vxor.u32 %v1992, %v2056
      %v2121 = vxor.u32 %v1993, %v2057
      %v2122 = vxor.u32 %v1994, %v2058
      %v2123 = vxor.u32 %v1995, %v2059
      %v2124 = vxor.u32 %v1996, %v2060
      %v2125 = vxor.u32 %v1997, %v2061
      %v2126 = vxor.u32 %v1998, %v2062
      %v2127 = vxor.u32 %v1999, %v2063
      %v2128 = vxor.u32 %v2000, %v2064
      %v2129 = vxor.u32 %v2001, %v2065
      %v2130 = vxor.u32 %v2002, %v2066
      %v2131 = vxor.u32 %v2003, %v2067
      %v2132 = vxor.u32 %v2004, %v2068
      %v2133 = vxor.u32 %v2005, %v2069
      %v2134 = vxor.u32 %v2006, %v2070
      %v2135 = vxor.u32 %v2007, %v2071
      %v2136 = vxor.u32 %v2008, %v2072
      %v2137 = vxor.u32 %v2009, %v2073
      %v2138 = vxor.u32 %v2010, %v2074
      %v2139 = vxor.u32 %v2011, %v2075
      %v2140 = vxor.u32 %v2012, %v2076
      %v2141 = vxor.u32 %v2013, %v2077
      %v2142 = vxor.u32 %v2014, %v2078
      %v2143 = vxor.u32 %v2015, %v2079
      %v2144 = vxor.u32 %v2016, %v2080
      %v2145 = vxor.u32 %v2017, %v2081
      %v2146 = vxor.u32 %v2018, %v2082
      %v2147 = vmul.u32 %v2083, 2221713035
      %v2148 = vmul.u32 %v2084, 2221713035
      %v2149 = vmul.u32 %v2085, 2221713035
      %v2150 = vmul.u32 %v2086, 2221713035
      %v2151 = vmul.u32 %v2087, 2221713035
      %v2152 = vmul.u32 %v2088, 2221713035
      %v2153 = vmul.u32 %v2089, 2221713035
      %v2154 = vmul.u32 %v2090, 2221713035
      %v2155 = vmul.u32 %v2091, 2221713035
      %v2156 = vmul.u32 %v2092, 2221713035
      %v2157 = vmul.u32 %v2093, 2221713035
      %v2158 = vmul.u32 %v2094, 2221713035
      %v2159 = vmul.u32 %v2095, 2221713035
      %v2160 = vmul.u32 %v2096, 2221713035
      %v2161 = vmul.u32 %v2097, 2221713035
      %v2162 = vmul.u32 %v2098, 2221713035
      %v2163 = vmul.u32 %v2099, 2221713035
      %v2164 = vmul.u32 %v2100, 2221713035
      %v2165 = vmul.u32 %v2101, 2221713035
      %v2166 = vmul.u32 %v2102, 2221713035
      %v2167 = vmul.u32 %v2103, 2221713035
      %v2168 = vmul.u32 %v2104, 2221713035
      %v2169 = vmul.u32 %v2105, 2221713035
      %v2170 = vmul.u32 %v2106, 2221713035
      %v2171 = vmul.u32 %v2107, 2221713035
      %v2172 = vmul.u32 %v2108, 2221713035
      %v2173 = vmul.u32 %v2109, 2221713035
      %v2174 = vmul.u32 %v2110, 2221713035
      %v2175 = vmul.u32 %v2111, 2221713035
      %v2176 = vmul.u32 %v2112, 2221713035
      %v2177 = vmul.u32 %v2113, 2221713035
      %v2178 = vmul.u32 %v2114, 2221713035
      %v2179 = vmul.u32 %v2115, 2221713035
      %v2180 = vmul.u32 %v2116, 2221713035
      %v2181 = vmul.u32 %v2117, 2221713035
      %v2182 = vmul.u32 %v2118, 2221713035
      %v2183 = vmul.u32 %v2119, 2221713035
      %v2184 = vmul.u32 %v2120, 2221713035
      %v2185 = vmul.u32 %v2121, 2221713035
      %v2186 = vmul.u32 %v2122, 2221713035
      %v2187 = vmul.u32 %v2123, 2221713035
      %v2188 = vmul.u32 %v2124, 2221713035
      %v2189 = vmul.u32 %v2125, 2221713035
      %v2190 = vmul.u32 %v2126, 2221713035
      %v2191 = vmul.u32 %v2127, 2221713035
      %v2192 = vmul.u32 %v2128, 2221713035
      %v2193 = vmul.u32 %v2129, 2221713035
      %v2194 = vmul.u32 %v2130, 2221713035
      %v2195 = vmul.u32 %v2131, 2221713035
      %v2196 = vmul.u32 %v2132, 2221713035
      %v2197 = vmul.u32 %v2133, 2221713035
      %v2198 = vmul.u32 %v2134, 2221713035
      %v2199 = vmul.u32 %v2135, 2221713035
      %v2200 = vmul.u32 %v2136, 2221713035
      %v2201 = vmul.u32 %v2137, 2221713035
      %v2202 = vmul.u32 %v2138, 2221713035
      %v2203 = vmul.u32 %v2139, 2221713035
      %v2204 = vmul.u32 %v2140, 2221713035
      %v2205 = vmul.u32 %v2141, 2221713035
      %v2206 = vmul.u32 %v2142, 2221713035
      %v2207 = vmul.u32 %v2143, 2221713035
      %v2208 = vmul.u32 %v2144, 2221713035
      %v2209 = vmul.u32 %v2145, 2221713035
      %v2210 = vmul.u32 %v2146, 2221713035
      %v2211 = vshrl.u32 %v2147, 16
      %v2212 = vshrl.u32 %v2148, 16
      %v2213 = vshrl.u32 %v2149, 16
      %v2214 = vshrl.u32 %v2150, 16
      %v2215 = vshrl.u32 %v2151, 16
      %v2216 = vshrl.u32 %v2152, 16
      %v2217 = vshrl.u32 %v2153, 16
      %v2218 = vshrl.u32 %v2154, 16
      %v2219 = vshrl.u32 %v2155, 16
      %v2220 = vshrl.u32 %v2156, 16
      %v2221 = vshrl.u32 %v2157, 16
      %v2222 = vshrl.u32 %v2158, 16
      %v2223 = vshrl.u32 %v2159, 16
      %v2224 = vshrl.u32 %v2160, 16
      %v2225 = vshrl.u32 %v2161, 16
      %v2226 = vshrl.u32 %v2162, 16
      %v2227 = vshrl.u32 %v2163, 16
      %v2228 = vshrl.u32 %v2164, 16
      %v2229 = vshrl.u32 %v2165, 16
      %v2230 = vshrl.u32 %v2166, 16
      %v2231 = vshrl.u32 %v2167, 16
      %v2232 = vshrl.u32 %v2168, 16
      %v2233 = vshrl.u32 %v2169, 16
      %v2234 = vshrl.u32 %v2170, 16
      %v2235 = vshrl.u32 %v2171, 16
      %v2236 = vshrl.u32 %v2172, 16
      %v2237 = vshrl.u32 %v2173, 16
      %v2238 = vshrl.u32 %v2174, 16
      %v2239 = vshrl.u32 %v2175, 16
      %v2240 = vshrl.u32 %v2176, 16
      %v2241 = vshrl.u32 %v2177, 16
      %v2242 = vshrl.u32 %v2178, 16
      %v2243 = vshrl.u32 %v2179, 16
      %v2244 = vshrl.u32 %v2180, 16
      %v2245 = vshrl.u32 %v2181, 16
      %v2246 = vshrl.u32 %v2182, 16
      %v2247 = vshrl.u32 %v2183, 16
      %v2248 = vshrl.u32 %v2184, 16
      %v2249 = vshrl.u32 %v2185, 16
      %v2250 = vshrl.u32 %v2186, 16
      %v2251 = vshrl.u32 %v2187, 16
      %v2252 = vshrl.u32 %v2188, 16
      %v2253 = vshrl.u32 %v2189, 16
      %v2254 = vshrl.u32 %v2190, 16
      %v2255 = vshrl.u32 %v2191, 16
      %v2256 = vshrl.u32 %v2192, 16
      %v2257 = vshrl.u32 %v2193, 16
      %v2258 = vshrl.u32 %v2194, 16
      %v2259 = vshrl.u32 %v2195, 16
      %v2260 = vshrl.u32 %v2196, 16
      %v2261 = vshrl.u32 %v2197, 16
      %v2262 = vshrl.u32 %v2198, 16
      %v2263 = vshrl.u32 %v2199, 16
      %v2264 = vshrl.u32 %v2200, 16
      %v2265 = vshrl.u32 %v2201, 16
      %v2266 = vshrl.u32 %v2202, 16
      %v2267 = vshrl.u32 %v2203, 16
      %v2268 = vshrl.u32 %v2204, 16
      %v2269 = vshrl.u32 %v2205, 16
      %v2270 = vshrl.u32 %v2206, 16
      %v2271 = vshrl.u32 %v2207, 16
      %v2272 = vshrl.u32 %v2208, 16
      %v2273 = vshrl.u32 %v2209, 16
      %v2274 = vshrl.u32 %v2210, 16
      %v2275 = vxor.u32 %v2147, %v2211
      %v2276 = vxor.u32 %v2148, %v2212
      %v2277 = vxor.u32 %v2149, %v2213
      %v2278 = vxor.u32 %v2150, %v2214
      %v2279 = vxor.u32 %v2151, %v2215
      %v2280 = vxor.u32 %v2152, %v2216
      %v2281 = vxor.u32 %v2153, %v2217
      %v2282 = vxor.u32 %v2154, %v2218
      %v2283 = vxor.u32 %v2155, %v2219
      %v2284 = vxor.u32 %v2156, %v2220
      %v2285 = vxor.u32 %v2157, %v2221
      %v2286 = vxor.u32 %v2158, %v2222
      %v2287 = vxor.u32 %v2159, %v2223
      %v2288 = vxor.u32 %v2160, %v2224
      %v2289 = vxor.u32 %v2161, %v2225
      %v2290 = vxor.u32 %v2162, %v2226
      %v2291 = vxor.u32 %v2163, %v2227
      %v2292 = vxor.u32 %v2164, %v2228
      %v2293 = vxor.u32 %v2165, %v2229
      %v2294 = vxor.u32 %v2166, %v2230
      %v2295 = vxor.u32 %v2167, %v2231
      %v2296 = vxor.u32 %v2168, %v2232
      %v2297 = vxor.u32 %v2169, %v2233
      %v2298 = vxor.u32 %v2170, %v2234
      %v2299 = vxor.u32 %v2171, %v2235
      %v2300 = vxor.u32 %v2172, %v2236
      %v2301 = vxor.u32 %v2173, %v2237
      %v2302 = vxor.u32 %v2174, %v2238
      %v2303 = vxor.u32 %v2175, %v2239
      %v2304 = vxor.u32 %v2176, %v2240
      %v2305 = vxor.u32 %v2177, %v2241
      %v2306 = vxor.u32 %v2178, %v2242
      %v2307 = vxor.u32 %v2179, %v2243
      %v2308 = vxor.u32 %v2180, %v2244
      %v2309 = vxor.u32 %v2181, %v2245
      %v2310 = vxor.u32 %v2182, %v2246
      %v2311 = vxor.u32 %v2183, %v2247
      %v2312 = vxor.u32 %v2184, %v2248
      %v2313 = vxor.u32 %v2185, %v2249
      %v2314 = vxor.u32 %v2186, %v2250
      %v2315 = vxor.u32 %v2187, %v2251
      %v2316 = vxor.u32 %v2188, %v2252
      %v2317 = vxor.u32 %v2189, %v2253
      %v2318 = vxor.u32 %v2190, %v2254
      %v2319 = vxor.u32 %v2191, %v2255
      %v2320 = vxor.u32 %v2192, %v2256
      %v2321 = vxor.u32 %v2193, %v2257
      %v2322 = vxor.u32 %v2194, %v2258
      %v2323 = vxor.u32 %v2195, %v2259
      %v2324 = vxor.u32 %v2196, %v2260
      %v2325 = vxor.u32 %v2197, %v2261
      %v2326 = vxor.u32 %v2198, %v2262
      %v2327 = vxor.u32 %v2199, %v2263
      %v2328 = vxor.u32 %v2200, %v2264
      %v2329 = vxor.u32 %v2201, %v2265
      %v2330 = vxor.u32 %v2202, %v2266
      %v2331 = vxor.u32 %v2203, %v2267
      %v2332 = vxor.u32 %v2204, %v2268
      %v2333 = vxor.u32 %v2205, %v2269
      %v2334 = vxor.u32 %v2206, %v2270
      %v2335 = vxor.u32 %v2207, %v2271
      %v2336 = vxor.u32 %v2208, %v2272
      %v2337 = vxor.u32 %v2209, %v2273
      %v2338 = vxor.u32 %v2210, %v2274
      %vm2339 = vcmp.ge.u32.totalorder %v2275, 429496729
      %vm2340 = vcmp.ge.u32.totalorder %v2276, 429496729
      %vm2341 = vcmp.ge.u32.totalorder %v2277, 429496729
      %vm2342 = vcmp.ge.u32.totalorder %v2278, 429496729
      %vm2343 = vcmp.ge.u32.totalorder %v2279, 429496729
      %vm2344 = vcmp.ge.u32.totalorder %v2280, 429496729
      %vm2345 = vcmp.ge.u32.totalorder %v2281, 429496729
      %vm2346 = vcmp.ge.u32.totalorder %v2282, 429496729
      %vm2347 = vcmp.ge.u32.totalorder %v2283, 429496729
      %vm2348 = vcmp.ge.u32.totalorder %v2284, 429496729
      %vm2349 = vcmp.ge.u32.totalorder %v2285, 429496729
      %vm2350 = vcmp.ge.u32.totalorder %v2286, 429496729
      %vm2351 = vcmp.ge.u32.totalorder %v2287, 429496729
      %vm2352 = vcmp.ge.u32.totalorder %v2288, 429496729
      %vm2353 = vcmp.ge.u32.totalorder %v2289, 429496729
      %vm2354 = vcmp.ge.u32.totalorder %v2290, 429496729
      %vm2355 = vcmp.ge.u32.totalorder %v2291, 429496729
      %vm2356 = vcmp.ge.u32.totalorder %v2292, 429496729
      %vm2357 = vcmp.ge.u32.totalorder %v2293, 429496729
      %vm2358 = vcmp.ge.u32.totalorder %v2294, 429496729
      %vm2359 = vcmp.ge.u32.totalorder %v2295, 429496729
      %vm2360 = vcmp.ge.u32.totalorder %v2296, 429496729
      %vm2361 = vcmp.ge.u32.totalorder %v2297, 429496729
      %vm2362 = vcmp.ge.u32.totalorder %v2298, 429496729
      %vm2363 = vcmp.ge.u32.totalorder %v2299, 429496729
      %vm2364 = vcmp.ge.u32.totalorder %v2300, 429496729
      %vm2365 = vcmp.ge.u32.totalorder %v2301, 429496729
      %vm2366 = vcmp.ge.u32.totalorder %v2302, 429496729
      %vm2367 = vcmp.ge.u32.totalorder %v2303, 429496729
      %vm2368 = vcmp.ge.u32.totalorder %v2304, 429496729
      %vm2369 = vcmp.ge.u32.totalorder %v2305, 429496729
      %vm2370 = vcmp.ge.u32.totalorder %v2306, 429496729
      %vm2371 = vcmp.ge.u32.totalorder %v2307, 429496729
      %vm2372 = vcmp.ge.u32.totalorder %v2308, 429496729
      %vm2373 = vcmp.ge.u32.totalorder %v2309, 429496729
      %vm2374 = vcmp.ge.u32.totalorder %v2310, 429496729
      %vm2375 = vcmp.ge.u32.totalorder %v2311, 429496729
      %vm2376 = vcmp.ge.u32.totalorder %v2312, 429496729
      %vm2377 = vcmp.ge.u32.totalorder %v2313, 429496729
      %vm2378 = vcmp.ge.u32.totalorder %v2314, 429496729
      %vm2379 = vcmp.ge.u32.totalorder %v2315, 429496729
      %vm2380 = vcmp.ge.u32.totalorder %v2316, 429496729
      %vm2381 = vcmp.ge.u32.totalorder %v2317, 429496729
      %vm2382 = vcmp.ge.u32.totalorder %v2318, 429496729
      %vm2383 = vcmp.ge.u32.totalorder %v2319, 429496729
      %vm2384 = vcmp.ge.u32.totalorder %v2320, 429496729
      %vm2385 = vcmp.ge.u32.totalorder %v2321, 429496729
      %vm2386 = vcmp.ge.u32.totalorder %v2322, 429496729
      %vm2387 = vcmp.ge.u32.totalorder %v2323, 429496729
      %vm2388 = vcmp.ge.u32.totalorder %v2324, 429496729
      %vm2389 = vcmp.ge.u32.totalorder %v2325, 429496729
      %vm2390 = vcmp.ge.u32.totalorder %v2326, 429496729
      %vm2391 = vcmp.ge.u32.totalorder %v2327, 429496729
      %vm2392 = vcmp.ge.u32.totalorder %v2328, 429496729
      %vm2393 = vcmp.ge.u32.totalorder %v2329, 429496729
      %vm2394 = vcmp.ge.u32.totalorder %v2330, 429496729
      %vm2395 = vcmp.ge.u32.totalorder %v2331, 429496729
      %vm2396 = vcmp.ge.u32.totalorder %v2332, 429496729
      %vm2397 = vcmp.ge.u32.totalorder %v2333, 429496729
      %vm2398 = vcmp.ge.u32.totalorder %v2334, 429496729
      %vm2399 = vcmp.ge.u32.totalorder %v2335, 429496729
      %vm2400 = vcmp.ge.u32.totalorder %v2336, 429496729
      %vm2401 = vcmp.ge.u32.totalorder %v2337, 429496729
      %vm2402 = vcmp.ge.u32.totalorder %v2338, 429496729
      %v2403 = vsel %vm2339, %v1401, 0.0
      %v2404 = vsel %vm2340, %v1403, 0.0
      %v2405 = vsel %vm2341, %v1405, 0.0
      %v2406 = vsel %vm2342, %v1407, 0.0
      %v2407 = vsel %vm2343, %v1409, 0.0
      %v2408 = vsel %vm2344, %v1411, 0.0
      %v2409 = vsel %vm2345, %v1413, 0.0
      %v2410 = vsel %vm2346, %v1415, 0.0
      %v2411 = vsel %vm2347, %v1417, 0.0
      %v2412 = vsel %vm2348, %v1419, 0.0
      %v2413 = vsel %vm2349, %v1421, 0.0
      %v2414 = vsel %vm2350, %v1423, 0.0
      %v2415 = vsel %vm2351, %v1425, 0.0
      %v2416 = vsel %vm2352, %v1427, 0.0
      %v2417 = vsel %vm2353, %v1429, 0.0
      %v2418 = vsel %vm2354, %v1431, 0.0
      %v2419 = vsel %vm2355, %v1433, 0.0
      %v2420 = vsel %vm2356, %v1435, 0.0
      %v2421 = vsel %vm2357, %v1437, 0.0
      %v2422 = vsel %vm2358, %v1439, 0.0
      %v2423 = vsel %vm2359, %v1441, 0.0
      %v2424 = vsel %vm2360, %v1443, 0.0
      %v2425 = vsel %vm2361, %v1445, 0.0
      %v2426 = vsel %vm2362, %v1447, 0.0
      %v2427 = vsel %vm2363, %v1449, 0.0
      %v2428 = vsel %vm2364, %v1451, 0.0
      %v2429 = vsel %vm2365, %v1453, 0.0
      %v2430 = vsel %vm2366, %v1455, 0.0
      %v2431 = vsel %vm2367, %v1457, 0.0
      %v2432 = vsel %vm2368, %v1459, 0.0
      %v2433 = vsel %vm2369, %v1461, 0.0
      %v2434 = vsel %vm2370, %v1463, 0.0
      %v2435 = vsel %vm2371, %v1465, 0.0
      %v2436 = vsel %vm2372, %v1467, 0.0
      %v2437 = vsel %vm2373, %v1469, 0.0
      %v2438 = vsel %vm2374, %v1471, 0.0
      %v2439 = vsel %vm2375, %v1473, 0.0
      %v2440 = vsel %vm2376, %v1475, 0.0
      %v2441 = vsel %vm2377, %v1477, 0.0
      %v2442 = vsel %vm2378, %v1479, 0.0
      %v2443 = vsel %vm2379, %v1481, 0.0
      %v2444 = vsel %vm2380, %v1483, 0.0
      %v2445 = vsel %vm2381, %v1485, 0.0
      %v2446 = vsel %vm2382, %v1487, 0.0
      %v2447 = vsel %vm2383, %v1489, 0.0
      %v2448 = vsel %vm2384, %v1491, 0.0
      %v2449 = vsel %vm2385, %v1493, 0.0
      %v2450 = vsel %vm2386, %v1495, 0.0
      %v2451 = vsel %vm2387, %v1497, 0.0
      %v2452 = vsel %vm2388, %v1499, 0.0
      %v2453 = vsel %vm2389, %v1501, 0.0
      %v2454 = vsel %vm2390, %v1503, 0.0
      %v2455 = vsel %vm2391, %v1505, 0.0
      %v2456 = vsel %vm2392, %v1507, 0.0
      %v2457 = vsel %vm2393, %v1509, 0.0
      %v2458 = vsel %vm2394, %v1511, 0.0
      %v2459 = vsel %vm2395, %v1513, 0.0
      %v2460 = vsel %vm2396, %v1515, 0.0
      %v2461 = vsel %vm2397, %v1517, 0.0
      %v2462 = vsel %vm2398, %v1519, 0.0
      %v2463 = vsel %vm2399, %v1521, 0.0
      %v2464 = vsel %vm2400, %v1523, 0.0
      %v2465 = vsel %vm2401, %v1525, 0.0
      %v2466 = vsel %vm2402, %v1527, 0.0
      %v2467 = vpack.c.bf16 %v2404, %v2403
      %v2468 = vpack.c.bf16 %v2406, %v2405
      %v2469 = vpack.c.bf16 %v2408, %v2407
      %v2470 = vpack.c.bf16 %v2410, %v2409
      %v2471 = vpack.c.bf16 %v2412, %v2411
      %v2472 = vpack.c.bf16 %v2414, %v2413
      %v2473 = vpack.c.bf16 %v2416, %v2415
      %v2474 = vpack.c.bf16 %v2418, %v2417
      %v2475 = vpack.c.bf16 %v2420, %v2419
      %v2476 = vpack.c.bf16 %v2422, %v2421
      %v2477 = vpack.c.bf16 %v2424, %v2423
      %v2478 = vpack.c.bf16 %v2426, %v2425
      %v2479 = vpack.c.bf16 %v2428, %v2427
      %v2480 = vpack.c.bf16 %v2430, %v2429
      %v2481 = vpack.c.bf16 %v2432, %v2431
      %v2482 = vpack.c.bf16 %v2434, %v2433
      %v2483 = vpack.c.bf16 %v2436, %v2435
      %v2484 = vpack.c.bf16 %v2438, %v2437
      %v2485 = vpack.c.bf16 %v2440, %v2439
      %v2486 = vpack.c.bf16 %v2442, %v2441
      %v2487 = vpack.c.bf16 %v2444, %v2443
      %v2488 = vpack.c.bf16 %v2446, %v2445
      %v2489 = vpack.c.bf16 %v2448, %v2447
      %v2490 = vpack.c.bf16 %v2450, %v2449
      %v2491 = vpack.c.bf16 %v2452, %v2451
      %v2492 = vpack.c.bf16 %v2454, %v2453
      %v2493 = vpack.c.bf16 %v2456, %v2455
      %v2494 = vpack.c.bf16 %v2458, %v2457
      %v2495 = vpack.c.bf16 %v2460, %v2459
      %v2496 = vpack.c.bf16 %v2462, %v2461
      %v2497 = vpack.c.bf16 %v2464, %v2463
      %v2498 = vpack.c.bf16 %v2466, %v2465
      %2499 = vmatprep.subr.bf16.mxu0 0
      %2500 = vmatpush1.bf16.msra.mxu0 %v579
      %2501 = vmatprep.subr.bf16.mxu0 0
      %2502 = vmatpush1.bf16.msra.mxu0 %v580
      %2503 = vmatprep.subr.bf16.mxu0 0
      %2504 = vmatpush1.bf16.msra.mxu0 %v581
      %2505 = vmatprep.subr.bf16.mxu0 0
      %2506 = vmatpush1.bf16.msra.mxu0 %v582
      %2507 = vmatprep.subr.bf16.mxu0 0
      %2508 = vmatpush1.bf16.msra.mxu0 %v583
      %2509 = vmatprep.subr.bf16.mxu0 0
      %2510 = vmatpush1.bf16.msra.mxu0 %v584
      %2511 = vmatprep.subr.bf16.mxu0 0
      %2512 = vmatpush1.bf16.msra.mxu0 %v585
      %2513 = vmatprep.subr.bf16.mxu0 0
      %2514 = vmatpush1.bf16.msra.mxu0 %v586
      %2515 = vmatprep.subr.bf16.mxu0 0
      %2516 = vmatpush1.bf16.msra.mxu0 0
      %2517 = vmatprep.subr.bf16.mxu0 0
      %2518 = vmatpush1.bf16.msra.mxu0 0
      %2519 = vmatprep.subr.bf16.mxu0 0
      %2520 = vmatpush1.bf16.msra.mxu0 0
      %2521 = vmatprep.subr.bf16.mxu0 0
      %2522 = vmatpush1.bf16.msra.mxu0 0
      %2523 = vmatprep.subr.bf16.mxu0 0
      %2524 = vmatpush1.bf16.msra.mxu0 0
      %2525 = vmatprep.subr.bf16.mxu0 0
      %2526 = vmatpush1.bf16.msra.mxu0 0
      %2527 = vmatprep.subr.bf16.mxu0 0
      %2528 = vmatpush1.bf16.msra.mxu0 0
      %2529 = vmatprep.subr.bf16.mxu0 0
      %2530 = vmatpush1.bf16.msra.mxu0 0
      %2531 = vmatprep.mubr.bf16.mxu0 0
      %2532 = vmatmul.mubr.bf16.gmra.mrb[0].mxu0 %v2467
      %v2533 = vpop.f32.mrb[0].mxu0
      %v2534 = vadd.f32 0.0, %v2533
      %v2535 = vpop.f32.mrb[0].mxu0
      %v2536 = vpop.f32.mrb[0].mxu0
      %v2537 = vadd.f32 0.0, %v2536
      %v2538 = vpop.f32.mrb[0].mxu0
      %2539 = vmatprep.mubr.bf16.mxu0 0
      %2540 = vmatmul.mubr.bf16.gmra.mrb[0].mxu0 %v2468
      %v2541 = vpop.f32.mrb[0].mxu0
      %v2542 = vadd.f32 0.0, %v2541
      %v2543 = vpop.f32.mrb[0].mxu0
      %v2544 = vpop.f32.mrb[0].mxu0
      %v2545 = vadd.f32 0.0, %v2544
      %v2546 = vpop.f32.mrb[0].mxu0
      %2547 = vmatprep.mubr.bf16.mxu0 0
      %2548 = vmatmul.mubr.bf16.gmra.mrb[0].mxu0 %v2469
      %v2549 = vpop.f32.mrb[0].mxu0
      %v2550 = vadd.f32 0.0, %v2549
      %v2551 = vpop.f32.mrb[0].mxu0
      %v2552 = vpop.f32.mrb[0].mxu0
      %v2553 = vadd.f32 0.0, %v2552
      %v2554 = vpop.f32.mrb[0].mxu0
      %2555 = vmatprep.mubr.bf16.mxu0 0
      %2556 = vmatmul.mubr.bf16.gmra.mrb[0].mxu0 %v2470
      %v2557 = vpop.f32.mrb[0].mxu0
      %v2558 = vadd.f32 0.0, %v2557
      %v2559 = vpop.f32.mrb[0].mxu0
      %v2560 = vpop.f32.mrb[0].mxu0
      %v2561 = vadd.f32 0.0, %v2560
      %v2562 = vpop.f32.mrb[0].mxu0
      %2563 = vmatprep.mubr.bf16.mxu0 0
      %2564 = vmatmul.mubr.bf16.gmra.mrb[0].mxu0 %v2471
      %v2565 = vpop.f32.mrb[0].mxu0
      %v2566 = vadd.f32 0.0, %v2565
      %v2567 = vpop.f32.mrb[0].mxu0
      %v2568 = vpop.f32.mrb[0].mxu0
      %v2569 = vadd.f32 0.0, %v2568
      %v2570 = vpop.f32.mrb[0].mxu0
      %2571 = vmatprep.mubr.bf16.mxu0 0
      %2572 = vmatmul.mubr.bf16.gmra.mrb[0].mxu0 %v2472
      %v2573 = vpop.f32.mrb[0].mxu0
      %v2574 = vadd.f32 0.0, %v2573
      %v2575 = vpop.f32.mrb[0].mxu0
      %v2576 = vpop.f32.mrb[0].mxu0
      %v2577 = vadd.f32 0.0, %v2576
      %v2578 = vpop.f32.mrb[0].mxu0
      %2579 = vmatprep.mubr.bf16.mxu0 0
      %2580 = vmatmul.mubr.bf16.gmra.mrb[0].mxu0 %v2473
      %v2581 = vpop.f32.mrb[0].mxu0
      %v2582 = vadd.f32 0.0, %v2581
      %v2583 = vpop.f32.mrb[0].mxu0
      %v2584 = vpop.f32.mrb[0].mxu0
      %v2585 = vadd.f32 0.0, %v2584
      %v2586 = vpop.f32.mrb[0].mxu0
      %2587 = vmatprep.mubr.bf16.mxu0 0
      %2588 = vmatmul.mubr.bf16.gmra.mrb[0].mxu0 %v2474
      %v2589 = vpop.f32.mrb[0].mxu0
      %v2590 = vadd.f32 0.0, %v2589
      %v2591 = vpop.f32.mrb[0].mxu0
      %v2592 = vpop.f32.mrb[0].mxu0
      %v2593 = vadd.f32 0.0, %v2592
      %v2594 = vpop.f32.mrb[0].mxu0
      %2595 = vdwg.mxu0
      %2596 = vmatprep.subr.bf16.mxu0 0
      %2597 = vmatpush1.bf16.msra.mxu0 %v587
      %2598 = vmatprep.subr.bf16.mxu0 0
      %2599 = vmatpush1.bf16.msra.mxu0 %v588
      %2600 = vmatprep.subr.bf16.mxu0 0
      %2601 = vmatpush1.bf16.msra.mxu0 %v589
      %2602 = vmatprep.subr.bf16.mxu0 0
      %2603 = vmatpush1.bf16.msra.mxu0 %v590
      %2604 = vmatprep.subr.bf16.mxu0 0
      %2605 = vmatpush1.bf16.msra.mxu0 %v591
      %2606 = vmatprep.subr.bf16.mxu0 0
      %2607 = vmatpush1.bf16.msra.mxu0 %v592
      %2608 = vmatprep.subr.bf16.mxu0 0
      %2609 = vmatpush1.bf16.msra.mxu0 %v593
      %2610 = vmatprep.subr.bf16.mxu0 0
      %2611 = vmatpush1.bf16.msra.mxu0 %v594
      %2612 = vmatprep.subr.bf16.mxu0 0
      %2613 = vmatpush1.bf16.msra.mxu0 0
      %2614 = vmatprep.subr.bf16.mxu0 0
      %2615 = vmatpush1.bf16.msra.mxu0 0
      %2616 = vmatprep.subr.bf16.mxu0 0
      %2617 = vmatpush1.bf16.msra.mxu0 0
      %2618 = vmatprep.subr.bf16.mxu0 0
      %2619 = vmatpush1.bf16.msra.mxu0 0
      %2620 = vmatprep.subr.bf16.mxu0 0
      %2621 = vmatpush1.bf16.msra.mxu0 0
      %2622 = vmatprep.subr.bf16.mxu0 0
      %2623 = vmatpush1.bf16.msra.mxu0 0
      %2624 = vmatprep.subr.bf16.mxu0 0
      %2625 = vmatpush1.bf16.msra.mxu0 0
      %2626 = vmatprep.subr.bf16.mxu0 0
      %2627 = vmatpush1.bf16.msra.mxu0 0
      %2628 = vmatprep.mubr.bf16.mxu0 0
      %2629 = vmatmul.mubr.bf16.gmra.mrb[0].mxu0 %v2475
      %v2630 = vpop.f32.mrb[0].mxu0
      %v2631 = vadd.f32 0.0, %v2630
      %v2632 = vpop.f32.mrb[0].mxu0
      %v2633 = vpop.f32.mrb[0].mxu0
      %v2634 = vadd.f32 0.0, %v2633
      %v2635 = vpop.f32.mrb[0].mxu0
      %2636 = vmatprep.mubr.bf16.mxu0 0
      %2637 = vmatmul.mubr.bf16.gmra.mrb[0].mxu0 %v2476
      %v2638 = vpop.f32.mrb[0].mxu0
      %v2639 = vadd.f32 0.0, %v2638
      %v2640 = vpop.f32.mrb[0].mxu0
      %v2641 = vpop.f32.mrb[0].mxu0
      %v2642 = vadd.f32 0.0, %v2641
      %v2643 = vpop.f32.mrb[0].mxu0
      %2644 = vmatprep.mubr.bf16.mxu0 0
      %2645 = vmatmul.mubr.bf16.gmra.mrb[0].mxu0 %v2477
      %v2646 = vpop.f32.mrb[0].mxu0
      %v2647 = vadd.f32 0.0, %v2646
      %v2648 = vpop.f32.mrb[0].mxu0
      %v2649 = vpop.f32.mrb[0].mxu0
      %v2650 = vadd.f32 0.0, %v2649
      %v2651 = vpop.f32.mrb[0].mxu0
      %2652 = vmatprep.mubr.bf16.mxu0 0
      %2653 = vmatmul.mubr.bf16.gmra.mrb[0].mxu0 %v2478
      %v2654 = vpop.f32.mrb[0].mxu0
      %v2655 = vadd.f32 0.0, %v2654
      %v2656 = vpop.f32.mrb[0].mxu0
      %v2657 = vpop.f32.mrb[0].mxu0
      %v2658 = vadd.f32 0.0, %v2657
      %v2659 = vpop.f32.mrb[0].mxu0
      %2660 = vmatprep.mubr.bf16.mxu0 0
      %2661 = vmatmul.mubr.bf16.gmra.mrb[0].mxu0 %v2479
      %v2662 = vpop.f32.mrb[0].mxu0
      %v2663 = vadd.f32 0.0, %v2662
      %v2664 = vpop.f32.mrb[0].mxu0
      %v2665 = vpop.f32.mrb[0].mxu0
      %v2666 = vadd.f32 0.0, %v2665
      %v2667 = vpop.f32.mrb[0].mxu0
      %2668 = vmatprep.mubr.bf16.mxu0 0
      %2669 = vmatmul.mubr.bf16.gmra.mrb[0].mxu0 %v2480
      %v2670 = vpop.f32.mrb[0].mxu0
      %v2671 = vadd.f32 0.0, %v2670
      %v2672 = vpop.f32.mrb[0].mxu0
      %v2673 = vpop.f32.mrb[0].mxu0
      %v2674 = vadd.f32 0.0, %v2673
      %v2675 = vpop.f32.mrb[0].mxu0
      %2676 = vmatprep.mubr.bf16.mxu0 0
      %2677 = vmatmul.mubr.bf16.gmra.mrb[0].mxu0 %v2481
      %v2678 = vpop.f32.mrb[0].mxu0
      %v2679 = vadd.f32 0.0, %v2678
      %v2680 = vpop.f32.mrb[0].mxu0
      %v2681 = vpop.f32.mrb[0].mxu0
      %v2682 = vadd.f32 0.0, %v2681
      %v2683 = vpop.f32.mrb[0].mxu0
      %2684 = vmatprep.mubr.bf16.mxu0 0
      %2685 = vmatmul.mubr.bf16.gmra.mrb[0].mxu0 %v2482
      %v2686 = vpop.f32.mrb[0].mxu0
      %v2687 = vadd.f32 0.0, %v2686
      %v2688 = vpop.f32.mrb[0].mxu0
      %v2689 = vpop.f32.mrb[0].mxu0
      %v2690 = vadd.f32 0.0, %v2689
      %v2691 = vpop.f32.mrb[0].mxu0
      %2692 = vdwg.mxu0
      %2693 = vmatprep.subr.bf16.mxu0 0
      %2694 = vmatpush1.bf16.msra.mxu0 %v595
      %2695 = vmatprep.subr.bf16.mxu0 0
      %2696 = vmatpush1.bf16.msra.mxu0 %v596
      %2697 = vmatprep.subr.bf16.mxu0 0
      %2698 = vmatpush1.bf16.msra.mxu0 %v597
      %2699 = vmatprep.subr.bf16.mxu0 0
      %2700 = vmatpush1.bf16.msra.mxu0 %v598
      %2701 = vmatprep.subr.bf16.mxu0 0
      %2702 = vmatpush1.bf16.msra.mxu0 %v599
      %2703 = vmatprep.subr.bf16.mxu0 0
      %2704 = vmatpush1.bf16.msra.mxu0 %v600
      %2705 = vmatprep.subr.bf16.mxu0 0
      %2706 = vmatpush1.bf16.msra.mxu0 %v601
      %2707 = vmatprep.subr.bf16.mxu0 0
      %2708 = vmatpush1.bf16.msra.mxu0 %v602
      %2709 = vmatprep.subr.bf16.mxu0 0
      %2710 = vmatpush1.bf16.msra.mxu0 0
      %2711 = vmatprep.subr.bf16.mxu0 0
      %2712 = vmatpush1.bf16.msra.mxu0 0
      %2713 = vmatprep.subr.bf16.mxu0 0
      %2714 = vmatpush1.bf16.msra.mxu0 0
      %2715 = vmatprep.subr.bf16.mxu0 0
      %2716 = vmatpush1.bf16.msra.mxu0 0
      %2717 = vmatprep.subr.bf16.mxu0 0
      %2718 = vmatpush1.bf16.msra.mxu0 0
      %2719 = vmatprep.subr.bf16.mxu0 0
      %2720 = vmatpush1.bf16.msra.mxu0 0
      %2721 = vmatprep.subr.bf16.mxu0 0
      %2722 = vmatpush1.bf16.msra.mxu0 0
      %2723 = vmatprep.subr.bf16.mxu0 0
      %2724 = vmatpush1.bf16.msra.mxu0 0
      %2725 = vmatprep.mubr.bf16.mxu0 0
      %2726 = vmatmul.mubr.bf16.gmra.mrb[0].mxu0 %v2483
      %v2727 = vpop.f32.mrb[0].mxu0
      %v2728 = vadd.f32 0.0, %v2727
      %v2729 = vpop.f32.mrb[0].mxu0
      %v2730 = vpop.f32.mrb[0].mxu0
      %v2731 = vadd.f32 0.0, %v2730
      %v2732 = vpop.f32.mrb[0].mxu0
      %2733 = vmatprep.mubr.bf16.mxu0 0
      %2734 = vmatmul.mubr.bf16.gmra.mrb[0].mxu0 %v2484
      %v2735 = vpop.f32.mrb[0].mxu0
      %v2736 = vadd.f32 0.0, %v2735
      %v2737 = vpop.f32.mrb[0].mxu0
      %v2738 = vpop.f32.mrb[0].mxu0
      %v2739 = vadd.f32 0.0, %v2738
      %v2740 = vpop.f32.mrb[0].mxu0
      %2741 = vmatprep.mubr.bf16.mxu0 0
      %2742 = vmatmul.mubr.bf16.gmra.mrb[0].mxu0 %v2485
      %v2743 = vpop.f32.mrb[0].mxu0
      %v2744 = vadd.f32 0.0, %v2743
      %v2745 = vpop.f32.mrb[0].mxu0
      %v2746 = vpop.f32.mrb[0].mxu0
      %v2747 = vadd.f32 0.0, %v2746
      %v2748 = vpop.f32.mrb[0].mxu0
      %2749 = vmatprep.mubr.bf16.mxu0 0
      %2750 = vmatmul.mubr.bf16.gmra.mrb[0].mxu0 %v2486
      %v2751 = vpop.f32.mrb[0].mxu0
      %v2752 = vadd.f32 0.0, %v2751
      %v2753 = vpop.f32.mrb[0].mxu0
      %v2754 = vpop.f32.mrb[0].mxu0
      %v2755 = vadd.f32 0.0, %v2754
      %v2756 = vpop.f32.mrb[0].mxu0
      %2757 = vmatprep.mubr.bf16.mxu0 0
      %2758 = vmatmul.mubr.bf16.gmra.mrb[0].mxu0 %v2487
      %v2759 = vpop.f32.mrb[0].mxu0
      %v2760 = vadd.f32 0.0, %v2759
      %v2761 = vpop.f32.mrb[0].mxu0
      %v2762 = vpop.f32.mrb[0].mxu0
      %v2763 = vadd.f32 0.0, %v2762
      %v2764 = vpop.f32.mrb[0].mxu0
      %2765 = vmatprep.mubr.bf16.mxu0 0
      %2766 = vmatmul.mubr.bf16.gmra.mrb[0].mxu0 %v2488
      %v2767 = vpop.f32.mrb[0].mxu0
      %v2768 = vadd.f32 0.0, %v2767
      %v2769 = vpop.f32.mrb[0].mxu0
      %v2770 = vpop.f32.mrb[0].mxu0
      %v2771 = vadd.f32 0.0, %v2770
      %v2772 = vpop.f32.mrb[0].mxu0
      %2773 = vmatprep.mubr.bf16.mxu0 0
      %2774 = vmatmul.mubr.bf16.gmra.mrb[0].mxu0 %v2489
      %v2775 = vpop.f32.mrb[0].mxu0
      %v2776 = vadd.f32 0.0, %v2775
      %v2777 = vpop.f32.mrb[0].mxu0
      %v2778 = vpop.f32.mrb[0].mxu0
      %v2779 = vadd.f32 0.0, %v2778
      %v2780 = vpop.f32.mrb[0].mxu0
      %2781 = vmatprep.mubr.bf16.mxu0 0
      %2782 = vmatmul.mubr.bf16.gmra.mrb[0].mxu0 %v2490
      %v2783 = vpop.f32.mrb[0].mxu0
      %v2784 = vadd.f32 0.0, %v2783
      %v2785 = vpop.f32.mrb[0].mxu0
      %v2786 = vpop.f32.mrb[0].mxu0
      %v2787 = vadd.f32 0.0, %v2786
      %v2788 = vpop.f32.mrb[0].mxu0
      %2789 = vdwg.mxu0
      %2790 = vmatprep.subr.bf16.mxu0 0
      %2791 = vmatpush1.bf16.msra.mxu0 %v603
      %2792 = vmatprep.subr.bf16.mxu0 0
      %2793 = vmatpush1.bf16.msra.mxu0 %v604
      %2794 = vmatprep.subr.bf16.mxu0 0
      %2795 = vmatpush1.bf16.msra.mxu0 %v605
      %2796 = vmatprep.subr.bf16.mxu0 0
      %2797 = vmatpush1.bf16.msra.mxu0 %v606
      %2798 = vmatprep.subr.bf16.mxu0 0
      %2799 = vmatpush1.bf16.msra.mxu0 %v607
      %2800 = vmatprep.subr.bf16.mxu0 0
      %2801 = vmatpush1.bf16.msra.mxu0 %v608
      %2802 = vmatprep.subr.bf16.mxu0 0
      %2803 = vmatpush1.bf16.msra.mxu0 %v609
      %2804 = vmatprep.subr.bf16.mxu0 0
      %2805 = vmatpush1.bf16.msra.mxu0 %v610
      %2806 = vmatprep.subr.bf16.mxu0 0
      %2807 = vmatpush1.bf16.msra.mxu0 0
      %2808 = vmatprep.subr.bf16.mxu0 0
      %2809 = vmatpush1.bf16.msra.mxu0 0
      %2810 = vmatprep.subr.bf16.mxu0 0
      %2811 = vmatpush1.bf16.msra.mxu0 0
      %2812 = vmatprep.subr.bf16.mxu0 0
      %2813 = vmatpush1.bf16.msra.mxu0 0
      %2814 = vmatprep.subr.bf16.mxu0 0
      %2815 = vmatpush1.bf16.msra.mxu0 0
      %2816 = vmatprep.subr.bf16.mxu0 0
      %2817 = vmatpush1.bf16.msra.mxu0 0
      %2818 = vmatprep.subr.bf16.mxu0 0
      %2819 = vmatpush1.bf16.msra.mxu0 0
      %2820 = vmatprep.subr.bf16.mxu0 0
      %2821 = vmatpush1.bf16.msra.mxu0 0
      %2822 = vmatprep.mubr.bf16.mxu0 0
      %2823 = vmatmul.mubr.bf16.gmra.mrb[0].mxu0 %v2491
      %v2824 = vpop.f32.mrb[0].mxu0
      %v2825 = vadd.f32 0.0, %v2824
      %v2826 = vpop.f32.mrb[0].mxu0
      %v2827 = vpop.f32.mrb[0].mxu0
      %v2828 = vadd.f32 0.0, %v2827
      %v2829 = vpop.f32.mrb[0].mxu0
      %2830 = vmatprep.mubr.bf16.mxu0 0
      %2831 = vmatmul.mubr.bf16.gmra.mrb[0].mxu0 %v2492
      %v2832 = vpop.f32.mrb[0].mxu0
      %v2833 = vadd.f32 0.0, %v2832
      %v2834 = vpop.f32.mrb[0].mxu0
      %v2835 = vpop.f32.mrb[0].mxu0
      %v2836 = vadd.f32 0.0, %v2835
      %v2837 = vpop.f32.mrb[0].mxu0
      %2838 = vmatprep.mubr.bf16.mxu0 0
      %2839 = vmatmul.mubr.bf16.gmra.mrb[0].mxu0 %v2493
      %v2840 = vpop.f32.mrb[0].mxu0
      %v2841 = vadd.f32 0.0, %v2840
      %v2842 = vpop.f32.mrb[0].mxu0
      %v2843 = vpop.f32.mrb[0].mxu0
      %v2844 = vadd.f32 0.0, %v2843
      %v2845 = vpop.f32.mrb[0].mxu0
      %2846 = vmatprep.mubr.bf16.mxu0 0
      %2847 = vmatmul.mubr.bf16.gmra.mrb[0].mxu0 %v2494
      %v2848 = vpop.f32.mrb[0].mxu0
      %v2849 = vadd.f32 0.0, %v2848
      %v2850 = vpop.f32.mrb[0].mxu0
      %v2851 = vpop.f32.mrb[0].mxu0
      %v2852 = vadd.f32 0.0, %v2851
      %v2853 = vpop.f32.mrb[0].mxu0
      %2854 = vmatprep.mubr.bf16.mxu0 0
      %2855 = vmatmul.mubr.bf16.gmra.mrb[0].mxu0 %v2495
      %v2856 = vpop.f32.mrb[0].mxu0
      %v2857 = vadd.f32 0.0, %v2856
      %v2858 = vpop.f32.mrb[0].mxu0
      %v2859 = vpop.f32.mrb[0].mxu0
      %v2860 = vadd.f32 0.0, %v2859
      %v2861 = vpop.f32.mrb[0].mxu0
      %2862 = vmatprep.mubr.bf16.mxu0 0
      %2863 = vmatmul.mubr.bf16.gmra.mrb[0].mxu0 %v2496
      %v2864 = vpop.f32.mrb[0].mxu0
      %v2865 = vadd.f32 0.0, %v2864
      %v2866 = vpop.f32.mrb[0].mxu0
      %v2867 = vpop.f32.mrb[0].mxu0
      %v2868 = vadd.f32 0.0, %v2867
      %v2869 = vpop.f32.mrb[0].mxu0
      %2870 = vmatprep.mubr.bf16.mxu0 0
      %2871 = vmatmul.mubr.bf16.gmra.mrb[0].mxu0 %v2497
      %v2872 = vpop.f32.mrb[0].mxu0
      %v2873 = vadd.f32 0.0, %v2872
      %v2874 = vpop.f32.mrb[0].mxu0
      %v2875 = vpop.f32.mrb[0].mxu0
      %v2876 = vadd.f32 0.0, %v2875
      %v2877 = vpop.f32.mrb[0].mxu0
      %2878 = vmatprep.mubr.bf16.mxu0 0
      %2879 = vmatmul.mubr.bf16.gmra.mrb[0].mxu0 %v2498
      %v2880 = vpop.f32.mrb[0].mxu0
      %v2881 = vadd.f32 0.0, %v2880
      %v2882 = vpop.f32.mrb[0].mxu0
      %v2883 = vpop.f32.mrb[0].mxu0
      %v2884 = vadd.f32 0.0, %v2883
      %v2885 = vpop.f32.mrb[0].mxu0
      %2886 = vdwg.mxu0
      %v2887 = vrcp.pop %v1529
      %v2888 = vrcp.pop %v1531
      %v2889 = vrcp.pop %v1533
      %v2890 = vrcp.pop %v1535
      %v2891 = vrcp.pop %v1537
      %v2892 = vrcp.pop %v1539
      %v2893 = vrcp.pop %v1541
      %v2894 = vrcp.pop %v1543
      %v2895 = vrcp.pop %v1545
      %v2896 = vrcp.pop %v1547
      %v2897 = vrcp.pop %v1549
      %v2898 = vrcp.pop %v1551
      %v2899 = vrcp.pop %v1553
      %v2900 = vrcp.pop %v1555
      %v2901 = vrcp.pop %v1557
      %v2902 = vrcp.pop %v1559
      %v2903 = vrcp.pop %v1561
      %v2904 = vrcp.pop %v1563
      %v2905 = vrcp.pop %v1565
      %v2906 = vrcp.pop %v1567
      %v2907 = vrcp.pop %v1569
      %v2908 = vrcp.pop %v1571
      %v2909 = vrcp.pop %v1573
      %v2910 = vrcp.pop %v1575
      %v2911 = vrcp.pop %v1577
      %v2912 = vrcp.pop %v1579
      %v2913 = vrcp.pop %v1581
      %v2914 = vrcp.pop %v1583
      %v2915 = vrcp.pop %v1585
      %v2916 = vrcp.pop %v1587
      %v2917 = vrcp.pop %v1589
      %v2918 = vrcp.pop %v1591
      %v2919 = vrcp.pop %v1593
      %v2920 = vrcp.pop %v1595
      %v2921 = vrcp.pop %v1597
      %v2922 = vrcp.pop %v1599
      %v2923 = vrcp.pop %v1601
      %v2924 = vrcp.pop %v1603
      %v2925 = vrcp.pop %v1605
      %v2926 = vrcp.pop %v1607
      %v2927 = vrcp.pop %v1609
      %v2928 = vrcp.pop %v1611
      %v2929 = vrcp.pop %v1613
      %v2930 = vrcp.pop %v1615
      %v2931 = vrcp.pop %v1617
      %v2932 = vrcp.pop %v1619
      %v2933 = vrcp.pop %v1621
      %v2934 = vrcp.pop %v1623
      %v2935 = vrcp.pop %v1625
      %v2936 = vrcp.pop %v1627
      %v2937 = vrcp.pop %v1629
      %v2938 = vrcp.pop %v1631
      %v2939 = vrcp.pop %v1633
      %v2940 = vrcp.pop %v1635
      %v2941 = vrcp.pop %v1637
      %v2942 = vrcp.pop %v1639
      %v2943 = vrcp.pop %v1641
      %v2944 = vrcp.pop %v1643
      %v2945 = vrcp.pop %v1645
      %v2946 = vrcp.pop %v1647
      %v2947 = vrcp.pop %v1649
      %v2948 = vrcp.pop %v1651
      %v2949 = vrcp.pop %v1653
      %v2950 = vrcp.pop %v1655
      %v2951 = vmul.f32 %v2887, 1.1111112
      %v2952 = vmul.f32 %v2888, 1.1111112
      %v2953 = vmul.f32 %v2889, 1.1111112
      %v2954 = vmul.f32 %v2890, 1.1111112
      %v2955 = vmul.f32 %v2891, 1.1111112
      %v2956 = vmul.f32 %v2892, 1.1111112
      %v2957 = vmul.f32 %v2893, 1.1111112
      %v2958 = vmul.f32 %v2894, 1.1111112
      %v2959 = vmul.f32 %v2895, 1.1111112
      %v2960 = vmul.f32 %v2896, 1.1111112
      %v2961 = vmul.f32 %v2897, 1.1111112
      %v2962 = vmul.f32 %v2898, 1.1111112
      %v2963 = vmul.f32 %v2899, 1.1111112
      %v2964 = vmul.f32 %v2900, 1.1111112
      %v2965 = vmul.f32 %v2901, 1.1111112
      %v2966 = vmul.f32 %v2902, 1.1111112
      %v2967 = vmul.f32 %v2903, 1.1111112
      %v2968 = vmul.f32 %v2904, 1.1111112
      %v2969 = vmul.f32 %v2905, 1.1111112
      %v2970 = vmul.f32 %v2906, 1.1111112
      %v2971 = vmul.f32 %v2907, 1.1111112
      %v2972 = vmul.f32 %v2908, 1.1111112
      %v2973 = vmul.f32 %v2909, 1.1111112
      %v2974 = vmul.f32 %v2910, 1.1111112
      %v2975 = vmul.f32 %v2911, 1.1111112
      %v2976 = vmul.f32 %v2912, 1.1111112
      %v2977 = vmul.f32 %v2913, 1.1111112
      %v2978 = vmul.f32 %v2914, 1.1111112
      %v2979 = vmul.f32 %v2915, 1.1111112
      %v2980 = vmul.f32 %v2916, 1.1111112
      %v2981 = vmul.f32 %v2917, 1.1111112
      %v2982 = vmul.f32 %v2918, 1.1111112
      %v2983 = vmul.f32 %v2919, 1.1111112
      %v2984 = vmul.f32 %v2920, 1.1111112
      %v2985 = vmul.f32 %v2921, 1.1111112
      %v2986 = vmul.f32 %v2922, 1.1111112
      %v2987 = vmul.f32 %v2923, 1.1111112
      %v2988 = vmul.f32 %v2924, 1.1111112
      %v2989 = vmul.f32 %v2925, 1.1111112
      %v2990 = vmul.f32 %v2926, 1.1111112
      %v2991 = vmul.f32 %v2927, 1.1111112
      %v2992 = vmul.f32 %v2928, 1.1111112
      %v2993 = vmul.f32 %v2929, 1.1111112
      %v2994 = vmul.f32 %v2930, 1.1111112
      %v2995 = vmul.f32 %v2931, 1.1111112
      %v2996 = vmul.f32 %v2932, 1.1111112
      %v2997 = vmul.f32 %v2933, 1.1111112
      %v2998 = vmul.f32 %v2934, 1.1111112
      %v2999 = vmul.f32 %v2935, 1.1111112
      %v3000 = vmul.f32 %v2936, 1.1111112
      %v3001 = vmul.f32 %v2937, 1.1111112
      %v3002 = vmul.f32 %v2938, 1.1111112
      %v3003 = vmul.f32 %v2939, 1.1111112
      %v3004 = vmul.f32 %v2940, 1.1111112
      %v3005 = vmul.f32 %v2941, 1.1111112
      %v3006 = vmul.f32 %v2942, 1.1111112
      %v3007 = vmul.f32 %v2943, 1.1111112
      %v3008 = vmul.f32 %v2944, 1.1111112
      %v3009 = vmul.f32 %v2945, 1.1111112
      %v3010 = vmul.f32 %v2946, 1.1111112
      %v3011 = vmul.f32 %v2947, 1.1111112
      %v3012 = vmul.f32 %v2948, 1.1111112
      %v3013 = vmul.f32 %v2949, 1.1111112
      %v3014 = vmul.f32 %v2950, 1.1111112
      %v3015 = vmul.f32 %v2534, %v2951
      %v3016 = vmul.f32 %v2537, %v2952
      %v3017 = vmul.f32 %v2542, %v2953
      %v3018 = vmul.f32 %v2545, %v2954
      %v3019 = vmul.f32 %v2550, %v2955
      %v3020 = vmul.f32 %v2553, %v2956
      %v3021 = vmul.f32 %v2558, %v2957
      %v3022 = vmul.f32 %v2561, %v2958
      %v3023 = vmul.f32 %v2566, %v2959
      %v3024 = vmul.f32 %v2569, %v2960
      %v3025 = vmul.f32 %v2574, %v2961
      %v3026 = vmul.f32 %v2577, %v2962
      %v3027 = vmul.f32 %v2582, %v2963
      %v3028 = vmul.f32 %v2585, %v2964
      %v3029 = vmul.f32 %v2590, %v2965
      %v3030 = vmul.f32 %v2593, %v2966
      %v3031 = vmul.f32 %v2631, %v2967
      %v3032 = vmul.f32 %v2634, %v2968
      %v3033 = vmul.f32 %v2639, %v2969
      %v3034 = vmul.f32 %v2642, %v2970
      %v3035 = vmul.f32 %v2647, %v2971
      %v3036 = vmul.f32 %v2650, %v2972
      %v3037 = vmul.f32 %v2655, %v2973
      %v3038 = vmul.f32 %v2658, %v2974
      %v3039 = vmul.f32 %v2663, %v2975
      %v3040 = vmul.f32 %v2666, %v2976
      %v3041 = vmul.f32 %v2671, %v2977
      %v3042 = vmul.f32 %v2674, %v2978
      %v3043 = vmul.f32 %v2679, %v2979
      %v3044 = vmul.f32 %v2682, %v2980
      %v3045 = vmul.f32 %v2687, %v2981
      %v3046 = vmul.f32 %v2690, %v2982
      %v3047 = vmul.f32 %v2728, %v2983
      %v3048 = vmul.f32 %v2731, %v2984
      %v3049 = vmul.f32 %v2736, %v2985
      %v3050 = vmul.f32 %v2739, %v2986
      %v3051 = vmul.f32 %v2744, %v2987
      %v3052 = vmul.f32 %v2747, %v2988
      %v3053 = vmul.f32 %v2752, %v2989
      %v3054 = vmul.f32 %v2755, %v2990
      %v3055 = vmul.f32 %v2760, %v2991
      %v3056 = vmul.f32 %v2763, %v2992
      %v3057 = vmul.f32 %v2768, %v2993
      %v3058 = vmul.f32 %v2771, %v2994
      %v3059 = vmul.f32 %v2776, %v2995
      %v3060 = vmul.f32 %v2779, %v2996
      %v3061 = vmul.f32 %v2784, %v2997
      %v3062 = vmul.f32 %v2787, %v2998
      %v3063 = vmul.f32 %v2825, %v2999
      %v3064 = vmul.f32 %v2828, %v3000
      %v3065 = vmul.f32 %v2833, %v3001
      %v3066 = vmul.f32 %v2836, %v3002
      %v3067 = vmul.f32 %v2841, %v3003
      %v3068 = vmul.f32 %v2844, %v3004
      %v3069 = vmul.f32 %v2849, %v3005
      %v3070 = vmul.f32 %v2852, %v3006
      %v3071 = vmul.f32 %v2857, %v3007
      %v3072 = vmul.f32 %v2860, %v3008
      %v3073 = vmul.f32 %v2865, %v3009
      %v3074 = vmul.f32 %v2868, %v3010
      %v3075 = vmul.f32 %v2873, %v3011
      %v3076 = vmul.f32 %v2876, %v3012
      %v3077 = vmul.f32 %v2881, %v3013
      %v3078 = vmul.f32 %v2884, %v3014
      %3079 = vst.msk [vmem:[%s256] sm:$0xff] %vm627, %v3015
      %3080 = vst.msk [vmem:[%s256 + $0x8] sm:$0xff] %vm627, %v3016
      %3081 = vst.msk [vmem:[%s256 + $0x10] sm:$0xff] %vm627, %v3017
      %3082 = vst.msk [vmem:[%s256 + $0x18] sm:$0xff] %vm627, %v3018
      %3083 = vst.msk [vmem:[%s256 + $0x20] sm:$0xff] %vm627, %v3019
      %3084 = vst.msk [vmem:[%s256 + $0x28] sm:$0xff] %vm627, %v3020
      %3085 = vst.msk [vmem:[%s256 + $0x30] sm:$0xff] %vm627, %v3021
      %3086 = vst.msk [vmem:[%s256 + $0x38] sm:$0xff] %vm627, %v3022
      %3087 = vst.msk [vmem:[%s256 + $0x40] sm:$0xff] %vm627, %v3023
      %3088 = vst.msk [vmem:[%s256 + $0x48] sm:$0xff] %vm627, %v3024
      %3089 = vst.msk [vmem:[%s256 + $0x50] sm:$0xff] %vm627, %v3025
      %3090 = vst.msk [vmem:[%s256 + $0x58] sm:$0xff] %vm627, %v3026
      %3091 = vst.msk [vmem:[%s256 + $0x60] sm:$0xff] %vm627, %v3027
      %3092 = vst.msk [vmem:[%s256 + $0x68] sm:$0xff] %vm627, %v3028
      %3093 = vst.msk [vmem:[%s256 + $0x70] sm:$0xff] %vm627, %v3029
      %3094 = vst.msk [vmem:[%s256 + $0x78] sm:$0xff] %vm627, %v3030
      %3095 = vst.msk [vmem:[%s256 + $0x80] sm:$0xff] %vm627, %v3031
      %3096 = vst.msk [vmem:[%s256 + $0x88] sm:$0xff] %vm627, %v3032
      %3097 = vst.msk [vmem:[%s256 + $0x90] sm:$0xff] %vm627, %v3033
      %3098 = vst.msk [vmem:[%s256 + $0x98] sm:$0xff] %vm627, %v3034
      %3099 = vst.msk [vmem:[%s256 + $0xa0] sm:$0xff] %vm627, %v3035
      %3100 = vst.msk [vmem:[%s256 + $0xa8] sm:$0xff] %vm627, %v3036
      %3101 = vst.msk [vmem:[%s256 + $0xb0] sm:$0xff] %vm627, %v3037
      %3102 = vst.msk [vmem:[%s256 + $0xb8] sm:$0xff] %vm627, %v3038
      %3103 = vst.msk [vmem:[%s256 + $0xc0] sm:$0xff] %vm627, %v3039
      %3104 = vst.msk [vmem:[%s256 + $0xc8] sm:$0xff] %vm627, %v3040
      %3105 = vst.msk [vmem:[%s256 + $0xd0] sm:$0xff] %vm627, %v3041
      %3106 = vst.msk [vmem:[%s256 + $0xd8] sm:$0xff] %vm627, %v3042
      %3107 = vst.msk [vmem:[%s256 + $0xe0] sm:$0xff] %vm627, %v3043
      %3108 = vst.msk [vmem:[%s256 + $0xe8] sm:$0xff] %vm627, %v3044
      %3109 = vst.msk [vmem:[%s256 + $0xf0] sm:$0xff] %vm627, %v3045
      %3110 = vst.msk [vmem:[%s256 + $0xf8] sm:$0xff] %vm627, %v3046
      %3111 = vst.msk [vmem:[%s256 + $0x100] sm:$0xff] %vm627, %v3047
      %3112 = vst.msk [vmem:[%s256 + $0x108] sm:$0xff] %vm627, %v3048
      %3113 = vst.msk [vmem:[%s256 + $0x110] sm:$0xff] %vm627, %v3049
      %3114 = vst.msk [vmem:[%s256 + $0x118] sm:$0xff] %vm627, %v3050
      %3115 = vst.msk [vmem:[%s256 + $0x120] sm:$0xff] %vm627, %v3051
      %3116 = vst.msk [vmem:[%s256 + $0x128] sm:$0xff] %vm627, %v3052
      %3117 = vst.msk [vmem:[%s256 + $0x130] sm:$0xff] %vm627, %v3053
      %3118 = vst.msk [vmem:[%s256 + $0x138] sm:$0xff] %vm627, %v3054
      %3119 = vst.msk [vmem:[%s256 + $0x140] sm:$0xff] %vm627, %v3055
      %3120 = vst.msk [vmem:[%s256 + $0x148] sm:$0xff] %vm627, %v3056
      %3121 = vst.msk [vmem:[%s256 + $0x150] sm:$0xff] %vm627, %v3057
      %3122 = vst.msk [vmem:[%s256 + $0x158] sm:$0xff] %vm627, %v3058
      %3123 = vst.msk [vmem:[%s256 + $0x160] sm:$0xff] %vm627, %v3059
      %3124 = vst.msk [vmem:[%s256 + $0x168] sm:$0xff] %vm627, %v3060
      %3125 = vst.msk [vmem:[%s256 + $0x170] sm:$0xff] %vm627, %v3061
      %3126 = vst.msk [vmem:[%s256 + $0x178] sm:$0xff] %vm627, %v3062
      %3127 = vst.msk [vmem:[%s256 + $0x180] sm:$0xff] %vm627, %v3063
      %3128 = vst.msk [vmem:[%s256 + $0x188] sm:$0xff] %vm627, %v3064
      %3129 = vst.msk [vmem:[%s256 + $0x190] sm:$0xff] %vm627, %v3065
      %3130 = vst.msk [vmem:[%s256 + $0x198] sm:$0xff] %vm627, %v3066
      %3131 = vst.msk [vmem:[%s256 + $0x1a0] sm:$0xff] %vm627, %v3067
      %3132 = vst.msk [vmem:[%s256 + $0x1a8] sm:$0xff] %vm627, %v3068
      %3133 = vst.msk [vmem:[%s256 + $0x1b0] sm:$0xff] %vm627, %v3069
      %3134 = vst.msk [vmem:[%s256 + $0x1b8] sm:$0xff] %vm627, %v3070
      %3135 = vst.msk [vmem:[%s256 + $0x1c0] sm:$0xff] %vm627, %v3071
      %3136 = vst.msk [vmem:[%s256 + $0x1c8] sm:$0xff] %vm627, %v3072
      %3137 = vst.msk [vmem:[%s256 + $0x1d0] sm:$0xff] %vm627, %v3073
      %3138 = vst.msk [vmem:[%s256 + $0x1d8] sm:$0xff] %vm627, %v3074
      %3139 = vst.msk [vmem:[%s256 + $0x1e0] sm:$0xff] %vm627, %v3075
      %3140 = vst.msk [vmem:[%s256 + $0x1e8] sm:$0xff] %vm627, %v3076
      %3141 = vst.msk [vmem:[%s256 + $0x1f0] sm:$0xff] %vm627, %v3077
      %3142 = vst.msk [vmem:[%s256 + $0x1f8] sm:$0xff] %vm627, %v3078
      %s3143 = smul.u32 4, %s17
      %p3144 = scmp.lt.s32.totalorder %s3143, 7
      %s3145 = scalar_select %p3144, %s3143, 7
      %s3146 = smul.addr %s3145, 16
      %s3147 = smul.addr %s3146, 8
      %s3148 = scalar_lea.vmem %s5, %s3147
      // Predicated region
      $region37: #{tpu_custom_call.1} parent=35 // pred_check
        %p3149 = pneg %p134
      $region38: #{tpu_custom_call.1} parent=35 // pred_check_branch
        %3151 = sbr.rel (%p3149) target = $region40
      $region39: #{tpu_custom_call.1} parent=35 // pred_region
        %s3152 = smul.u32 4, %s17
      $region40: #{tpu_custom_call.1} parent=35 // pred_fallthru
        _
    $region36: #{tpu_custom_call.1} parent=5 // pred_fallthru
      _
    %p3153 = scmp.le.s32.totalorder 2, %s12
    // Predicated region
    $region41: #{tpu_custom_call.1} parent=5 // pred_check
      %p3154 = pneg %p3153
    $region42: #{tpu_custom_call.1} parent=5 // pred_check_branch
      %3156 = sbr.rel (%p3154) target = $region44
    $region43: #{tpu_custom_call.1} parent=5 // pred_region
      %s3157 = ssub.s32 %s12, 2
      // Predicated region
      $region45: #{tpu_custom_call.1} parent=43 // pred_check
        %p3158 = pneg %p140
      $region46: #{tpu_custom_call.1} parent=43 // pred_check_branch
        %3160 = sbr.rel (%p3158) target = $region48
      $region47: #{tpu_custom_call.1} parent=43 // pred_region
        %s3161 = smul.u32 4, %s18
        %p3162 = scmp.lt.s32.totalorder %s3161, 7
        %s3163 = scalar_select %p3162, %s3161, 7
        %s3164 = smul.addr %s3163, 16
        %s3165 = smul.addr %s3164, 8
        %s3166 = scalar_lea.vmem %s5, %s3165
      $region48: #{tpu_custom_call.1} parent=43 // pred_fallthru
        _
    $region44: #{tpu_custom_call.1} parent=5 // pred_fallthru
      _
  $region6: #{tpu_custom_call.1} parent=0 // loop_footer
    %s16 = sadd.s32 1, %s12
  $region7: #{tpu_custom_call.1} parent=0 // loop_footer_branch
    %11 = sbr.rel target = $region3
  $region8: #{tpu_custom_call.1} parent=0 // loop_exit
    _

</llo_original>
